<compile_context>
chip_gen: v7x
topology: tpu7x:2x2x1
jax: 0.10.0
libtpu: 0.0.40
codegen_flags: <defaults>
</compile_context>

<pallas_src>
import math

import jax
import jax.numpy as jnp
from jax import lax
from jax.experimental import pallas as pl
from jax.experimental.pallas import tpu as pltpu

# ----------------------------- synthetic config -----------------------------
B = 2             # batch
S = 16            # sequence length
H = 64            # hidden size
NH = 4            # attention heads
HD = H // NH      # head dim
FF = 256          # FFN intermediate size
V = 128           # token vocab size
CLC = 32          # cell-level-cloze candidate classes
TCR = 2           # table-context-retrieval classes
NUM_LAYERS = 2
TREE_DEPTH = 4
NODE_VOCAB = 16
TREE_DIM = H // (2 * TREE_DEPTH)   # per-depth tree-position embedding dim
MAG, PRE, TOPD, LOWD = 12, 12, 12, 12
ORDER, ROWS, COLS = 8, 32, 32
NUM_FMT = 11
NEG = -1e9
HEAD_PAD = 128    # lane-dense width for the small (32 / 2 class) head outputs
BS = B * S        # 32 flattened tokens
P = NH * B * S    # 128 packed (head, batch, seq) rows for attention
VW = 256          # lane width of the consolidated f32 vector-param slabs


# ----------------------------- in-kernel helpers -----------------------------
def _gelu(u):
    # tanh-approximation GELU (f32 math)
    return 0.5 * u * (1.0 + jnp.tanh(0.7978845608028654 * (u + 0.044715 * u * u * u)))


def _layer_norm(v, g, b, eps=1e-12):
    mu = jnp.mean(v, axis=-1, keepdims=True)
    var = jnp.mean((v - mu) ** 2, axis=-1, keepdims=True)
    return (v - mu) * lax.rsqrt(var + eps) * g + b


def _log_softmax(z):
    m = jnp.max(z, axis=-1, keepdims=True)
    return z - (m + jnp.log(jnp.sum(jnp.exp(z - m), axis=-1, keepdims=True)))


# ----------------------------- fused Pallas kernel ----------------------------
def tuta_kernel(x_ref, amask_ref, match_ref, lab_ref,
                wqkv_ref, wo_ref, w1_ref, w2_ref, evec_ref,
                wh1_ref, wt1_ref, w2s_ref, hvec_ref,
                stats_ref):
    """Whole TUTA forward (encoder stack + MLM/CLC/TCR heads + masked-NLL stats)."""
    x = x_ref[...]                                   # [BS, H] f32
    amask = amask_ref[...]                           # [P, P]  f32 additive mask
    scale = 1.0 / math.sqrt(HD)

    # -------------------- encoder stack (statically unrolled) --------------------
    for l in range(NUM_LAYERS):
        vec = evec_ref[l]                            # [8, VW] per-layer vector slab
        b_qkv, bo = vec[0:1, :3 * H], vec[1:2, :H]
        g1, be1 = vec[2:3, :H], vec[3:4, :H]
        b1, b2 = vec[4:5, :FF], vec[5:6, :H]
        g2, be2 = vec[6:7, :H], vec[7:8, :H]

        xb = x.astype(jnp.bfloat16)
        qkv = jnp.dot(xb, wqkv_ref[l],
                      preferred_element_type=jnp.float32) + b_qkv       # [BS, 3H]

        # pack (head, batch, seq) onto the sublane axis -> [P, HD] = [128, 16]
        def packed(base, _qkv=qkv):
            return jnp.concatenate(
                [_qkv[:, base + h * HD: base + (h + 1) * HD] for h in range(NH)],
                axis=0).astype(jnp.bfloat16)

        q, k, v = packed(0), packed(H), packed(2 * H)

        # one lane-dense [128,128] score matmul covering every (head, batch) block
        s = lax.dot_general(q, k, (((1,), (1,)), ((), ())),
                            preferred_element_type=jnp.float32) * scale + amask
        s = s - jnp.max(s, axis=-1, keepdims=True)
        p = jnp.exp(s)
        p = p * pl.reciprocal(jnp.sum(p, axis=-1, keepdims=True), approx=True)
        ctx = jnp.dot(p.astype(jnp.bfloat16), v,
                      preferred_element_type=jnp.float32)               # [P, HD]

        # unpack heads back to [BS, H] (concat-heads layout) + dense output proj
        ctx2 = jnp.concatenate([ctx[h * BS:(h + 1) * BS, :] for h in range(NH)],
                               axis=1)                                   # [BS, H]
        attn = jnp.dot(ctx2.astype(jnp.bfloat16), wo_ref[l],
                       preferred_element_type=jnp.float32) + bo
        x1 = _layer_norm(x + attn, g1, be1)

        mid = _gelu(jnp.dot(x1.astype(jnp.bfloat16), w1_ref[l],
                            preferred_element_type=jnp.float32) + b1)
        ffn = jnp.dot(mid.astype(jnp.bfloat16), w2_ref[l],
                      preferred_element_type=jnp.float32) + b2
        x = _layer_norm(x1 + ffn, g2, be2)

    # ------------------------------------ heads ----------------------------------
    hv = hvec_ref[...]                               # [8, VW] head vector slab
    b123, bt1 = hv[0:1, :3 * H], hv[1:2, :H]
    m_g, m_b = hv[2:3, :H], hv[3:4, :H]
    mb2, bs2 = hv[4:5, :HEAD_PAD], hv[5:6, :HEAD_PAD]
    bt2, bc2 = hv[6:7, :HEAD_PAD], hv[7:8, :HEAD_PAD]

    xb = x.astype(jnp.bfloat16)
    # merged first-stage projection for MLM / CLC-sep / TCR (one [32,64]x[64,192])
    h123 = _gelu(jnp.dot(xb, wh1_ref[...],
                         preferred_element_type=jnp.float32) + b123)     # [BS, 3H]
    hm = _layer_norm(h123[:, 0:H], m_g, m_b)
    hs = h123[:, H:2 * H]
    hc = h123[:, 2 * H:3 * H]

    mlm_lp = _log_softmax(jnp.dot(hm.astype(jnp.bfloat16), w2s_ref[0],
                                  preferred_element_type=jnp.float32) + mb2)
    sep_lp = _log_softmax(jnp.dot(hs.astype(jnp.bfloat16), w2s_ref[1],
                                  preferred_element_type=jnp.float32) + bs2)

    # CLC token branch: per-cell mean of content tokens via the precomputed
    # 0/1 match matrix (SEP rows x content cols, batch-blocked) and one matmul.
    matchf = match_ref[...]                          # [BS, BS] f32
    cnt = jnp.maximum(jnp.sum(matchf, axis=-1, keepdims=True), 1.0)
    tok_rep = jnp.dot(matchf.astype(jnp.bfloat16), xb,
                      preferred_element_type=jnp.float32) / cnt
    ht = _gelu(jnp.dot(tok_rep.astype(jnp.bfloat16), wt1_ref[...],
                       preferred_element_type=jnp.float32) + bt1)
    tok_lp = _log_softmax(jnp.dot(ht.astype(jnp.bfloat16), w2s_ref[2],
                                  preferred_element_type=jnp.float32) + bt2)

    tcr_lp = _log_softmax(jnp.dot(hc.astype(jnp.bfloat16), w2s_ref[3],
                                  preferred_element_type=jnp.float32) + bc2)

    # -------------- masked-NLL (loss, correct, count) triples in-kernel ----------
    labels = lab_ref[...]                            # [BS, 3] int32 (mlm, clc, tcr)
    lane = lax.broadcasted_iota(jnp.int32, (BS, HEAD_PAD), 1)
    out_lane = lax.broadcasted_iota(jnp.int32, (1, HEAD_PAD), 1)

    def triple_row(lp, lab):
        maskv = lab >= 0                                                     # [BS,1]
        onehot = lane == lab                                                 # [BS,128]
        nll = -jnp.sum(jnp.where(onehot, lp, 0.0), axis=-1, keepdims=True)   # [BS,1]
        maxv = jnp.max(lp, axis=-1, keepdims=True)
        argm = jnp.min(jnp.where(lp >= maxv, lane, HEAD_PAD),
                       axis=-1, keepdims=True)                               # first argmax
        cntf = jnp.sum(jnp.where(maskv, 1.0, 0.0), axis=0, keepdims=True)    # [1,1]
        corr = jnp.sum(jnp.where(maskv & (argm == lab), 1.0, 0.0),
                       axis=0, keepdims=True)
        loss = (jnp.sum(jnp.where(maskv, nll, 0.0), axis=0, keepdims=True)
                / jnp.maximum(cntf, 1.0))
        return (jnp.where(out_lane == 0, loss, 0.0)
                + jnp.where(out_lane == 1, corr, 0.0)
                + jnp.where(out_lane == 2, cntf, 0.0))                       # [1,128]

    stats_ref[0:1, :] = triple_row(mlm_lp, labels[:, 0:1])
    stats_ref[1:2, :] = triple_row(sep_lp, labels[:, 1:2])
    stats_ref[2:3, :] = triple_row(tok_lp, labels[:, 1:2])
    stats_ref[3:4, :] = triple_row(tcr_lp, labels[:, 2:3])


# ----------------------------- pallas_call wrapper -----------------------------
def _fs(a):
    return pl.BlockSpec(a.shape, lambda i, _n=a.ndim: (0,) * _n)


def tuta_fused_call(x, amask, matchf, labels, lp, hp):
    ins = [x, amask, matchf, labels,
           lp["w_qkv"], lp["wo"], lp["w1"], lp["w2"], lp["vec"],
           hp["wh1"], hp["wt1"], hp["w2s"], hp["vec"]]
    return pl.pallas_call(
        tuta_kernel,
        out_shape=jax.ShapeDtypeStruct((4, HEAD_PAD), jnp.float32),
        grid=(1,),
        in_specs=[_fs(a) for a in ins],
        out_specs=pl.BlockSpec((4, HEAD_PAD), lambda i: (0, 0)),
        compiler_params=pltpu.CompilerParams(
            dimension_semantics=("arbitrary",)),
    )(*ins)


# ----------------------------- JAX glue ----------------------------------------
def embed(params, token_id, num_mag, num_pre, num_top, num_low, token_order,
          pos_row, pos_col, pos_top, pos_left, format_vec):
    e = params["emb"]
    tok = e["token"][token_id]
    num = jnp.concatenate([e["mag"][num_mag], e["pre"][num_pre],
                           e["topd"][num_top], e["lowd"][num_low]], axis=-1)
    order = e["order"][token_order]
    rowcol = e["row"][pos_row] + e["col"][pos_col]
    top_tree = e["tree_top"][pos_top].reshape(B, S, TREE_DEPTH * TREE_DIM)
    left_tree = e["tree_left"][pos_left].reshape(B, S, TREE_DEPTH * TREE_DIM)
    tree = jnp.concatenate([top_tree, left_tree], axis=-1)
    fmt = jnp.einsum("bsf,fh->bsh", format_vec, e["fmt_w"]) + e["fmt_b"]
    x = tok + num + order + rowcol + tree + fmt
    mu = jnp.mean(x, axis=-1, keepdims=True)
    var = jnp.mean((x - mu) ** 2, axis=-1, keepdims=True)
    return (x - mu) * lax.rsqrt(var + 1e-12) * e["ln_g"] + e["ln_b"]


@jax.jit
def tuta_forward(params, token_id, num_mag, num_pre, num_top, num_low, token_order,
                 pos_row, pos_col, pos_top, pos_left, format_vec, indicator,
                 mlm_label, clc_label, tcr_label):
    # backbone embeddings (gathers, plain-JAX glue), flattened to [B*S, H]
    x = embed(params, token_id, num_mag, num_pre, num_top, num_low, token_order,
              pos_row, pos_col, pos_top, pos_left, format_vec).reshape(BS, H)

    # packed additive attention mask [P, P]: block-diagonal over (head, batch)
    # plus key-padding mask.  indicator != 0 marks real content/SEP tokens; pos 0
    # is [CLS].
    # TODO(synk): TUTA's full tree-distance attention bias is approximated by a
    # plain padding mask here (exact bias depends on the external config).
    pos = jnp.arange(S)[None, :]
    valid = (indicator != 0) | (pos == 0)                         # [B, S]
    pid = jnp.arange(P)
    hh, bb, ss = pid // BS, (pid // S) % B, pid % S
    same_block = (hh[:, None] == hh[None, :]) & (bb[:, None] == bb[None, :])
    key_valid = valid[bb, ss]                                     # [P]
    amask = jnp.where(same_block & key_valid[None, :], 0.0, NEG).astype(jnp.float32)

    # CLC cell-averaging match matrix [BS, BS]: row = SEP position (indicator<0),
    # cols = that cell's content tokens (indicator == -row indicator), same batch.
    ind = indicator.reshape(-1)
    bid = jnp.arange(BS) // S
    match = ((bid[:, None] == bid[None, :]) & (ind[:, None] < 0)
             & (ind[None, :] == -ind[:, None])).astype(jnp.float32)

    labels = jnp.stack([mlm_label.reshape(-1), clc_label.reshape(-1),
                        tcr_label.reshape(-1)], axis=1).astype(jnp.int32)

    stats = tuta_fused_call(x, amask, match, labels,
                            params["layers"], params["heads"])

    def tri(r):
        return (stats[r, 0], stats[r, 1].astype(jnp.int32),
                stats[r, 2].astype(jnp.int32))

    return tri(0), tri(1), tri(2), tri(3)


# ----------------------------- parameter init -----------------------------------
def init_params(key):
    keys = iter(jax.random.split(key, 64))

    def nrm(shape, scale=0.02):
        return (scale * jax.random.normal(next(keys), shape)).astype(jnp.float32)

    def bf16(a):
        return a.astype(jnp.bfloat16)

    emb = dict(
        token=nrm((V, H)), mag=nrm((MAG, H // 4)), pre=nrm((PRE, H // 4)),
        topd=nrm((TOPD, H // 4)), lowd=nrm((LOWD, H // 4)),
        order=nrm((ORDER, H)), row=nrm((ROWS, H)), col=nrm((COLS, H)),
        tree_top=nrm((NODE_VOCAB, TREE_DIM)), tree_left=nrm((NODE_VOCAB, TREE_DIM)),
        fmt_w=nrm((NUM_FMT, H)), fmt_b=jnp.zeros((H,), jnp.float32),
        ln_g=jnp.ones((H,), jnp.float32), ln_b=jnp.zeros((H,), jnp.float32),
    )

    L = NUM_LAYERS
    # consolidated per-layer vector slab [L, 8, VW]:
    # rows: 0 b_qkv(3H) 1 bo(H) 2 ln1_g 3 ln1_b 4 b1(FF) 5 b2(H) 6 ln2_g 7 ln2_b
    evec = jnp.zeros((L, 8, VW), jnp.float32)
    evec = evec.at[:, 2, :H].set(1.0).at[:, 6, :H].set(1.0)
    layers = dict(
        w_qkv=bf16(nrm((L, H, 3 * H))), wo=bf16(nrm((L, H, H))),
        w1=bf16(nrm((L, H, FF))), w2=bf16(nrm((L, FF, H))), vec=evec,
    )

    # merged first-stage head projection [H, 3H]: (MLM | CLC-sep | TCR)
    wh1 = bf16(jnp.concatenate([nrm((H, H)), nrm((H, H)), nrm((H, H))], axis=1))
    wt1 = bf16(nrm((H, H)))

    def pad_cls(w):   # [H, n_real] -> [H, HEAD_PAD] with zero padding columns
        return jnp.zeros((H, HEAD_PAD), jnp.float32).at[:, :w.shape[1]].set(w)

    # stacked second-stage classifiers [4, H, 128]: mlm(V) | clc-sep | clc-tok | tcr
    w2s = bf16(jnp.stack([nrm((H, V)), pad_cls(nrm((H, CLC))),
                          pad_cls(nrm((H, CLC))), pad_cls(nrm((H, TCR)))], axis=0))

    # consolidated head vector slab [8, VW]:
    # rows: 0 b123(3H) 1 bt1(H) 2 mlm_ln_g 3 mlm_ln_b 4 mb2(V) 5 bs2 6 bt2 7 bc2
    # padding classes get a -1e9 bias so log-softmax over real classes is unchanged.
    hvec = jnp.zeros((8, VW), jnp.float32)
    hvec = hvec.at[2, :H].set(1.0)
    hvec = hvec.at[5, CLC:HEAD_PAD].set(NEG)
    hvec = hvec.at[6, CLC:HEAD_PAD].set(NEG)
    hvec = hvec.at[7, TCR:HEAD_PAD].set(NEG)
    heads = dict(wh1=wh1, wt1=wt1, w2s=w2s, vec=hvec)

    return dict(emb=emb, layers=layers, heads=heads)


# ----------------------------- main ----------------------------------------------
if __name__ == "__main__":
    root = jax.random.PRNGKey(0)
    kp, *ks = jax.random.split(root, 16)
    params = init_params(kp)

    # structured indicator per sequence:
    #   pos0 = [CLS] (0); three cells, each "SEP (-c) + 3 content tokens (c)"; pad (0).
    base = [0, -1, 1, 1, 1, -2, 2, 2, 2, -3, 3, 3, 3, 0, 0, 0]
    indicator = jnp.array([base, base], dtype=jnp.int32)

    token_id = jax.random.randint(ks[0], (B, S), 1, V, dtype=jnp.int32)
    num_mag = jax.random.randint(ks[1], (B, S), 0, MAG, dtype=jnp.int32)
    num_pre = jax.random.randint(ks[2], (B, S), 0, PRE, dtype=jnp.int32)
    num_top = jax.random.randint(ks[3], (B, S), 0, TOPD, dtype=jnp.int32)
    num_low = jax.random.randint(ks[4], (B, S), 0, LOWD, dtype=jnp.int32)
    token_order = jax.random.randint(ks[5], (B, S), 0, ORDER, dtype=jnp.int32)
    pos_row = jax.random.randint(ks[6], (B, S), 0, ROWS, dtype=jnp.int32)
    pos_col = jax.random.randint(ks[7], (B, S), 0, COLS, dtype=jnp.int32)
    pos_top = jax.random.randint(ks[8], (B, S, TREE_DEPTH), 0, NODE_VOCAB, dtype=jnp.int32)
    pos_left = jax.random.randint(ks[9], (B, S, TREE_DEPTH), 0, NODE_VOCAB, dtype=jnp.int32)
    format_vec = jax.random.uniform(ks[10], (B, S, NUM_FMT), jnp.float32)

    mlm_label = jnp.full((B, S), -1, jnp.int32)
    mlm_label = mlm_label.at[:, jnp.array([2, 6, 10])].set(
        jax.random.randint(ks[11], (B, 3), 0, V, dtype=jnp.int32))
    clc_label = jnp.full((B, S), -1, jnp.int32)
    clc_label = clc_label.at[:, jnp.array([1, 5, 9])].set(
        jax.random.randint(ks[12], (B, 3), 0, CLC, dtype=jnp.int32))
    tcr_label = jnp.full((B, S), -1, jnp.int32)
    tcr_label = tcr_label.at[:, 0].set(
        jax.random.randint(ks[13], (B,), 0, TCR, dtype=jnp.int32))

    out = tuta_forward(params, token_id, num_mag, num_pre, num_top, num_low,
                       token_order, pos_row, pos_col, pos_top, pos_left,
                       format_vec, indicator, mlm_label, clc_label, tcr_label)
    out = jax.block_until_ready(out)
    print("KERNEL_OK")
</pallas_src>

<mosaic_0001>
module attributes {stable_mosaic.version = 11 : i64} {
  func.func @tuta_kernel(%arg0: i32, %arg1: memref<32x64xf32, #tpu.memory_space<vmem>>, %arg2: memref<128x128xf32, #tpu.memory_space<vmem>>, %arg3: memref<32x32xf32, #tpu.memory_space<vmem>>, %arg4: memref<32x3xi32, #tpu.memory_space<vmem>>, %arg5: memref<2x64x192xbf16, #tpu.memory_space<vmem>>, %arg6: memref<2x64x64xbf16, #tpu.memory_space<vmem>>, %arg7: memref<2x64x256xbf16, #tpu.memory_space<vmem>>, %arg8: memref<2x256x64xbf16, #tpu.memory_space<vmem>>, %arg9: memref<2x8x256xf32, #tpu.memory_space<vmem>>, %arg10: memref<64x192xbf16, #tpu.memory_space<vmem>>, %arg11: memref<64x64xbf16, #tpu.memory_space<vmem>>, %arg12: memref<4x64x128xbf16, #tpu.memory_space<vmem>>, %arg13: memref<8x256xf32, #tpu.memory_space<vmem>>, %arg14: memref<4x128xf32, #tpu.memory_space<vmem>>) attributes {dimension_semantics = [#tpu.dimension_semantics<arbitrary>], iteration_bounds = array<i64: 1>, scalar_prefetch = 0 : i64, scratch_operands = 0 : i64, tpu.core_type = #tpu.core_type<tc>, window_params = [{pipeline_mode = #tpu.pipeline_mode<synchronous>, transform_indices = @transform_0, window_bounds = array<i64: 32, 64>}, {pipeline_mode = #tpu.pipeline_mode<synchronous>, transform_indices = @transform_1, window_bounds = array<i64: 128, 128>}, {pipeline_mode = #tpu.pipeline_mode<synchronous>, transform_indices = @transform_2, window_bounds = array<i64: 32, 32>}, {pipeline_mode = #tpu.pipeline_mode<synchronous>, transform_indices = @transform_3, window_bounds = array<i64: 32, 3>}, {pipeline_mode = #tpu.pipeline_mode<synchronous>, transform_indices = @transform_4, window_bounds = array<i64: 2, 64, 192>}, {pipeline_mode = #tpu.pipeline_mode<synchronous>, transform_indices = @transform_5, window_bounds = array<i64: 2, 64, 64>}, {pipeline_mode = #tpu.pipeline_mode<synchronous>, transform_indices = @transform_6, window_bounds = array<i64: 2, 64, 256>}, {pipeline_mode = #tpu.pipeline_mode<synchronous>, transform_indices = @transform_7, window_bounds = array<i64: 2, 256, 64>}, {pipeline_mode = #tpu.pipeline_mode<synchronous>, transform_indices = @transform_8, window_bounds = array<i64: 2, 8, 256>}, {pipeline_mode = #tpu.pipeline_mode<synchronous>, transform_indices = @transform_9, window_bounds = array<i64: 64, 192>}, {pipeline_mode = #tpu.pipeline_mode<synchronous>, transform_indices = @transform_10, window_bounds = array<i64: 64, 64>}, {pipeline_mode = #tpu.pipeline_mode<synchronous>, transform_indices = @transform_11, window_bounds = array<i64: 4, 64, 128>}, {pipeline_mode = #tpu.pipeline_mode<synchronous>, transform_indices = @transform_12, window_bounds = array<i64: 8, 256>}, {pipeline_mode = #tpu.pipeline_mode<synchronous>, transform_indices = @transform_13, window_bounds = array<i64: 4, 128>}]} {
    %c0 = arith.constant 0 : index
    %c0_0 = arith.constant 0 : index
    %0 = vector.load %arg1[%c0, %c0_0] : memref<32x64xf32, #tpu.memory_space<vmem>>, vector<32x64xf32>
    %c0_1 = arith.constant 0 : index
    %c0_2 = arith.constant 0 : index
    %1 = vector.load %arg2[%c0_1, %c0_2] : memref<128x128xf32, #tpu.memory_space<vmem>>, vector<128x128xf32>
    %c0_3 = arith.constant 0 : index
    %c0_4 = arith.constant 0 : index
    %c0_5 = arith.constant 0 : index
    %2 = vector.load %arg9[%c0_3, %c0_4, %c0_5] : memref<2x8x256xf32, #tpu.memory_space<vmem>>, vector<1x8x256xf32>
    %3 = vector.shape_cast %2 : vector<1x8x256xf32> to vector<8x256xf32>
    %4 = vector.extract_strided_slice %3 {offsets = [0, 0], sizes = [1, 192], strides = [1, 1]} : vector<8x256xf32> to vector<1x192xf32>
    %5 = vector.extract_strided_slice %3 {offsets = [1, 0], sizes = [1, 64], strides = [1, 1]} : vector<8x256xf32> to vector<1x64xf32>
    %6 = vector.extract_strided_slice %3 {offsets = [2, 0], sizes = [1, 64], strides = [1, 1]} : vector<8x256xf32> to vector<1x64xf32>
    %7 = vector.extract_strided_slice %3 {offsets = [3, 0], sizes = [1, 64], strides = [1, 1]} : vector<8x256xf32> to vector<1x64xf32>
    %8 = vector.extract_strided_slice %3 {offsets = [4, 0], sizes = [1, 256], strides = [1, 1]} : vector<8x256xf32> to vector<1x256xf32>
    %9 = vector.extract_strided_slice %3 {offsets = [5, 0], sizes = [1, 64], strides = [1, 1]} : vector<8x256xf32> to vector<1x64xf32>
    %10 = vector.extract_strided_slice %3 {offsets = [6, 0], sizes = [1, 64], strides = [1, 1]} : vector<8x256xf32> to vector<1x64xf32>
    %11 = vector.extract_strided_slice %3 {offsets = [7, 0], sizes = [1, 64], strides = [1, 1]} : vector<8x256xf32> to vector<1x64xf32>
    %12 = arith.truncf %0 : vector<32x64xf32> to vector<32x64xbf16>
    %c0_6 = arith.constant 0 : index
    %c0_7 = arith.constant 0 : index
    %c0_8 = arith.constant 0 : index
    %13 = vector.load %arg5[%c0_6, %c0_7, %c0_8] : memref<2x64x192xbf16, #tpu.memory_space<vmem>>, vector<1x64x192xbf16>
    %14 = vector.shape_cast %13 : vector<1x64x192xbf16> to vector<64x192xbf16>
    %cst = arith.constant dense<0.000000e+00> : vector<32x192xf32>
    %15 = tpu.matmul %12, %14, %cst {dimension_numbers = #tpu.dot_dimension_numbers<[1], [0], [0], [1], [0, 0, 1, 1], [], []>} : vector<32x64xbf16>, vector<64x192xbf16>, vector<32x192xf32> -> vector<32x192xf32>
    %16 = vector.broadcast %4 : vector<1x192xf32> to vector<32x192xf32>
    %17 = arith.addf %15, %16 : vector<32x192xf32>
    %18 = vector.extract_strided_slice %17 {offsets = [0, 0], sizes = [32, 16], strides = [1, 1]} : vector<32x192xf32> to vector<32x16xf32>
    %19 = vector.extract_strided_slice %17 {offsets = [0, 16], sizes = [32, 16], strides = [1, 1]} : vector<32x192xf32> to vector<32x16xf32>
    %20 = vector.extract_strided_slice %17 {offsets = [0, 32], sizes = [32, 16], strides = [1, 1]} : vector<32x192xf32> to vector<32x16xf32>
    %21 = vector.extract_strided_slice %17 {offsets = [0, 48], sizes = [32, 16], strides = [1, 1]} : vector<32x192xf32> to vector<32x16xf32>
    %22 = tpu.concatenate %18, %19, %20, %21 in 0 : vector<32x16xf32>, vector<32x16xf32>, vector<32x16xf32>, vector<32x16xf32> -> vector<128x16xf32>
    %23 = arith.truncf %22 : vector<128x16xf32> to vector<128x16xbf16>
    %24 = vector.extract_strided_slice %17 {offsets = [0, 64], sizes = [32, 16], strides = [1, 1]} : vector<32x192xf32> to vector<32x16xf32>
    %25 = vector.extract_strided_slice %17 {offsets = [0, 80], sizes = [32, 16], strides = [1, 1]} : vector<32x192xf32> to vector<32x16xf32>
    %26 = vector.extract_strided_slice %17 {offsets = [0, 96], sizes = [32, 16], strides = [1, 1]} : vector<32x192xf32> to vector<32x16xf32>
    %27 = vector.extract_strided_slice %17 {offsets = [0, 112], sizes = [32, 16], strides = [1, 1]} : vector<32x192xf32> to vector<32x16xf32>
    %28 = tpu.concatenate %24, %25, %26, %27 in 0 : vector<32x16xf32>, vector<32x16xf32>, vector<32x16xf32>, vector<32x16xf32> -> vector<128x16xf32>
    %29 = arith.truncf %28 : vector<128x16xf32> to vector<128x16xbf16>
    %30 = vector.extract_strided_slice %17 {offsets = [0, 128], sizes = [32, 16], strides = [1, 1]} : vector<32x192xf32> to vector<32x16xf32>
    %31 = vector.extract_strided_slice %17 {offsets = [0, 144], sizes = [32, 16], strides = [1, 1]} : vector<32x192xf32> to vector<32x16xf32>
    %32 = vector.extract_strided_slice %17 {offsets = [0, 160], sizes = [32, 16], strides = [1, 1]} : vector<32x192xf32> to vector<32x16xf32>
    %33 = vector.extract_strided_slice %17 {offsets = [0, 176], sizes = [32, 16], strides = [1, 1]} : vector<32x192xf32> to vector<32x16xf32>
    %34 = tpu.concatenate %30, %31, %32, %33 in 0 : vector<32x16xf32>, vector<32x16xf32>, vector<32x16xf32>, vector<32x16xf32> -> vector<128x16xf32>
    %35 = arith.truncf %34 : vector<128x16xf32> to vector<128x16xbf16>
    %cst_9 = arith.constant dense<0.000000e+00> : vector<128x128xf32>
    %36 = tpu.matmul %23, %29, %cst_9 {dimension_numbers = #tpu.dot_dimension_numbers<[1], [1], [0], [0], [0, 0, 1, 0], [], []>} : vector<128x16xbf16>, vector<128x16xbf16>, vector<128x128xf32> -> vector<128x128xf32>
    %cst_10 = arith.constant 2.500000e-01 : f32
    %37 = vector.broadcast %cst_10 : f32 to vector<128x128xf32>
    %38 = arith.mulf %36, %37 : vector<128x128xf32>
    %39 = arith.addf %38, %1 : vector<128x128xf32>
    %cst_11 = arith.constant dense<0xFF800000> : vector<128xf32>
    %40 = vector.multi_reduction <maximumf>, %39, %cst_11 [1] : vector<128x128xf32> to vector<128xf32>
    %41 = vector.shape_cast %40 : vector<128xf32> to vector<128x1xf32>
    %42 = vector.broadcast %41 : vector<128x1xf32> to vector<128x128xf32>
    %43 = arith.subf %39, %42 : vector<128x128xf32>
    %44 = math.exp %43 : vector<128x128xf32>
    %cst_12 = arith.constant dense<0.000000e+00> : vector<128xf32>
    %45 = vector.multi_reduction <add>, %44, %cst_12 [1] : vector<128x128xf32> to vector<128xf32>
    %46 = vector.shape_cast %45 : vector<128xf32> to vector<128x1xf32>
    %47 = tpu.reciprocal %46 {approx = true} : vector<128x1xf32> -> vector<128x1xf32>
    %48 = vector.broadcast %47 : vector<128x1xf32> to vector<128x128xf32>
    %49 = arith.mulf %44, %48 : vector<128x128xf32>
    %50 = arith.truncf %49 : vector<128x128xf32> to vector<128x128xbf16>
    %cst_13 = arith.constant dense<0.000000e+00> : vector<128x16xf32>
    %51 = tpu.matmul %50, %35, %cst_13 {dimension_numbers = #tpu.dot_dimension_numbers<[1], [0], [0], [1], [0, 0, 1, 1], [], []>} : vector<128x128xbf16>, vector<128x16xbf16>, vector<128x16xf32> -> vector<128x16xf32>
    %52 = vector.extract_strided_slice %51 {offsets = [0, 0], sizes = [32, 16], strides = [1, 1]} : vector<128x16xf32> to vector<32x16xf32>
    %53 = vector.extract_strided_slice %51 {offsets = [32, 0], sizes = [32, 16], strides = [1, 1]} : vector<128x16xf32> to vector<32x16xf32>
    %54 = vector.extract_strided_slice %51 {offsets = [64, 0], sizes = [32, 16], strides = [1, 1]} : vector<128x16xf32> to vector<32x16xf32>
    %55 = vector.extract_strided_slice %51 {offsets = [96, 0], sizes = [32, 16], strides = [1, 1]} : vector<128x16xf32> to vector<32x16xf32>
    %56 = tpu.concatenate %52, %53, %54, %55 in 1 : vector<32x16xf32>, vector<32x16xf32>, vector<32x16xf32>, vector<32x16xf32> -> vector<32x64xf32>
    %57 = arith.truncf %56 : vector<32x64xf32> to vector<32x64xbf16>
    %c0_14 = arith.constant 0 : index
    %c0_15 = arith.constant 0 : index
    %c0_16 = arith.constant 0 : index
    %58 = vector.load %arg6[%c0_14, %c0_15, %c0_16] : memref<2x64x64xbf16, #tpu.memory_space<vmem>>, vector<1x64x64xbf16>
    %59 = vector.shape_cast %58 : vector<1x64x64xbf16> to vector<64x64xbf16>
    %cst_17 = arith.constant dense<0.000000e+00> : vector<32x64xf32>
    %60 = tpu.matmul %57, %59, %cst_17 {dimension_numbers = #tpu.dot_dimension_numbers<[1], [0], [0], [1], [0, 0, 1, 1], [], []>} : vector<32x64xbf16>, vector<64x64xbf16>, vector<32x64xf32> -> vector<32x64xf32>
    %61 = vector.broadcast %5 : vector<1x64xf32> to vector<32x64xf32>
    %62 = arith.addf %60, %61 : vector<32x64xf32>
    %63 = arith.addf %0, %62 : vector<32x64xf32>
    %cst_18 = arith.constant dense<0.000000e+00> : vector<32xf32>
    %64 = vector.multi_reduction <add>, %63, %cst_18 [1] : vector<32x64xf32> to vector<32xf32>
    %65 = vector.shape_cast %64 : vector<32xf32> to vector<32x1xf32>
    %cst_19 = arith.constant 6.400000e+01 : f32
    %66 = vector.broadcast %cst_19 : f32 to vector<32x1xf32>
    %67 = arith.divf %65, %66 : vector<32x1xf32>
    %68 = vector.broadcast %67 : vector<32x1xf32> to vector<32x64xf32>
    %69 = arith.subf %63, %68 : vector<32x64xf32>
    %70 = arith.mulf %69, %69 : vector<32x64xf32>
    %cst_20 = arith.constant dense<0.000000e+00> : vector<32xf32>
    %71 = vector.multi_reduction <add>, %70, %cst_20 [1] : vector<32x64xf32> to vector<32xf32>
    %72 = vector.shape_cast %71 : vector<32xf32> to vector<32x1xf32>
    %cst_21 = arith.constant 6.400000e+01 : f32
    %73 = vector.broadcast %cst_21 : f32 to vector<32x1xf32>
    %74 = arith.divf %72, %73 : vector<32x1xf32>
    %75 = vector.broadcast %67 : vector<32x1xf32> to vector<32x64xf32>
    %76 = arith.subf %63, %75 : vector<32x64xf32>
    %cst_22 = arith.constant 9.99999996E-13 : f32
    %77 = vector.broadcast %cst_22 : f32 to vector<32x1xf32>
    %78 = arith.addf %74, %77 : vector<32x1xf32>
    %79 = math.rsqrt %78 : vector<32x1xf32>
    %80 = vector.broadcast %79 : vector<32x1xf32> to vector<32x64xf32>
    %81 = arith.mulf %76, %80 : vector<32x64xf32>
    %82 = vector.broadcast %6 : vector<1x64xf32> to vector<32x64xf32>
    %83 = arith.mulf %81, %82 : vector<32x64xf32>
    %84 = vector.broadcast %7 : vector<1x64xf32> to vector<32x64xf32>
    %85 = arith.addf %83, %84 : vector<32x64xf32>
    %86 = arith.truncf %85 : vector<32x64xf32> to vector<32x64xbf16>
    %c0_23 = arith.constant 0 : index
    %c0_24 = arith.constant 0 : index
    %c0_25 = arith.constant 0 : index
    %87 = vector.load %arg7[%c0_23, %c0_24, %c0_25] : memref<2x64x256xbf16, #tpu.memory_space<vmem>>, vector<1x64x256xbf16>
    %88 = vector.shape_cast %87 : vector<1x64x256xbf16> to vector<64x256xbf16>
    %cst_26 = arith.constant dense<0.000000e+00> : vector<32x256xf32>
    %89 = tpu.matmul %86, %88, %cst_26 {dimension_numbers = #tpu.dot_dimension_numbers<[1], [0], [0], [1], [0, 0, 1, 1], [], []>} : vector<32x64xbf16>, vector<64x256xbf16>, vector<32x256xf32> -> vector<32x256xf32>
    %90 = vector.broadcast %8 : vector<1x256xf32> to vector<32x256xf32>
    %91 = arith.addf %89, %90 : vector<32x256xf32>
    %cst_27 = arith.constant 5.000000e-01 : f32
    %92 = vector.broadcast %cst_27 : f32 to vector<32x256xf32>
    %93 = arith.mulf %92, %91 : vector<32x256xf32>
    %cst_28 = arith.constant 4.471500e-02 : f32
    %94 = vector.broadcast %cst_28 : f32 to vector<32x256xf32>
    %95 = arith.mulf %94, %91 : vector<32x256xf32>
    %96 = arith.mulf %95, %91 : vector<32x256xf32>
    %97 = arith.mulf %96, %91 : vector<32x256xf32>
    %98 = arith.addf %91, %97 : vector<32x256xf32>
    %cst_29 = arith.constant 0.797884583 : f32
    %99 = vector.broadcast %cst_29 : f32 to vector<32x256xf32>
    %100 = arith.mulf %99, %98 : vector<32x256xf32>
    %101 = math.tanh %100 : vector<32x256xf32>
    %cst_30 = arith.constant 1.000000e+00 : f32
    %102 = vector.broadcast %cst_30 : f32 to vector<32x256xf32>
    %103 = arith.addf %102, %101 : vector<32x256xf32>
    %104 = arith.mulf %93, %103 : vector<32x256xf32>
    %105 = arith.truncf %104 : vector<32x256xf32> to vector<32x256xbf16>
    %c0_31 = arith.constant 0 : index
    %c0_32 = arith.constant 0 : index
    %c0_33 = arith.constant 0 : index
    %106 = vector.load %arg8[%c0_31, %c0_32, %c0_33] : memref<2x256x64xbf16, #tpu.memory_space<vmem>>, vector<1x256x64xbf16>
    %107 = vector.shape_cast %106 : vector<1x256x64xbf16> to vector<256x64xbf16>
    %cst_34 = arith.constant dense<0.000000e+00> : vector<32x64xf32>
    %108 = tpu.matmul %105, %107, %cst_34 {dimension_numbers = #tpu.dot_dimension_numbers<[1], [0], [0], [1], [0, 0, 1, 1], [], []>} : vector<32x256xbf16>, vector<256x64xbf16>, vector<32x64xf32> -> vector<32x64xf32>
    %109 = vector.broadcast %9 : vector<1x64xf32> to vector<32x64xf32>
    %110 = arith.addf %108, %109 : vector<32x64xf32>
    %111 = arith.addf %85, %110 : vector<32x64xf32>
    %cst_35 = arith.constant dense<0.000000e+00> : vector<32xf32>
    %112 = vector.multi_reduction <add>, %111, %cst_35 [1] : vector<32x64xf32> to vector<32xf32>
    %113 = vector.shape_cast %112 : vector<32xf32> to vector<32x1xf32>
    %cst_36 = arith.constant 6.400000e+01 : f32
    %114 = vector.broadcast %cst_36 : f32 to vector<32x1xf32>
    %115 = arith.divf %113, %114 : vector<32x1xf32>
    %116 = vector.broadcast %115 : vector<32x1xf32> to vector<32x64xf32>
    %117 = arith.subf %111, %116 : vector<32x64xf32>
    %118 = arith.mulf %117, %117 : vector<32x64xf32>
    %cst_37 = arith.constant dense<0.000000e+00> : vector<32xf32>
    %119 = vector.multi_reduction <add>, %118, %cst_37 [1] : vector<32x64xf32> to vector<32xf32>
    %120 = vector.shape_cast %119 : vector<32xf32> to vector<32x1xf32>
    %cst_38 = arith.constant 6.400000e+01 : f32
    %121 = vector.broadcast %cst_38 : f32 to vector<32x1xf32>
    %122 = arith.divf %120, %121 : vector<32x1xf32>
    %123 = vector.broadcast %115 : vector<32x1xf32> to vector<32x64xf32>
    %124 = arith.subf %111, %123 : vector<32x64xf32>
    %cst_39 = arith.constant 9.99999996E-13 : f32
    %125 = vector.broadcast %cst_39 : f32 to vector<32x1xf32>
    %126 = arith.addf %122, %125 : vector<32x1xf32>
    %127 = math.rsqrt %126 : vector<32x1xf32>
    %128 = vector.broadcast %127 : vector<32x1xf32> to vector<32x64xf32>
    %129 = arith.mulf %124, %128 : vector<32x64xf32>
    %130 = vector.broadcast %10 : vector<1x64xf32> to vector<32x64xf32>
    %131 = arith.mulf %129, %130 : vector<32x64xf32>
    %132 = vector.broadcast %11 : vector<1x64xf32> to vector<32x64xf32>
    %133 = arith.addf %131, %132 : vector<32x64xf32>
    %c1 = arith.constant 1 : index
    %c0_40 = arith.constant 0 : index
    %c0_41 = arith.constant 0 : index
    %134 = vector.load %arg9[%c1, %c0_40, %c0_41] : memref<2x8x256xf32, #tpu.memory_space<vmem>>, vector<1x8x256xf32>
    %135 = vector.shape_cast %134 : vector<1x8x256xf32> to vector<8x256xf32>
    %136 = vector.extract_strided_slice %135 {offsets = [0, 0], sizes = [1, 192], strides = [1, 1]} : vector<8x256xf32> to vector<1x192xf32>
    %137 = vector.extract_strided_slice %135 {offsets = [1, 0], sizes = [1, 64], strides = [1, 1]} : vector<8x256xf32> to vector<1x64xf32>
    %138 = vector.extract_strided_slice %135 {offsets = [2, 0], sizes = [1, 64], strides = [1, 1]} : vector<8x256xf32> to vector<1x64xf32>
    %139 = vector.extract_strided_slice %135 {offsets = [3, 0], sizes = [1, 64], strides = [1, 1]} : vector<8x256xf32> to vector<1x64xf32>
    %140 = vector.extract_strided_slice %135 {offsets = [4, 0], sizes = [1, 256], strides = [1, 1]} : vector<8x256xf32> to vector<1x256xf32>
    %141 = vector.extract_strided_slice %135 {offsets = [5, 0], sizes = [1, 64], strides = [1, 1]} : vector<8x256xf32> to vector<1x64xf32>
    %142 = vector.extract_strided_slice %135 {offsets = [6, 0], sizes = [1, 64], strides = [1, 1]} : vector<8x256xf32> to vector<1x64xf32>
    %143 = vector.extract_strided_slice %135 {offsets = [7, 0], sizes = [1, 64], strides = [1, 1]} : vector<8x256xf32> to vector<1x64xf32>
    %144 = arith.truncf %133 : vector<32x64xf32> to vector<32x64xbf16>
    %c1_42 = arith.constant 1 : index
    %c0_43 = arith.constant 0 : index
    %c0_44 = arith.constant 0 : index
    %145 = vector.load %arg5[%c1_42, %c0_43, %c0_44] : memref<2x64x192xbf16, #tpu.memory_space<vmem>>, vector<1x64x192xbf16>
    %146 = vector.shape_cast %145 : vector<1x64x192xbf16> to vector<64x192xbf16>
    %cst_45 = arith.constant dense<0.000000e+00> : vector<32x192xf32>
    %147 = tpu.matmul %144, %146, %cst_45 {dimension_numbers = #tpu.dot_dimension_numbers<[1], [0], [0], [1], [0, 0, 1, 1], [], []>} : vector<32x64xbf16>, vector<64x192xbf16>, vector<32x192xf32> -> vector<32x192xf32>
    %148 = vector.broadcast %136 : vector<1x192xf32> to vector<32x192xf32>
    %149 = arith.addf %147, %148 : vector<32x192xf32>
    %150 = vector.extract_strided_slice %149 {offsets = [0, 0], sizes = [32, 16], strides = [1, 1]} : vector<32x192xf32> to vector<32x16xf32>
    %151 = vector.extract_strided_slice %149 {offsets = [0, 16], sizes = [32, 16], strides = [1, 1]} : vector<32x192xf32> to vector<32x16xf32>
    %152 = vector.extract_strided_slice %149 {offsets = [0, 32], sizes = [32, 16], strides = [1, 1]} : vector<32x192xf32> to vector<32x16xf32>
    %153 = vector.extract_strided_slice %149 {offsets = [0, 48], sizes = [32, 16], strides = [1, 1]} : vector<32x192xf32> to vector<32x16xf32>
    %154 = tpu.concatenate %150, %151, %152, %153 in 0 : vector<32x16xf32>, vector<32x16xf32>, vector<32x16xf32>, vector<32x16xf32> -> vector<128x16xf32>
    %155 = arith.truncf %154 : vector<128x16xf32> to vector<128x16xbf16>
    %156 = vector.extract_strided_slice %149 {offsets = [0, 64], sizes = [32, 16], strides = [1, 1]} : vector<32x192xf32> to vector<32x16xf32>
    %157 = vector.extract_strided_slice %149 {offsets = [0, 80], sizes = [32, 16], strides = [1, 1]} : vector<32x192xf32> to vector<32x16xf32>
    %158 = vector.extract_strided_slice %149 {offsets = [0, 96], sizes = [32, 16], strides = [1, 1]} : vector<32x192xf32> to vector<32x16xf32>
    %159 = vector.extract_strided_slice %149 {offsets = [0, 112], sizes = [32, 16], strides = [1, 1]} : vector<32x192xf32> to vector<32x16xf32>
    %160 = tpu.concatenate %156, %157, %158, %159 in 0 : vector<32x16xf32>, vector<32x16xf32>, vector<32x16xf32>, vector<32x16xf32> -> vector<128x16xf32>
    %161 = arith.truncf %160 : vector<128x16xf32> to vector<128x16xbf16>
    %162 = vector.extract_strided_slice %149 {offsets = [0, 128], sizes = [32, 16], strides = [1, 1]} : vector<32x192xf32> to vector<32x16xf32>
    %163 = vector.extract_strided_slice %149 {offsets = [0, 144], sizes = [32, 16], strides = [1, 1]} : vector<32x192xf32> to vector<32x16xf32>
    %164 = vector.extract_strided_slice %149 {offsets = [0, 160], sizes = [32, 16], strides = [1, 1]} : vector<32x192xf32> to vector<32x16xf32>
    %165 = vector.extract_strided_slice %149 {offsets = [0, 176], sizes = [32, 16], strides = [1, 1]} : vector<32x192xf32> to vector<32x16xf32>
    %166 = tpu.concatenate %162, %163, %164, %165 in 0 : vector<32x16xf32>, vector<32x16xf32>, vector<32x16xf32>, vector<32x16xf32> -> vector<128x16xf32>
    %167 = arith.truncf %166 : vector<128x16xf32> to vector<128x16xbf16>
    %cst_46 = arith.constant dense<0.000000e+00> : vector<128x128xf32>
    %168 = tpu.matmul %155, %161, %cst_46 {dimension_numbers = #tpu.dot_dimension_numbers<[1], [1], [0], [0], [0, 0, 1, 0], [], []>} : vector<128x16xbf16>, vector<128x16xbf16>, vector<128x128xf32> -> vector<128x128xf32>
    %cst_47 = arith.constant 2.500000e-01 : f32
    %169 = vector.broadcast %cst_47 : f32 to vector<128x128xf32>
    %170 = arith.mulf %168, %169 : vector<128x128xf32>
    %171 = arith.addf %170, %1 : vector<128x128xf32>
    %cst_48 = arith.constant dense<0xFF800000> : vector<128xf32>
    %172 = vector.multi_reduction <maximumf>, %171, %cst_48 [1] : vector<128x128xf32> to vector<128xf32>
    %173 = vector.shape_cast %172 : vector<128xf32> to vector<128x1xf32>
    %174 = vector.broadcast %173 : vector<128x1xf32> to vector<128x128xf32>
    %175 = arith.subf %171, %174 : vector<128x128xf32>
    %176 = math.exp %175 : vector<128x128xf32>
    %cst_49 = arith.constant dense<0.000000e+00> : vector<128xf32>
    %177 = vector.multi_reduction <add>, %176, %cst_49 [1] : vector<128x128xf32> to vector<128xf32>
    %178 = vector.shape_cast %177 : vector<128xf32> to vector<128x1xf32>
    %179 = tpu.reciprocal %178 {approx = true} : vector<128x1xf32> -> vector<128x1xf32>
    %180 = vector.broadcast %179 : vector<128x1xf32> to vector<128x128xf32>
    %181 = arith.mulf %176, %180 : vector<128x128xf32>
    %182 = arith.truncf %181 : vector<128x128xf32> to vector<128x128xbf16>
    %cst_50 = arith.constant dense<0.000000e+00> : vector<128x16xf32>
    %183 = tpu.matmul %182, %167, %cst_50 {dimension_numbers = #tpu.dot_dimension_numbers<[1], [0], [0], [1], [0, 0, 1, 1], [], []>} : vector<128x128xbf16>, vector<128x16xbf16>, vector<128x16xf32> -> vector<128x16xf32>
    %184 = vector.extract_strided_slice %183 {offsets = [0, 0], sizes = [32, 16], strides = [1, 1]} : vector<128x16xf32> to vector<32x16xf32>
    %185 = vector.extract_strided_slice %183 {offsets = [32, 0], sizes = [32, 16], strides = [1, 1]} : vector<128x16xf32> to vector<32x16xf32>
    %186 = vector.extract_strided_slice %183 {offsets = [64, 0], sizes = [32, 16], strides = [1, 1]} : vector<128x16xf32> to vector<32x16xf32>
    %187 = vector.extract_strided_slice %183 {offsets = [96, 0], sizes = [32, 16], strides = [1, 1]} : vector<128x16xf32> to vector<32x16xf32>
    %188 = tpu.concatenate %184, %185, %186, %187 in 1 : vector<32x16xf32>, vector<32x16xf32>, vector<32x16xf32>, vector<32x16xf32> -> vector<32x64xf32>
    %189 = arith.truncf %188 : vector<32x64xf32> to vector<32x64xbf16>
    %c1_51 = arith.constant 1 : index
    %c0_52 = arith.constant 0 : index
    %c0_53 = arith.constant 0 : index
    %190 = vector.load %arg6[%c1_51, %c0_52, %c0_53] : memref<2x64x64xbf16, #tpu.memory_space<vmem>>, vector<1x64x64xbf16>
    %191 = vector.shape_cast %190 : vector<1x64x64xbf16> to vector<64x64xbf16>
    %cst_54 = arith.constant dense<0.000000e+00> : vector<32x64xf32>
    %192 = tpu.matmul %189, %191, %cst_54 {dimension_numbers = #tpu.dot_dimension_numbers<[1], [0], [0], [1], [0, 0, 1, 1], [], []>} : vector<32x64xbf16>, vector<64x64xbf16>, vector<32x64xf32> -> vector<32x64xf32>
    %193 = vector.broadcast %137 : vector<1x64xf32> to vector<32x64xf32>
    %194 = arith.addf %192, %193 : vector<32x64xf32>
    %195 = arith.addf %133, %194 : vector<32x64xf32>
    %cst_55 = arith.constant dense<0.000000e+00> : vector<32xf32>
    %196 = vector.multi_reduction <add>, %195, %cst_55 [1] : vector<32x64xf32> to vector<32xf32>
    %197 = vector.shape_cast %196 : vector<32xf32> to vector<32x1xf32>
    %cst_56 = arith.constant 6.400000e+01 : f32
    %198 = vector.broadcast %cst_56 : f32 to vector<32x1xf32>
    %199 = arith.divf %197, %198 : vector<32x1xf32>
    %200 = vector.broadcast %199 : vector<32x1xf32> to vector<32x64xf32>
    %201 = arith.subf %195, %200 : vector<32x64xf32>
    %202 = arith.mulf %201, %201 : vector<32x64xf32>
    %cst_57 = arith.constant dense<0.000000e+00> : vector<32xf32>
    %203 = vector.multi_reduction <add>, %202, %cst_57 [1] : vector<32x64xf32> to vector<32xf32>
    %204 = vector.shape_cast %203 : vector<32xf32> to vector<32x1xf32>
    %cst_58 = arith.constant 6.400000e+01 : f32
    %205 = vector.broadcast %cst_58 : f32 to vector<32x1xf32>
    %206 = arith.divf %204, %205 : vector<32x1xf32>
    %207 = vector.broadcast %199 : vector<32x1xf32> to vector<32x64xf32>
    %208 = arith.subf %195, %207 : vector<32x64xf32>
    %cst_59 = arith.constant 9.99999996E-13 : f32
    %209 = vector.broadcast %cst_59 : f32 to vector<32x1xf32>
    %210 = arith.addf %206, %209 : vector<32x1xf32>
    %211 = math.rsqrt %210 : vector<32x1xf32>
    %212 = vector.broadcast %211 : vector<32x1xf32> to vector<32x64xf32>
    %213 = arith.mulf %208, %212 : vector<32x64xf32>
    %214 = vector.broadcast %138 : vector<1x64xf32> to vector<32x64xf32>
    %215 = arith.mulf %213, %214 : vector<32x64xf32>
    %216 = vector.broadcast %139 : vector<1x64xf32> to vector<32x64xf32>
    %217 = arith.addf %215, %216 : vector<32x64xf32>
    %218 = arith.truncf %217 : vector<32x64xf32> to vector<32x64xbf16>
    %c1_60 = arith.constant 1 : index
    %c0_61 = arith.constant 0 : index
    %c0_62 = arith.constant 0 : index
    %219 = vector.load %arg7[%c1_60, %c0_61, %c0_62] : memref<2x64x256xbf16, #tpu.memory_space<vmem>>, vector<1x64x256xbf16>
    %220 = vector.shape_cast %219 : vector<1x64x256xbf16> to vector<64x256xbf16>
    %cst_63 = arith.constant dense<0.000000e+00> : vector<32x256xf32>
    %221 = tpu.matmul %218, %220, %cst_63 {dimension_numbers = #tpu.dot_dimension_numbers<[1], [0], [0], [1], [0, 0, 1, 1], [], []>} : vector<32x64xbf16>, vector<64x256xbf16>, vector<32x256xf32> -> vector<32x256xf32>
    %222 = vector.broadcast %140 : vector<1x256xf32> to vector<32x256xf32>
    %223 = arith.addf %221, %222 : vector<32x256xf32>
    %cst_64 = arith.constant 5.000000e-01 : f32
    %224 = vector.broadcast %cst_64 : f32 to vector<32x256xf32>
    %225 = arith.mulf %224, %223 : vector<32x256xf32>
    %cst_65 = arith.constant 4.471500e-02 : f32
    %226 = vector.broadcast %cst_65 : f32 to vector<32x256xf32>
    %227 = arith.mulf %226, %223 : vector<32x256xf32>
    %228 = arith.mulf %227, %223 : vector<32x256xf32>
    %229 = arith.mulf %228, %223 : vector<32x256xf32>
    %230 = arith.addf %223, %229 : vector<32x256xf32>
    %cst_66 = arith.constant 0.797884583 : f32
    %231 = vector.broadcast %cst_66 : f32 to vector<32x256xf32>
    %232 = arith.mulf %231, %230 : vector<32x256xf32>
    %233 = math.tanh %232 : vector<32x256xf32>
    %cst_67 = arith.constant 1.000000e+00 : f32
    %234 = vector.broadcast %cst_67 : f32 to vector<32x256xf32>
    %235 = arith.addf %234, %233 : vector<32x256xf32>
    %236 = arith.mulf %225, %235 : vector<32x256xf32>
    %237 = arith.truncf %236 : vector<32x256xf32> to vector<32x256xbf16>
    %c1_68 = arith.constant 1 : index
    %c0_69 = arith.constant 0 : index
    %c0_70 = arith.constant 0 : index
    %238 = vector.load %arg8[%c1_68, %c0_69, %c0_70] : memref<2x256x64xbf16, #tpu.memory_space<vmem>>, vector<1x256x64xbf16>
    %239 = vector.shape_cast %238 : vector<1x256x64xbf16> to vector<256x64xbf16>
    %cst_71 = arith.constant dense<0.000000e+00> : vector<32x64xf32>
    %240 = tpu.matmul %237, %239, %cst_71 {dimension_numbers = #tpu.dot_dimension_numbers<[1], [0], [0], [1], [0, 0, 1, 1], [], []>} : vector<32x256xbf16>, vector<256x64xbf16>, vector<32x64xf32> -> vector<32x64xf32>
    %241 = vector.broadcast %141 : vector<1x64xf32> to vector<32x64xf32>
    %242 = arith.addf %240, %241 : vector<32x64xf32>
    %243 = arith.addf %217, %242 : vector<32x64xf32>
    %cst_72 = arith.constant dense<0.000000e+00> : vector<32xf32>
    %244 = vector.multi_reduction <add>, %243, %cst_72 [1] : vector<32x64xf32> to vector<32xf32>
    %245 = vector.shape_cast %244 : vector<32xf32> to vector<32x1xf32>
    %cst_73 = arith.constant 6.400000e+01 : f32
    %246 = vector.broadcast %cst_73 : f32 to vector<32x1xf32>
    %247 = arith.divf %245, %246 : vector<32x1xf32>
    %248 = vector.broadcast %247 : vector<32x1xf32> to vector<32x64xf32>
    %249 = arith.subf %243, %248 : vector<32x64xf32>
    %250 = arith.mulf %249, %249 : vector<32x64xf32>
    %cst_74 = arith.constant dense<0.000000e+00> : vector<32xf32>
    %251 = vector.multi_reduction <add>, %250, %cst_74 [1] : vector<32x64xf32> to vector<32xf32>
    %252 = vector.shape_cast %251 : vector<32xf32> to vector<32x1xf32>
    %cst_75 = arith.constant 6.400000e+01 : f32
    %253 = vector.broadcast %cst_75 : f32 to vector<32x1xf32>
    %254 = arith.divf %252, %253 : vector<32x1xf32>
    %255 = vector.broadcast %247 : vector<32x1xf32> to vector<32x64xf32>
    %256 = arith.subf %243, %255 : vector<32x64xf32>
    %cst_76 = arith.constant 9.99999996E-13 : f32
    %257 = vector.broadcast %cst_76 : f32 to vector<32x1xf32>
    %258 = arith.addf %254, %257 : vector<32x1xf32>
    %259 = math.rsqrt %258 : vector<32x1xf32>
    %260 = vector.broadcast %259 : vector<32x1xf32> to vector<32x64xf32>
    %261 = arith.mulf %256, %260 : vector<32x64xf32>
    %262 = vector.broadcast %142 : vector<1x64xf32> to vector<32x64xf32>
    %263 = arith.mulf %261, %262 : vector<32x64xf32>
    %264 = vector.broadcast %143 : vector<1x64xf32> to vector<32x64xf32>
    %265 = arith.addf %263, %264 : vector<32x64xf32>
    %c0_77 = arith.constant 0 : index
    %c0_78 = arith.constant 0 : index
    %266 = vector.load %arg13[%c0_77, %c0_78] : memref<8x256xf32, #tpu.memory_space<vmem>>, vector<8x256xf32>
    %267 = vector.extract_strided_slice %266 {offsets = [0, 0], sizes = [1, 192], strides = [1, 1]} : vector<8x256xf32> to vector<1x192xf32>
    %268 = vector.extract_strided_slice %266 {offsets = [1, 0], sizes = [1, 64], strides = [1, 1]} : vector<8x256xf32> to vector<1x64xf32>
    %269 = vector.extract_strided_slice %266 {offsets = [2, 0], sizes = [1, 64], strides = [1, 1]} : vector<8x256xf32> to vector<1x64xf32>
    %270 = vector.extract_strided_slice %266 {offsets = [3, 0], sizes = [1, 64], strides = [1, 1]} : vector<8x256xf32> to vector<1x64xf32>
    %271 = vector.extract_strided_slice %266 {offsets = [4, 0], sizes = [1, 128], strides = [1, 1]} : vector<8x256xf32> to vector<1x128xf32>
    %272 = vector.extract_strided_slice %266 {offsets = [5, 0], sizes = [1, 128], strides = [1, 1]} : vector<8x256xf32> to vector<1x128xf32>
    %273 = vector.extract_strided_slice %266 {offsets = [6, 0], sizes = [1, 128], strides = [1, 1]} : vector<8x256xf32> to vector<1x128xf32>
    %274 = vector.extract_strided_slice %266 {offsets = [7, 0], sizes = [1, 128], strides = [1, 1]} : vector<8x256xf32> to vector<1x128xf32>
    %275 = arith.truncf %265 : vector<32x64xf32> to vector<32x64xbf16>
    %c0_79 = arith.constant 0 : index
    %c0_80 = arith.constant 0 : index
    %276 = vector.load %arg10[%c0_79, %c0_80] : memref<64x192xbf16, #tpu.memory_space<vmem>>, vector<64x192xbf16>
    %cst_81 = arith.constant dense<0.000000e+00> : vector<32x192xf32>
    %277 = tpu.matmul %275, %276, %cst_81 {dimension_numbers = #tpu.dot_dimension_numbers<[1], [0], [0], [1], [0, 0, 1, 1], [], []>} : vector<32x64xbf16>, vector<64x192xbf16>, vector<32x192xf32> -> vector<32x192xf32>
    %278 = vector.broadcast %267 : vector<1x192xf32> to vector<32x192xf32>
    %279 = arith.addf %277, %278 : vector<32x192xf32>
    %cst_82 = arith.constant 5.000000e-01 : f32
    %280 = vector.broadcast %cst_82 : f32 to vector<32x192xf32>
    %281 = arith.mulf %280, %279 : vector<32x192xf32>
    %cst_83 = arith.constant 4.471500e-02 : f32
    %282 = vector.broadcast %cst_83 : f32 to vector<32x192xf32>
    %283 = arith.mulf %282, %279 : vector<32x192xf32>
    %284 = arith.mulf %283, %279 : vector<32x192xf32>
    %285 = arith.mulf %284, %279 : vector<32x192xf32>
    %286 = arith.addf %279, %285 : vector<32x192xf32>
    %cst_84 = arith.constant 0.797884583 : f32
    %287 = vector.broadcast %cst_84 : f32 to vector<32x192xf32>
    %288 = arith.mulf %287, %286 : vector<32x192xf32>
    %289 = math.tanh %288 : vector<32x192xf32>
    %cst_85 = arith.constant 1.000000e+00 : f32
    %290 = vector.broadcast %cst_85 : f32 to vector<32x192xf32>
    %291 = arith.addf %290, %289 : vector<32x192xf32>
    %292 = arith.mulf %281, %291 : vector<32x192xf32>
    %293 = vector.extract_strided_slice %292 {offsets = [0, 0], sizes = [32, 64], strides = [1, 1]} : vector<32x192xf32> to vector<32x64xf32>
    %cst_86 = arith.constant dense<0.000000e+00> : vector<32xf32>
    %294 = vector.multi_reduction <add>, %293, %cst_86 [1] : vector<32x64xf32> to vector<32xf32>
    %295 = vector.shape_cast %294 : vector<32xf32> to vector<32x1xf32>
    %cst_87 = arith.constant 6.400000e+01 : f32
    %296 = vector.broadcast %cst_87 : f32 to vector<32x1xf32>
    %297 = arith.divf %295, %296 : vector<32x1xf32>
    %298 = vector.broadcast %297 : vector<32x1xf32> to vector<32x64xf32>
    %299 = arith.subf %293, %298 : vector<32x64xf32>
    %300 = arith.mulf %299, %299 : vector<32x64xf32>
    %cst_88 = arith.constant dense<0.000000e+00> : vector<32xf32>
    %301 = vector.multi_reduction <add>, %300, %cst_88 [1] : vector<32x64xf32> to vector<32xf32>
    %302 = vector.shape_cast %301 : vector<32xf32> to vector<32x1xf32>
    %cst_89 = arith.constant 6.400000e+01 : f32
    %303 = vector.broadcast %cst_89 : f32 to vector<32x1xf32>
    %304 = arith.divf %302, %303 : vector<32x1xf32>
    %305 = vector.broadcast %297 : vector<32x1xf32> to vector<32x64xf32>
    %306 = arith.subf %293, %305 : vector<32x64xf32>
    %cst_90 = arith.constant 9.99999996E-13 : f32
    %307 = vector.broadcast %cst_90 : f32 to vector<32x1xf32>
    %308 = arith.addf %304, %307 : vector<32x1xf32>
    %309 = math.rsqrt %308 : vector<32x1xf32>
    %310 = vector.broadcast %309 : vector<32x1xf32> to vector<32x64xf32>
    %311 = arith.mulf %306, %310 : vector<32x64xf32>
    %312 = vector.broadcast %269 : vector<1x64xf32> to vector<32x64xf32>
    %313 = arith.mulf %311, %312 : vector<32x64xf32>
    %314 = vector.broadcast %270 : vector<1x64xf32> to vector<32x64xf32>
    %315 = arith.addf %313, %314 : vector<32x64xf32>
    %316 = vector.extract_strided_slice %292 {offsets = [0, 64], sizes = [32, 64], strides = [1, 1]} : vector<32x192xf32> to vector<32x64xf32>
    %317 = vector.extract_strided_slice %292 {offsets = [0, 128], sizes = [32, 64], strides = [1, 1]} : vector<32x192xf32> to vector<32x64xf32>
    %318 = arith.truncf %315 : vector<32x64xf32> to vector<32x64xbf16>
    %c0_91 = arith.constant 0 : index
    %c0_92 = arith.constant 0 : index
    %c0_93 = arith.constant 0 : index
    %319 = vector.load %arg12[%c0_91, %c0_92, %c0_93] : memref<4x64x128xbf16, #tpu.memory_space<vmem>>, vector<1x64x128xbf16>
    %320 = vector.shape_cast %319 : vector<1x64x128xbf16> to vector<64x128xbf16>
    %cst_94 = arith.constant dense<0.000000e+00> : vector<32x128xf32>
    %321 = tpu.matmul %318, %320, %cst_94 {dimension_numbers = #tpu.dot_dimension_numbers<[1], [0], [0], [1], [0, 0, 1, 1], [], []>} : vector<32x64xbf16>, vector<64x128xbf16>, vector<32x128xf32> -> vector<32x128xf32>
    %322 = vector.broadcast %271 : vector<1x128xf32> to vector<32x128xf32>
    %323 = arith.addf %321, %322 : vector<32x128xf32>
    %cst_95 = arith.constant dense<0xFF800000> : vector<32xf32>
    %324 = vector.multi_reduction <maximumf>, %323, %cst_95 [1] : vector<32x128xf32> to vector<32xf32>
    %325 = vector.shape_cast %324 : vector<32xf32> to vector<32x1xf32>
    %326 = vector.broadcast %325 : vector<32x1xf32> to vector<32x128xf32>
    %327 = arith.subf %323, %326 : vector<32x128xf32>
    %328 = math.exp %327 : vector<32x128xf32>
    %cst_96 = arith.constant dense<0.000000e+00> : vector<32xf32>
    %329 = vector.multi_reduction <add>, %328, %cst_96 [1] : vector<32x128xf32> to vector<32xf32>
    %330 = vector.shape_cast %329 : vector<32xf32> to vector<32x1xf32>
    %331 = math.log %330 : vector<32x1xf32>
    %332 = arith.addf %325, %331 : vector<32x1xf32>
    %333 = vector.broadcast %332 : vector<32x1xf32> to vector<32x128xf32>
    %334 = arith.subf %323, %333 : vector<32x128xf32>
    %335 = arith.truncf %316 : vector<32x64xf32> to vector<32x64xbf16>
    %c1_97 = arith.constant 1 : index
    %c0_98 = arith.constant 0 : index
    %c0_99 = arith.constant 0 : index
    %336 = vector.load %arg12[%c1_97, %c0_98, %c0_99] : memref<4x64x128xbf16, #tpu.memory_space<vmem>>, vector<1x64x128xbf16>
    %337 = vector.shape_cast %336 : vector<1x64x128xbf16> to vector<64x128xbf16>
    %cst_100 = arith.constant dense<0.000000e+00> : vector<32x128xf32>
    %338 = tpu.matmul %335, %337, %cst_100 {dimension_numbers = #tpu.dot_dimension_numbers<[1], [0], [0], [1], [0, 0, 1, 1], [], []>} : vector<32x64xbf16>, vector<64x128xbf16>, vector<32x128xf32> -> vector<32x128xf32>
    %339 = vector.broadcast %272 : vector<1x128xf32> to vector<32x128xf32>
    %340 = arith.addf %338, %339 : vector<32x128xf32>
    %cst_101 = arith.constant dense<0xFF800000> : vector<32xf32>
    %341 = vector.multi_reduction <maximumf>, %340, %cst_101 [1] : vector<32x128xf32> to vector<32xf32>
    %342 = vector.shape_cast %341 : vector<32xf32> to vector<32x1xf32>
    %343 = vector.broadcast %342 : vector<32x1xf32> to vector<32x128xf32>
    %344 = arith.subf %340, %343 : vector<32x128xf32>
    %345 = math.exp %344 : vector<32x128xf32>
    %cst_102 = arith.constant dense<0.000000e+00> : vector<32xf32>
    %346 = vector.multi_reduction <add>, %345, %cst_102 [1] : vector<32x128xf32> to vector<32xf32>
    %347 = vector.shape_cast %346 : vector<32xf32> to vector<32x1xf32>
    %348 = math.log %347 : vector<32x1xf32>
    %349 = arith.addf %342, %348 : vector<32x1xf32>
    %350 = vector.broadcast %349 : vector<32x1xf32> to vector<32x128xf32>
    %351 = arith.subf %340, %350 : vector<32x128xf32>
    %c0_103 = arith.constant 0 : index
    %c0_104 = arith.constant 0 : index
    %352 = vector.load %arg3[%c0_103, %c0_104] : memref<32x32xf32, #tpu.memory_space<vmem>>, vector<32x32xf32>
    %cst_105 = arith.constant dense<0.000000e+00> : vector<32xf32>
    %353 = vector.multi_reduction <add>, %352, %cst_105 [1] : vector<32x32xf32> to vector<32xf32>
    %354 = vector.shape_cast %353 : vector<32xf32> to vector<32x1xf32>
    %cst_106 = arith.constant 1.000000e+00 : f32
    %355 = vector.broadcast %cst_106 : f32 to vector<32x1xf32>
    %356 = arith.maximumf %354, %355 : vector<32x1xf32>
    %357 = arith.truncf %352 : vector<32x32xf32> to vector<32x32xbf16>
    %cst_107 = arith.constant dense<0.000000e+00> : vector<32x64xf32>
    %358 = tpu.matmul %357, %275, %cst_107 {dimension_numbers = #tpu.dot_dimension_numbers<[1], [0], [0], [1], [0, 0, 1, 1], [], []>} : vector<32x32xbf16>, vector<32x64xbf16>, vector<32x64xf32> -> vector<32x64xf32>
    %359 = vector.broadcast %356 : vector<32x1xf32> to vector<32x64xf32>
    %360 = arith.divf %358, %359 : vector<32x64xf32>
    %361 = arith.truncf %360 : vector<32x64xf32> to vector<32x64xbf16>
    %c0_108 = arith.constant 0 : index
    %c0_109 = arith.constant 0 : index
    %362 = vector.load %arg11[%c0_108, %c0_109] : memref<64x64xbf16, #tpu.memory_space<vmem>>, vector<64x64xbf16>
    %cst_110 = arith.constant dense<0.000000e+00> : vector<32x64xf32>
    %363 = tpu.matmul %361, %362, %cst_110 {dimension_numbers = #tpu.dot_dimension_numbers<[1], [0], [0], [1], [0, 0, 1, 1], [], []>} : vector<32x64xbf16>, vector<64x64xbf16>, vector<32x64xf32> -> vector<32x64xf32>
    %364 = vector.broadcast %268 : vector<1x64xf32> to vector<32x64xf32>
    %365 = arith.addf %363, %364 : vector<32x64xf32>
    %cst_111 = arith.constant 5.000000e-01 : f32
    %366 = vector.broadcast %cst_111 : f32 to vector<32x64xf32>
    %367 = arith.mulf %366, %365 : vector<32x64xf32>
    %cst_112 = arith.constant 4.471500e-02 : f32
    %368 = vector.broadcast %cst_112 : f32 to vector<32x64xf32>
    %369 = arith.mulf %368, %365 : vector<32x64xf32>
    %370 = arith.mulf %369, %365 : vector<32x64xf32>
    %371 = arith.mulf %370, %365 : vector<32x64xf32>
    %372 = arith.addf %365, %371 : vector<32x64xf32>
    %cst_113 = arith.constant 0.797884583 : f32
    %373 = vector.broadcast %cst_113 : f32 to vector<32x64xf32>
    %374 = arith.mulf %373, %372 : vector<32x64xf32>
    %375 = math.tanh %374 : vector<32x64xf32>
    %cst_114 = arith.constant 1.000000e+00 : f32
    %376 = vector.broadcast %cst_114 : f32 to vector<32x64xf32>
    %377 = arith.addf %376, %375 : vector<32x64xf32>
    %378 = arith.mulf %367, %377 : vector<32x64xf32>
    %379 = arith.truncf %378 : vector<32x64xf32> to vector<32x64xbf16>
    %c2 = arith.constant 2 : index
    %c0_115 = arith.constant 0 : index
    %c0_116 = arith.constant 0 : index
    %380 = vector.load %arg12[%c2, %c0_115, %c0_116] : memref<4x64x128xbf16, #tpu.memory_space<vmem>>, vector<1x64x128xbf16>
    %381 = vector.shape_cast %380 : vector<1x64x128xbf16> to vector<64x128xbf16>
    %cst_117 = arith.constant dense<0.000000e+00> : vector<32x128xf32>
    %382 = tpu.matmul %379, %381, %cst_117 {dimension_numbers = #tpu.dot_dimension_numbers<[1], [0], [0], [1], [0, 0, 1, 1], [], []>} : vector<32x64xbf16>, vector<64x128xbf16>, vector<32x128xf32> -> vector<32x128xf32>
    %383 = vector.broadcast %273 : vector<1x128xf32> to vector<32x128xf32>
    %384 = arith.addf %382, %383 : vector<32x128xf32>
    %cst_118 = arith.constant dense<0xFF800000> : vector<32xf32>
    %385 = vector.multi_reduction <maximumf>, %384, %cst_118 [1] : vector<32x128xf32> to vector<32xf32>
    %386 = vector.shape_cast %385 : vector<32xf32> to vector<32x1xf32>
    %387 = vector.broadcast %386 : vector<32x1xf32> to vector<32x128xf32>
    %388 = arith.subf %384, %387 : vector<32x128xf32>
    %389 = math.exp %388 : vector<32x128xf32>
    %cst_119 = arith.constant dense<0.000000e+00> : vector<32xf32>
    %390 = vector.multi_reduction <add>, %389, %cst_119 [1] : vector<32x128xf32> to vector<32xf32>
    %391 = vector.shape_cast %390 : vector<32xf32> to vector<32x1xf32>
    %392 = math.log %391 : vector<32x1xf32>
    %393 = arith.addf %386, %392 : vector<32x1xf32>
    %394 = vector.broadcast %393 : vector<32x1xf32> to vector<32x128xf32>
    %395 = arith.subf %384, %394 : vector<32x128xf32>
    %396 = arith.truncf %317 : vector<32x64xf32> to vector<32x64xbf16>
    %c3 = arith.constant 3 : index
    %c0_120 = arith.constant 0 : index
    %c0_121 = arith.constant 0 : index
    %397 = vector.load %arg12[%c3, %c0_120, %c0_121] : memref<4x64x128xbf16, #tpu.memory_space<vmem>>, vector<1x64x128xbf16>
    %398 = vector.shape_cast %397 : vector<1x64x128xbf16> to vector<64x128xbf16>
    %cst_122 = arith.constant dense<0.000000e+00> : vector<32x128xf32>
    %399 = tpu.matmul %396, %398, %cst_122 {dimension_numbers = #tpu.dot_dimension_numbers<[1], [0], [0], [1], [0, 0, 1, 1], [], []>} : vector<32x64xbf16>, vector<64x128xbf16>, vector<32x128xf32> -> vector<32x128xf32>
    %400 = vector.broadcast %274 : vector<1x128xf32> to vector<32x128xf32>
    %401 = arith.addf %399, %400 : vector<32x128xf32>
    %cst_123 = arith.constant dense<0xFF800000> : vector<32xf32>
    %402 = vector.multi_reduction <maximumf>, %401, %cst_123 [1] : vector<32x128xf32> to vector<32xf32>
    %403 = vector.shape_cast %402 : vector<32xf32> to vector<32x1xf32>
    %404 = vector.broadcast %403 : vector<32x1xf32> to vector<32x128xf32>
    %405 = arith.subf %401, %404 : vector<32x128xf32>
    %406 = math.exp %405 : vector<32x128xf32>
    %cst_124 = arith.constant dense<0.000000e+00> : vector<32xf32>
    %407 = vector.multi_reduction <add>, %406, %cst_124 [1] : vector<32x128xf32> to vector<32xf32>
    %408 = vector.shape_cast %407 : vector<32xf32> to vector<32x1xf32>
    %409 = math.log %408 : vector<32x1xf32>
    %410 = arith.addf %403, %409 : vector<32x1xf32>
    %411 = vector.broadcast %410 : vector<32x1xf32> to vector<32x128xf32>
    %412 = arith.subf %401, %411 : vector<32x128xf32>
    %c0_125 = arith.constant 0 : index
    %c0_126 = arith.constant 0 : index
    %413 = vector.load %arg4[%c0_125, %c0_126] : memref<32x3xi32, #tpu.memory_space<vmem>>, vector<32x3xi32>
    %414 = tpu.iota {dimensions = array<i32: 1>} : vector<32x128xi32>
    %415 = tpu.iota {dimensions = array<i32: 1>} : vector<1x128xi32>
    %416 = vector.extract_strided_slice %413 {offsets = [0, 0], sizes = [32, 1], strides = [1, 1]} : vector<32x3xi32> to vector<32x1xi32>
    %c0_i32 = arith.constant 0 : i32
    %417 = vector.broadcast %c0_i32 : i32 to vector<32x1xi32>
    %418 = arith.cmpi sge, %416, %417 : vector<32x1xi32>
    %419 = vector.broadcast %416 : vector<32x1xi32> to vector<32x128xi32>
    %420 = arith.cmpi eq, %414, %419 : vector<32x128xi32>
    %cst_127 = arith.constant 0.000000e+00 : f32
    %421 = vector.broadcast %cst_127 : f32 to vector<32x128xf32>
    %422 = arith.select %420, %334, %421 : vector<32x128xi1>, vector<32x128xf32>
    %cst_128 = arith.constant dense<0.000000e+00> : vector<32xf32>
    %423 = vector.multi_reduction <add>, %422, %cst_128 [1] : vector<32x128xf32> to vector<32xf32>
    %424 = vector.shape_cast %423 : vector<32xf32> to vector<32x1xf32>
    %cst_129 = arith.constant 0.000000e+00 : f32
    %425 = vector.broadcast %cst_129 : f32 to vector<32x1xf32>
    %426 = arith.subf %425, %424 : vector<32x1xf32>
    %cst_130 = arith.constant dense<0xFF800000> : vector<32xf32>
    %427 = vector.multi_reduction <maximumf>, %334, %cst_130 [1] : vector<32x128xf32> to vector<32xf32>
    %428 = vector.shape_cast %427 : vector<32xf32> to vector<32x1xf32>
    %429 = vector.broadcast %428 : vector<32x1xf32> to vector<32x128xf32>
    %430 = arith.cmpf oge, %334, %429 : vector<32x128xf32>
    %c128_i32 = arith.constant 128 : i32
    %431 = vector.broadcast %c128_i32 : i32 to vector<32x128xi32>
    %432 = arith.select %430, %414, %431 : vector<32x128xi1>, vector<32x128xi32>
    %cst_131 = arith.constant dense<2147483647> : vector<32xi32>
    %433 = vector.multi_reduction <minsi>, %432, %cst_131 [1] : vector<32x128xi32> to vector<32xi32>
    %434 = vector.shape_cast %433 : vector<32xi32> to vector<32x1xi32>
    %cst_132 = arith.constant 1.000000e+00 : f32
    %cst_133 = arith.constant 0.000000e+00 : f32
    %435 = vector.broadcast %cst_132 : f32 to vector<32x1xf32>
    %436 = vector.broadcast %cst_133 : f32 to vector<32x1xf32>
    %437 = arith.select %418, %435, %436 : vector<32x1xi1>, vector<32x1xf32>
    %cst_134 = arith.constant dense<0.000000e+00> : vector<1xf32>
    %438 = vector.multi_reduction <add>, %437, %cst_134 [0] : vector<32x1xf32> to vector<1xf32>
    %439 = vector.shape_cast %438 : vector<1xf32> to vector<1x1xf32>
    %440 = arith.cmpi eq, %434, %416 : vector<32x1xi32>
    %441 = arith.andi %418, %440 : vector<32x1xi1>
    %cst_135 = arith.constant 1.000000e+00 : f32
    %cst_136 = arith.constant 0.000000e+00 : f32
    %442 = vector.broadcast %cst_135 : f32 to vector<32x1xf32>
    %443 = vector.broadcast %cst_136 : f32 to vector<32x1xf32>
    %444 = arith.select %441, %442, %443 : vector<32x1xi1>, vector<32x1xf32>
    %cst_137 = arith.constant dense<0.000000e+00> : vector<1xf32>
    %445 = vector.multi_reduction <add>, %444, %cst_137 [0] : vector<32x1xf32> to vector<1xf32>
    %446 = vector.shape_cast %445 : vector<1xf32> to vector<1x1xf32>
    %cst_138 = arith.constant 0.000000e+00 : f32
    %447 = vector.broadcast %cst_138 : f32 to vector<32x1xf32>
    %448 = arith.select %418, %426, %447 : vector<32x1xi1>, vector<32x1xf32>
    %cst_139 = arith.constant dense<0.000000e+00> : vector<1xf32>
    %449 = vector.multi_reduction <add>, %448, %cst_139 [0] : vector<32x1xf32> to vector<1xf32>
    %450 = vector.shape_cast %449 : vector<1xf32> to vector<1x1xf32>
    %cst_140 = arith.constant 1.000000e+00 : f32
    %451 = vector.broadcast %cst_140 : f32 to vector<1x1xf32>
    %452 = arith.maximumf %439, %451 : vector<1x1xf32>
    %453 = arith.divf %450, %452 : vector<1x1xf32>
    %c0_i32_141 = arith.constant 0 : i32
    %454 = vector.broadcast %c0_i32_141 : i32 to vector<1x128xi32>
    %455 = arith.cmpi eq, %415, %454 : vector<1x128xi32>
    %cst_142 = arith.constant 0.000000e+00 : f32
    %456 = vector.shape_cast %453 : vector<1x1xf32> to vector<1x1xf32>
    %457 = vector.broadcast %456 : vector<1x1xf32> to vector<1x128xf32>
    %458 = vector.broadcast %cst_142 : f32 to vector<1x128xf32>
    %459 = arith.select %455, %457, %458 : vector<1x128xi1>, vector<1x128xf32>
    %c1_i32 = arith.constant 1 : i32
    %460 = vector.broadcast %c1_i32 : i32 to vector<1x128xi32>
    %461 = arith.cmpi eq, %415, %460 : vector<1x128xi32>
    %cst_143 = arith.constant 0.000000e+00 : f32
    %462 = vector.shape_cast %446 : vector<1x1xf32> to vector<1x1xf32>
    %463 = vector.broadcast %462 : vector<1x1xf32> to vector<1x128xf32>
    %464 = vector.broadcast %cst_143 : f32 to vector<1x128xf32>
    %465 = arith.select %461, %463, %464 : vector<1x128xi1>, vector<1x128xf32>
    %466 = arith.addf %459, %465 : vector<1x128xf32>
    %c2_i32 = arith.constant 2 : i32
    %467 = vector.broadcast %c2_i32 : i32 to vector<1x128xi32>
    %468 = arith.cmpi eq, %415, %467 : vector<1x128xi32>
    %cst_144 = arith.constant 0.000000e+00 : f32
    %469 = vector.shape_cast %439 : vector<1x1xf32> to vector<1x1xf32>
    %470 = vector.broadcast %469 : vector<1x1xf32> to vector<1x128xf32>
    %471 = vector.broadcast %cst_144 : f32 to vector<1x128xf32>
    %472 = arith.select %468, %470, %471 : vector<1x128xi1>, vector<1x128xf32>
    %473 = arith.addf %466, %472 : vector<1x128xf32>
    %c0_145 = arith.constant 0 : index
    %c0_146 = arith.constant 0 : index
    %474 = vector.load %arg14[%c0_145, %c0_146] : memref<4x128xf32, #tpu.memory_space<vmem>>, vector<1x128xf32>
    tpu.vector_store %arg14[%c0_145, %c0_146], %473 {strides = array<i32>} : memref<4x128xf32, #tpu.memory_space<vmem>>, vector<1x128xf32>,
    %475 = vector.extract_strided_slice %413 {offsets = [0, 1], sizes = [32, 1], strides = [1, 1]} : vector<32x3xi32> to vector<32x1xi32>
    %c0_i32_147 = arith.constant 0 : i32
    %476 = vector.broadcast %c0_i32_147 : i32 to vector<32x1xi32>
    %477 = arith.cmpi sge, %475, %476 : vector<32x1xi32>
    %478 = vector.broadcast %475 : vector<32x1xi32> to vector<32x128xi32>
    %479 = arith.cmpi eq, %414, %478 : vector<32x128xi32>
    %cst_148 = arith.constant 0.000000e+00 : f32
    %480 = vector.broadcast %cst_148 : f32 to vector<32x128xf32>
    %481 = arith.select %479, %351, %480 : vector<32x128xi1>, vector<32x128xf32>
    %cst_149 = arith.constant dense<0.000000e+00> : vector<32xf32>
    %482 = vector.multi_reduction <add>, %481, %cst_149 [1] : vector<32x128xf32> to vector<32xf32>
    %483 = vector.shape_cast %482 : vector<32xf32> to vector<32x1xf32>
    %cst_150 = arith.constant 0.000000e+00 : f32
    %484 = vector.broadcast %cst_150 : f32 to vector<32x1xf32>
    %485 = arith.subf %484, %483 : vector<32x1xf32>
    %cst_151 = arith.constant dense<0xFF800000> : vector<32xf32>
    %486 = vector.multi_reduction <maximumf>, %351, %cst_151 [1] : vector<32x128xf32> to vector<32xf32>
    %487 = vector.shape_cast %486 : vector<32xf32> to vector<32x1xf32>
    %488 = vector.broadcast %487 : vector<32x1xf32> to vector<32x128xf32>
    %489 = arith.cmpf oge, %351, %488 : vector<32x128xf32>
    %c128_i32_152 = arith.constant 128 : i32
    %490 = vector.broadcast %c128_i32_152 : i32 to vector<32x128xi32>
    %491 = arith.select %489, %414, %490 : vector<32x128xi1>, vector<32x128xi32>
    %cst_153 = arith.constant dense<2147483647> : vector<32xi32>
    %492 = vector.multi_reduction <minsi>, %491, %cst_153 [1] : vector<32x128xi32> to vector<32xi32>
    %493 = vector.shape_cast %492 : vector<32xi32> to vector<32x1xi32>
    %cst_154 = arith.constant 1.000000e+00 : f32
    %cst_155 = arith.constant 0.000000e+00 : f32
    %494 = vector.broadcast %cst_154 : f32 to vector<32x1xf32>
    %495 = vector.broadcast %cst_155 : f32 to vector<32x1xf32>
    %496 = arith.select %477, %494, %495 : vector<32x1xi1>, vector<32x1xf32>
    %cst_156 = arith.constant dense<0.000000e+00> : vector<1xf32>
    %497 = vector.multi_reduction <add>, %496, %cst_156 [0] : vector<32x1xf32> to vector<1xf32>
    %498 = vector.shape_cast %497 : vector<1xf32> to vector<1x1xf32>
    %499 = arith.cmpi eq, %493, %475 : vector<32x1xi32>
    %500 = arith.andi %477, %499 : vector<32x1xi1>
    %cst_157 = arith.constant 1.000000e+00 : f32
    %cst_158 = arith.constant 0.000000e+00 : f32
    %501 = vector.broadcast %cst_157 : f32 to vector<32x1xf32>
    %502 = vector.broadcast %cst_158 : f32 to vector<32x1xf32>
    %503 = arith.select %500, %501, %502 : vector<32x1xi1>, vector<32x1xf32>
    %cst_159 = arith.constant dense<0.000000e+00> : vector<1xf32>
    %504 = vector.multi_reduction <add>, %503, %cst_159 [0] : vector<32x1xf32> to vector<1xf32>
    %505 = vector.shape_cast %504 : vector<1xf32> to vector<1x1xf32>
    %cst_160 = arith.constant 0.000000e+00 : f32
    %506 = vector.broadcast %cst_160 : f32 to vector<32x1xf32>
    %507 = arith.select %477, %485, %506 : vector<32x1xi1>, vector<32x1xf32>
    %cst_161 = arith.constant dense<0.000000e+00> : vector<1xf32>
    %508 = vector.multi_reduction <add>, %507, %cst_161 [0] : vector<32x1xf32> to vector<1xf32>
    %509 = vector.shape_cast %508 : vector<1xf32> to vector<1x1xf32>
    %cst_162 = arith.constant 1.000000e+00 : f32
    %510 = vector.broadcast %cst_162 : f32 to vector<1x1xf32>
    %511 = arith.maximumf %498, %510 : vector<1x1xf32>
    %512 = arith.divf %509, %511 : vector<1x1xf32>
    %c0_i32_163 = arith.constant 0 : i32
    %513 = vector.broadcast %c0_i32_163 : i32 to vector<1x128xi32>
    %514 = arith.cmpi eq, %415, %513 : vector<1x128xi32>
    %cst_164 = arith.constant 0.000000e+00 : f32
    %515 = vector.shape_cast %512 : vector<1x1xf32> to vector<1x1xf32>
    %516 = vector.broadcast %515 : vector<1x1xf32> to vector<1x128xf32>
    %517 = vector.broadcast %cst_164 : f32 to vector<1x128xf32>
    %518 = arith.select %514, %516, %517 : vector<1x128xi1>, vector<1x128xf32>
    %c1_i32_165 = arith.constant 1 : i32
    %519 = vector.broadcast %c1_i32_165 : i32 to vector<1x128xi32>
    %520 = arith.cmpi eq, %415, %519 : vector<1x128xi32>
    %cst_166 = arith.constant 0.000000e+00 : f32
    %521 = vector.shape_cast %505 : vector<1x1xf32> to vector<1x1xf32>
    %522 = vector.broadcast %521 : vector<1x1xf32> to vector<1x128xf32>
    %523 = vector.broadcast %cst_166 : f32 to vector<1x128xf32>
    %524 = arith.select %520, %522, %523 : vector<1x128xi1>, vector<1x128xf32>
    %525 = arith.addf %518, %524 : vector<1x128xf32>
    %c2_i32_167 = arith.constant 2 : i32
    %526 = vector.broadcast %c2_i32_167 : i32 to vector<1x128xi32>
    %527 = arith.cmpi eq, %415, %526 : vector<1x128xi32>
    %cst_168 = arith.constant 0.000000e+00 : f32
    %528 = vector.shape_cast %498 : vector<1x1xf32> to vector<1x1xf32>
    %529 = vector.broadcast %528 : vector<1x1xf32> to vector<1x128xf32>
    %530 = vector.broadcast %cst_168 : f32 to vector<1x128xf32>
    %531 = arith.select %527, %529, %530 : vector<1x128xi1>, vector<1x128xf32>
    %532 = arith.addf %525, %531 : vector<1x128xf32>
    %c1_169 = arith.constant 1 : index
    %c0_170 = arith.constant 0 : index
    %533 = vector.load %arg14[%c1_169, %c0_170] : memref<4x128xf32, #tpu.memory_space<vmem>>, vector<1x128xf32>
    tpu.vector_store %arg14[%c1_169, %c0_170], %532 {strides = array<i32>} : memref<4x128xf32, #tpu.memory_space<vmem>>, vector<1x128xf32>,
    %534 = vector.extract_strided_slice %413 {offsets = [0, 1], sizes = [32, 1], strides = [1, 1]} : vector<32x3xi32> to vector<32x1xi32>
    %c0_i32_171 = arith.constant 0 : i32
    %535 = vector.broadcast %c0_i32_171 : i32 to vector<32x1xi32>
    %536 = arith.cmpi sge, %534, %535 : vector<32x1xi32>
    %537 = vector.broadcast %534 : vector<32x1xi32> to vector<32x128xi32>
    %538 = arith.cmpi eq, %414, %537 : vector<32x128xi32>
    %cst_172 = arith.constant 0.000000e+00 : f32
    %539 = vector.broadcast %cst_172 : f32 to vector<32x128xf32>
    %540 = arith.select %538, %395, %539 : vector<32x128xi1>, vector<32x128xf32>
    %cst_173 = arith.constant dense<0.000000e+00> : vector<32xf32>
    %541 = vector.multi_reduction <add>, %540, %cst_173 [1] : vector<32x128xf32> to vector<32xf32>
    %542 = vector.shape_cast %541 : vector<32xf32> to vector<32x1xf32>
    %cst_174 = arith.constant 0.000000e+00 : f32
    %543 = vector.broadcast %cst_174 : f32 to vector<32x1xf32>
    %544 = arith.subf %543, %542 : vector<32x1xf32>
    %cst_175 = arith.constant dense<0xFF800000> : vector<32xf32>
    %545 = vector.multi_reduction <maximumf>, %395, %cst_175 [1] : vector<32x128xf32> to vector<32xf32>
    %546 = vector.shape_cast %545 : vector<32xf32> to vector<32x1xf32>
    %547 = vector.broadcast %546 : vector<32x1xf32> to vector<32x128xf32>
    %548 = arith.cmpf oge, %395, %547 : vector<32x128xf32>
    %c128_i32_176 = arith.constant 128 : i32
    %549 = vector.broadcast %c128_i32_176 : i32 to vector<32x128xi32>
    %550 = arith.select %548, %414, %549 : vector<32x128xi1>, vector<32x128xi32>
    %cst_177 = arith.constant dense<2147483647> : vector<32xi32>
    %551 = vector.multi_reduction <minsi>, %550, %cst_177 [1] : vector<32x128xi32> to vector<32xi32>
    %552 = vector.shape_cast %551 : vector<32xi32> to vector<32x1xi32>
    %cst_178 = arith.constant 1.000000e+00 : f32
    %cst_179 = arith.constant 0.000000e+00 : f32
    %553 = vector.broadcast %cst_178 : f32 to vector<32x1xf32>
    %554 = vector.broadcast %cst_179 : f32 to vector<32x1xf32>
    %555 = arith.select %536, %553, %554 : vector<32x1xi1>, vector<32x1xf32>
    %cst_180 = arith.constant dense<0.000000e+00> : vector<1xf32>
    %556 = vector.multi_reduction <add>, %555, %cst_180 [0] : vector<32x1xf32> to vector<1xf32>
    %557 = vector.shape_cast %556 : vector<1xf32> to vector<1x1xf32>
    %558 = arith.cmpi eq, %552, %534 : vector<32x1xi32>
    %559 = arith.andi %536, %558 : vector<32x1xi1>
    %cst_181 = arith.constant 1.000000e+00 : f32
    %cst_182 = arith.constant 0.000000e+00 : f32
    %560 = vector.broadcast %cst_181 : f32 to vector<32x1xf32>
    %561 = vector.broadcast %cst_182 : f32 to vector<32x1xf32>
    %562 = arith.select %559, %560, %561 : vector<32x1xi1>, vector<32x1xf32>
    %cst_183 = arith.constant dense<0.000000e+00> : vector<1xf32>
    %563 = vector.multi_reduction <add>, %562, %cst_183 [0] : vector<32x1xf32> to vector<1xf32>
    %564 = vector.shape_cast %563 : vector<1xf32> to vector<1x1xf32>
    %cst_184 = arith.constant 0.000000e+00 : f32
    %565 = vector.broadcast %cst_184 : f32 to vector<32x1xf32>
    %566 = arith.select %536, %544, %565 : vector<32x1xi1>, vector<32x1xf32>
    %cst_185 = arith.constant dense<0.000000e+00> : vector<1xf32>
    %567 = vector.multi_reduction <add>, %566, %cst_185 [0] : vector<32x1xf32> to vector<1xf32>
    %568 = vector.shape_cast %567 : vector<1xf32> to vector<1x1xf32>
    %cst_186 = arith.constant 1.000000e+00 : f32
    %569 = vector.broadcast %cst_186 : f32 to vector<1x1xf32>
    %570 = arith.maximumf %557, %569 : vector<1x1xf32>
    %571 = arith.divf %568, %570 : vector<1x1xf32>
    %c0_i32_187 = arith.constant 0 : i32
    %572 = vector.broadcast %c0_i32_187 : i32 to vector<1x128xi32>
    %573 = arith.cmpi eq, %415, %572 : vector<1x128xi32>
    %cst_188 = arith.constant 0.000000e+00 : f32
    %574 = vector.shape_cast %571 : vector<1x1xf32> to vector<1x1xf32>
    %575 = vector.broadcast %574 : vector<1x1xf32> to vector<1x128xf32>
    %576 = vector.broadcast %cst_188 : f32 to vector<1x128xf32>
    %577 = arith.select %573, %575, %576 : vector<1x128xi1>, vector<1x128xf32>
    %c1_i32_189 = arith.constant 1 : i32
    %578 = vector.broadcast %c1_i32_189 : i32 to vector<1x128xi32>
    %579 = arith.cmpi eq, %415, %578 : vector<1x128xi32>
    %cst_190 = arith.constant 0.000000e+00 : f32
    %580 = vector.shape_cast %564 : vector<1x1xf32> to vector<1x1xf32>
    %581 = vector.broadcast %580 : vector<1x1xf32> to vector<1x128xf32>
    %582 = vector.broadcast %cst_190 : f32 to vector<1x128xf32>
    %583 = arith.select %579, %581, %582 : vector<1x128xi1>, vector<1x128xf32>
    %584 = arith.addf %577, %583 : vector<1x128xf32>
    %c2_i32_191 = arith.constant 2 : i32
    %585 = vector.broadcast %c2_i32_191 : i32 to vector<1x128xi32>
    %586 = arith.cmpi eq, %415, %585 : vector<1x128xi32>
    %cst_192 = arith.constant 0.000000e+00 : f32
    %587 = vector.shape_cast %557 : vector<1x1xf32> to vector<1x1xf32>
    %588 = vector.broadcast %587 : vector<1x1xf32> to vector<1x128xf32>
    %589 = vector.broadcast %cst_192 : f32 to vector<1x128xf32>
    %590 = arith.select %586, %588, %589 : vector<1x128xi1>, vector<1x128xf32>
    %591 = arith.addf %584, %590 : vector<1x128xf32>
    %c2_193 = arith.constant 2 : index
    %c0_194 = arith.constant 0 : index
    %592 = vector.load %arg14[%c2_193, %c0_194] : memref<4x128xf32, #tpu.memory_space<vmem>>, vector<1x128xf32>
    tpu.vector_store %arg14[%c2_193, %c0_194], %591 {strides = array<i32>} : memref<4x128xf32, #tpu.memory_space<vmem>>, vector<1x128xf32>,
    %593 = vector.extract_strided_slice %413 {offsets = [0, 2], sizes = [32, 1], strides = [1, 1]} : vector<32x3xi32> to vector<32x1xi32>
    %c0_i32_195 = arith.constant 0 : i32
    %594 = vector.broadcast %c0_i32_195 : i32 to vector<32x1xi32>
    %595 = arith.cmpi sge, %593, %594 : vector<32x1xi32>
    %596 = vector.broadcast %593 : vector<32x1xi32> to vector<32x128xi32>
    %597 = arith.cmpi eq, %414, %596 : vector<32x128xi32>
    %cst_196 = arith.constant 0.000000e+00 : f32
    %598 = vector.broadcast %cst_196 : f32 to vector<32x128xf32>
    %599 = arith.select %597, %412, %598 : vector<32x128xi1>, vector<32x128xf32>
    %cst_197 = arith.constant dense<0.000000e+00> : vector<32xf32>
    %600 = vector.multi_reduction <add>, %599, %cst_197 [1] : vector<32x128xf32> to vector<32xf32>
    %601 = vector.shape_cast %600 : vector<32xf32> to vector<32x1xf32>
    %cst_198 = arith.constant 0.000000e+00 : f32
    %602 = vector.broadcast %cst_198 : f32 to vector<32x1xf32>
    %603 = arith.subf %602, %601 : vector<32x1xf32>
    %cst_199 = arith.constant dense<0xFF800000> : vector<32xf32>
    %604 = vector.multi_reduction <maximumf>, %412, %cst_199 [1] : vector<32x128xf32> to vector<32xf32>
    %605 = vector.shape_cast %604 : vector<32xf32> to vector<32x1xf32>
    %606 = vector.broadcast %605 : vector<32x1xf32> to vector<32x128xf32>
    %607 = arith.cmpf oge, %412, %606 : vector<32x128xf32>
    %c128_i32_200 = arith.constant 128 : i32
    %608 = vector.broadcast %c128_i32_200 : i32 to vector<32x128xi32>
    %609 = arith.select %607, %414, %608 : vector<32x128xi1>, vector<32x128xi32>
    %cst_201 = arith.constant dense<2147483647> : vector<32xi32>
    %610 = vector.multi_reduction <minsi>, %609, %cst_201 [1] : vector<32x128xi32> to vector<32xi32>
    %611 = vector.shape_cast %610 : vector<32xi32> to vector<32x1xi32>
    %cst_202 = arith.constant 1.000000e+00 : f32
    %cst_203 = arith.constant 0.000000e+00 : f32
    %612 = vector.broadcast %cst_202 : f32 to vector<32x1xf32>
    %613 = vector.broadcast %cst_203 : f32 to vector<32x1xf32>
    %614 = arith.select %595, %612, %613 : vector<32x1xi1>, vector<32x1xf32>
    %cst_204 = arith.constant dense<0.000000e+00> : vector<1xf32>
    %615 = vector.multi_reduction <add>, %614, %cst_204 [0] : vector<32x1xf32> to vector<1xf32>
    %616 = vector.shape_cast %615 : vector<1xf32> to vector<1x1xf32>
    %617 = arith.cmpi eq, %611, %593 : vector<32x1xi32>
    %618 = arith.andi %595, %617 : vector<32x1xi1>
    %cst_205 = arith.constant 1.000000e+00 : f32
    %cst_206 = arith.constant 0.000000e+00 : f32
    %619 = vector.broadcast %cst_205 : f32 to vector<32x1xf32>
    %620 = vector.broadcast %cst_206 : f32 to vector<32x1xf32>
    %621 = arith.select %618, %619, %620 : vector<32x1xi1>, vector<32x1xf32>
    %cst_207 = arith.constant dense<0.000000e+00> : vector<1xf32>
    %622 = vector.multi_reduction <add>, %621, %cst_207 [0] : vector<32x1xf32> to vector<1xf32>
    %623 = vector.shape_cast %622 : vector<1xf32> to vector<1x1xf32>
    %cst_208 = arith.constant 0.000000e+00 : f32
    %624 = vector.broadcast %cst_208 : f32 to vector<32x1xf32>
    %625 = arith.select %595, %603, %624 : vector<32x1xi1>, vector<32x1xf32>
    %cst_209 = arith.constant dense<0.000000e+00> : vector<1xf32>
    %626 = vector.multi_reduction <add>, %625, %cst_209 [0] : vector<32x1xf32> to vector<1xf32>
    %627 = vector.shape_cast %626 : vector<1xf32> to vector<1x1xf32>
    %cst_210 = arith.constant 1.000000e+00 : f32
    %628 = vector.broadcast %cst_210 : f32 to vector<1x1xf32>
    %629 = arith.maximumf %616, %628 : vector<1x1xf32>
    %630 = arith.divf %627, %629 : vector<1x1xf32>
    %c0_i32_211 = arith.constant 0 : i32
    %631 = vector.broadcast %c0_i32_211 : i32 to vector<1x128xi32>
    %632 = arith.cmpi eq, %415, %631 : vector<1x128xi32>
    %cst_212 = arith.constant 0.000000e+00 : f32
    %633 = vector.shape_cast %630 : vector<1x1xf32> to vector<1x1xf32>
    %634 = vector.broadcast %633 : vector<1x1xf32> to vector<1x128xf32>
    %635 = vector.broadcast %cst_212 : f32 to vector<1x128xf32>
    %636 = arith.select %632, %634, %635 : vector<1x128xi1>, vector<1x128xf32>
    %c1_i32_213 = arith.constant 1 : i32
    %637 = vector.broadcast %c1_i32_213 : i32 to vector<1x128xi32>
    %638 = arith.cmpi eq, %415, %637 : vector<1x128xi32>
    %cst_214 = arith.constant 0.000000e+00 : f32
    %639 = vector.shape_cast %623 : vector<1x1xf32> to vector<1x1xf32>
    %640 = vector.broadcast %639 : vector<1x1xf32> to vector<1x128xf32>
    %641 = vector.broadcast %cst_214 : f32 to vector<1x128xf32>
    %642 = arith.select %638, %640, %641 : vector<1x128xi1>, vector<1x128xf32>
    %643 = arith.addf %636, %642 : vector<1x128xf32>
    %c2_i32_215 = arith.constant 2 : i32
    %644 = vector.broadcast %c2_i32_215 : i32 to vector<1x128xi32>
    %645 = arith.cmpi eq, %415, %644 : vector<1x128xi32>
    %cst_216 = arith.constant 0.000000e+00 : f32
    %646 = vector.shape_cast %616 : vector<1x1xf32> to vector<1x1xf32>
    %647 = vector.broadcast %646 : vector<1x1xf32> to vector<1x128xf32>
    %648 = vector.broadcast %cst_216 : f32 to vector<1x128xf32>
    %649 = arith.select %645, %647, %648 : vector<1x128xi1>, vector<1x128xf32>
    %650 = arith.addf %643, %649 : vector<1x128xf32>
    %c3_217 = arith.constant 3 : index
    %c0_218 = arith.constant 0 : index
    %651 = vector.load %arg14[%c3_217, %c0_218] : memref<4x128xf32, #tpu.memory_space<vmem>>, vector<1x128xf32>
    tpu.vector_store %arg14[%c3_217, %c0_218], %650 {strides = array<i32>} : memref<4x128xf32, #tpu.memory_space<vmem>>, vector<1x128xf32>,
    return
  }
  func.func @transform_0(%arg0: i32) -> (i32, i32) {
    %c0_i32 = arith.constant 0 : i32
    %c0_i32_0 = arith.constant 0 : i32
    %c0_i32_1 = arith.constant 0 : i32
    return %c0_i32, %c0_i32_0 : i32, i32
  }
  func.func @transform_1(%arg0: i32) -> (i32, i32) {
    %c0_i32 = arith.constant 0 : i32
    %c0_i32_0 = arith.constant 0 : i32
    %c0_i32_1 = arith.constant 0 : i32
    return %c0_i32, %c0_i32_0 : i32, i32
  }
  func.func @transform_2(%arg0: i32) -> (i32, i32) {
    %c0_i32 = arith.constant 0 : i32
    %c0_i32_0 = arith.constant 0 : i32
    %c0_i32_1 = arith.constant 0 : i32
    return %c0_i32, %c0_i32_0 : i32, i32
  }
  func.func @transform_3(%arg0: i32) -> (i32, i32) {
    %c0_i32 = arith.constant 0 : i32
    %c0_i32_0 = arith.constant 0 : i32
    %c0_i32_1 = arith.constant 0 : i32
    return %c0_i32, %c0_i32_0 : i32, i32
  }
  func.func @transform_4(%arg0: i32) -> (i32, i32, i32) {
    %c0_i32 = arith.constant 0 : i32
    %c0_i32_0 = arith.constant 0 : i32
    %c0_i32_1 = arith.constant 0 : i32
    %c0_i32_2 = arith.constant 0 : i32
    return %c0_i32, %c0_i32_0, %c0_i32_1 : i32, i32, i32
  }
  func.func @transform_5(%arg0: i32) -> (i32, i32, i32) {
    %c0_i32 = arith.constant 0 : i32
    %c0_i32_0 = arith.constant 0 : i32
    %c0_i32_1 = arith.constant 0 : i32
    %c0_i32_2 = arith.constant 0 : i32
    return %c0_i32, %c0_i32_0, %c0_i32_1 : i32, i32, i32
  }
  func.func @transform_6(%arg0: i32) -> (i32, i32, i32) {
    %c0_i32 = arith.constant 0 : i32
    %c0_i32_0 = arith.constant 0 : i32
    %c0_i32_1 = arith.constant 0 : i32
    %c0_i32_2 = arith.constant 0 : i32
    return %c0_i32, %c0_i32_0, %c0_i32_1 : i32, i32, i32
  }
  func.func @transform_7(%arg0: i32) -> (i32, i32, i32) {
    %c0_i32 = arith.constant 0 : i32
    %c0_i32_0 = arith.constant 0 : i32
    %c0_i32_1 = arith.constant 0 : i32
    %c0_i32_2 = arith.constant 0 : i32
    return %c0_i32, %c0_i32_0, %c0_i32_1 : i32, i32, i32
  }
  func.func @transform_8(%arg0: i32) -> (i32, i32, i32) {
    %c0_i32 = arith.constant 0 : i32
    %c0_i32_0 = arith.constant 0 : i32
    %c0_i32_1 = arith.constant 0 : i32
    %c0_i32_2 = arith.constant 0 : i32
    return %c0_i32, %c0_i32_0, %c0_i32_1 : i32, i32, i32
  }
  func.func @transform_9(%arg0: i32) -> (i32, i32) {
    %c0_i32 = arith.constant 0 : i32
    %c0_i32_0 = arith.constant 0 : i32
    %c0_i32_1 = arith.constant 0 : i32
    return %c0_i32, %c0_i32_0 : i32, i32
  }
  func.func @transform_10(%arg0: i32) -> (i32, i32) {
    %c0_i32 = arith.constant 0 : i32
    %c0_i32_0 = arith.constant 0 : i32
    %c0_i32_1 = arith.constant 0 : i32
    return %c0_i32, %c0_i32_0 : i32, i32
  }
  func.func @transform_11(%arg0: i32) -> (i32, i32, i32) {
    %c0_i32 = arith.constant 0 : i32
    %c0_i32_0 = arith.constant 0 : i32
    %c0_i32_1 = arith.constant 0 : i32
    %c0_i32_2 = arith.constant 0 : i32
    return %c0_i32, %c0_i32_0, %c0_i32_1 : i32, i32, i32
  }
  func.func @transform_12(%arg0: i32) -> (i32, i32) {
    %c0_i32 = arith.constant 0 : i32
    %c0_i32_0 = arith.constant 0 : i32
    %c0_i32_1 = arith.constant 0 : i32
    return %c0_i32, %c0_i32_0 : i32, i32
  }
  func.func @transform_13(%arg0: i32) -> (i32, i32) {
    %c0_i32 = arith.constant 0 : i32
    %c0_i32_0 = arith.constant 0 : i32
    %c0_i32_1 = arith.constant 0 : i32
    return %c0_i32, %c0_i32_0 : i32, i32
  }
}

</mosaic_0001>

<llo_original>
// kernel: neg.5
$region0: #{neg.5}
  #allocation0 [shape = 's32[1]{0}', space=sflag, size = 0x4, scoped, tag = 'scoped memory for neg.5']
  %s0 = inlined_call_operand.vmem [shape: s32[32], index: 0, kind: input, shape index: {}]
  %s1 = inlined_call_operand.vmem [shape: s32[32], index: 1, kind: output, shape index: {}]
  %v2 = vld [vmem:[%s0] sm:$0x1]
  %3 = xla_tuple %v2
  %4 = xla_tuple %3
  %v5 = vsub.s32 0, %v2
  %6 = xla_tuple %v5
  %7 = vst [vmem:[%s1] sm:$0x1] %v5

// kernel: tuta_forward.1
$region0: #{tuta_forward.1}
  #allocation0 [shape = 'u32[]', space=smem, size = 0x4, offset = 0x4, fixed_abs, tag = 'smem constant byte address 0x4 - core index']
  #allocation1 [shape = 'u32[144,128]{1,0:T(1,128)}', space=vmem, size = 0x12000, scoped, tag = 'internal scratch']
  %s0 = inlined_call_operand.vmem [shape: f32[32,64], index: 0, kind: input, shape index: {}]
  %s1 = inlined_call_operand.vmem [shape: f32[128,128], index: 1, kind: input, shape index: {}]
  %s2 = inlined_call_operand.vmem [shape: f32[32,32], index: 2, kind: input, shape index: {}]
  %s3 = inlined_call_operand.vmem [shape: s32[32,3], index: 3, kind: input, shape index: {}]
  %s4 = inlined_call_operand.vmem [shape: bf16[2,64,192], index: 4, kind: input, shape index: {}]
  %s5 = inlined_call_operand.vmem [shape: bf16[2,64,64], index: 5, kind: input, shape index: {}]
  %s6 = inlined_call_operand.vmem [shape: bf16[2,64,256], index: 6, kind: input, shape index: {}]
  %s7 = inlined_call_operand.vmem [shape: bf16[2,256,64], index: 7, kind: input, shape index: {}]
  %s8 = inlined_call_operand.vmem [shape: f32[2,8,256], index: 8, kind: input, shape index: {}]
  %s9 = inlined_call_operand.vmem [shape: bf16[64,192], index: 9, kind: input, shape index: {}]
  %s10 = inlined_call_operand.vmem [shape: bf16[64,64], index: 10, kind: input, shape index: {}]
  %s11 = inlined_call_operand.vmem [shape: bf16[4,64,128], index: 11, kind: input, shape index: {}]
  %s12 = inlined_call_operand.vmem [shape: f32[8,256], index: 12, kind: input, shape index: {}]
  %s13 = inlined_call_operand.vmem [shape: f32[4,128], index: 13, kind: output, shape index: {}]
  %s14 = sld [smem:[#allocation0]]
  $region62: #{tuta_forward.1} parent=0
    _
  %s16 = ssub.s32 1, %s14
  %s17 = scalar_select 0, %s16, %s14
  // Predicated region
  $region2: #{tuta_forward.1} parent=0 // pred_check
    _
  $region3: #{tuta_forward.1} parent=0 // pred_check_branch
    %19 = sbr.rel (0) target = $region5
  $region4: #{tuta_forward.1} parent=0 // pred_region
    _
  $region5: #{tuta_forward.1} parent=0 // pred_fallthru
    _
  // Predicated region
  $region6: #{tuta_forward.1} parent=0 // pred_check
    _
  $region7: #{tuta_forward.1} parent=0 // pred_check_branch
    %21 = sbr.rel (0) target = $region9
  $region8: #{tuta_forward.1} parent=0 // pred_region
    _
  $region9: #{tuta_forward.1} parent=0 // pred_fallthru
    _
  // Predicated region
  $region10: #{tuta_forward.1} parent=0 // pred_check
    _
  $region11: #{tuta_forward.1} parent=0 // pred_check_branch
    %23 = sbr.rel (0) target = $region13
  $region12: #{tuta_forward.1} parent=0 // pred_region
    _
  $region13: #{tuta_forward.1} parent=0 // pred_fallthru
    _
  // Predicated region
  $region14: #{tuta_forward.1} parent=0 // pred_check
    _
  $region15: #{tuta_forward.1} parent=0 // pred_check_branch
    %25 = sbr.rel (0) target = $region17
  $region16: #{tuta_forward.1} parent=0 // pred_region
    _
  $region17: #{tuta_forward.1} parent=0 // pred_fallthru
    _
  // Predicated region
  $region18: #{tuta_forward.1} parent=0 // pred_check
    _
  $region19: #{tuta_forward.1} parent=0 // pred_check_branch
    %27 = sbr.rel (0) target = $region21
  $region20: #{tuta_forward.1} parent=0 // pred_region
    _
  $region21: #{tuta_forward.1} parent=0 // pred_fallthru
    _
  // Predicated region
  $region22: #{tuta_forward.1} parent=0 // pred_check
    _
  $region23: #{tuta_forward.1} parent=0 // pred_check_branch
    %29 = sbr.rel (0) target = $region25
  $region24: #{tuta_forward.1} parent=0 // pred_region
    _
  $region25: #{tuta_forward.1} parent=0 // pred_fallthru
    _
  // Predicated region
  $region26: #{tuta_forward.1} parent=0 // pred_check
    _
  $region27: #{tuta_forward.1} parent=0 // pred_check_branch
    %31 = sbr.rel (0) target = $region29
  $region28: #{tuta_forward.1} parent=0 // pred_region
    _
  $region29: #{tuta_forward.1} parent=0 // pred_fallthru
    _
  // Predicated region
  $region30: #{tuta_forward.1} parent=0 // pred_check
    _
  $region31: #{tuta_forward.1} parent=0 // pred_check_branch
    %33 = sbr.rel (0) target = $region33
  $region32: #{tuta_forward.1} parent=0 // pred_region
    _
  $region33: #{tuta_forward.1} parent=0 // pred_fallthru
    _
  // Predicated region
  $region34: #{tuta_forward.1} parent=0 // pred_check
    _
  $region35: #{tuta_forward.1} parent=0 // pred_check_branch
    %35 = sbr.rel (0) target = $region37
  $region36: #{tuta_forward.1} parent=0 // pred_region
    _
  $region37: #{tuta_forward.1} parent=0 // pred_fallthru
    _
  // Predicated region
  $region38: #{tuta_forward.1} parent=0 // pred_check
    _
  $region39: #{tuta_forward.1} parent=0 // pred_check_branch
    %37 = sbr.rel (0) target = $region41
  $region40: #{tuta_forward.1} parent=0 // pred_region
    _
  $region41: #{tuta_forward.1} parent=0 // pred_fallthru
    _
  // Predicated region
  $region42: #{tuta_forward.1} parent=0 // pred_check
    _
  $region43: #{tuta_forward.1} parent=0 // pred_check_branch
    %39 = sbr.rel (0) target = $region45
  $region44: #{tuta_forward.1} parent=0 // pred_region
    _
  $region45: #{tuta_forward.1} parent=0 // pred_fallthru
    _
  // Predicated region
  $region46: #{tuta_forward.1} parent=0 // pred_check
    _
  $region47: #{tuta_forward.1} parent=0 // pred_check_branch
    %41 = sbr.rel (0) target = $region49
  $region48: #{tuta_forward.1} parent=0 // pred_region
    _
  $region49: #{tuta_forward.1} parent=0 // pred_fallthru
    _
  // Predicated region
  $region50: #{tuta_forward.1} parent=0 // pred_check
    _
  $region51: #{tuta_forward.1} parent=0 // pred_check_branch
    %43 = sbr.rel (0) target = $region53
  $region52: #{tuta_forward.1} parent=0 // pred_region
    _
  $region53: #{tuta_forward.1} parent=0 // pred_fallthru
    _
  %v45 = vld [vmem:[%s0] sm:$0xff]
  %v46 = vld [vmem:[%s0 + $0x8] sm:$0xff]
  %v47 = vld [vmem:[%s0 + $0x10] sm:$0xff]
  %v48 = vld [vmem:[%s0 + $0x18] sm:$0xff]
  %v49 = vld [vmem:[%s1] sm:$0xff]
  %v50 = vld [vmem:[%s1 + $0x8] sm:$0xff]
  %v51 = vld [vmem:[%s1 + $0x10] sm:$0xff]
  %v52 = vld [vmem:[%s1 + $0x18] sm:$0xff]
  %v53 = vld [vmem:[%s1 + $0x20] sm:$0xff]
  %v54 = vld [vmem:[%s1 + $0x28] sm:$0xff]
  %v55 = vld [vmem:[%s1 + $0x30] sm:$0xff]
  %v56 = vld [vmem:[%s1 + $0x38] sm:$0xff]
  %v57 = vld [vmem:[%s1 + $0x40] sm:$0xff]
  %v58 = vld [vmem:[%s1 + $0x48] sm:$0xff]
  %v59 = vld [vmem:[%s1 + $0x50] sm:$0xff]
  %v60 = vld [vmem:[%s1 + $0x58] sm:$0xff]
  %v61 = vld [vmem:[%s1 + $0x60] sm:$0xff]
  %v62 = vld [vmem:[%s1 + $0x68] sm:$0xff]
  %v63 = vld [vmem:[%s1 + $0x70] sm:$0xff]
  %v64 = vld [vmem:[%s1 + $0x78] sm:$0xff]
  %v65 = vld [vmem:[%s8] sm:$0xff]
  %v66 = vld [vmem:[%s8 + $0x8] sm:$0xff]
  %v67 = vpack.c.bf16 %v46, %v45
  %v68 = vpack.c.bf16 %v48, %v47
  %v69 = vld [vmem:[%s4] sm:$0xff]
  %v70 = vld [vmem:[%s4 + $0x8] sm:$0xff]
  %v71 = vld [vmem:[%s4 + $0x10] sm:$0xff]
  %v72 = vld [vmem:[%s4 + $0x18] sm:$0xff]
  %v73 = vld [vmem:[%s4 + $0x20] sm:$0xff]
  %v74 = vld [vmem:[%s4 + $0x28] sm:$0xff]
  %v75 = vld [vmem:[%s4 + $0x30] sm:$0xff]
  %v76 = vld [vmem:[%s4 + $0x38] sm:$0xff]
  %v77 = vlaneseq
  %v78 = vshrl.u32 %v77, 7
  %v79 = vsub.s32 0, %v78
  %v80 = vrot.slane %v65, %v79
  %v81 = vlaneseq
  %v82 = vshrl.u32 %v81, 7
  %v83 = vsub.s32 0, %v82
  %v84 = vrot.slane %v66, %v83
  %v93 = vunpack.c.l.b16 %v69
  %v94 = vunpack.c.h.b16 %v69
  %v95 = vunpack.c.l.b16 %v70
  %v96 = vunpack.c.h.b16 %v70
  %v97 = vunpack.c.l.b16 %v71
  %v98 = vunpack.c.h.b16 %v71
  %v99 = vunpack.c.l.b16 %v72
  %v100 = vunpack.c.h.b16 %v72
  %v101 = vunpack.c.l.b16 %v73
  %v102 = vunpack.c.h.b16 %v73
  %v103 = vunpack.c.l.b16 %v74
  %v104 = vunpack.c.h.b16 %v74
  %v105 = vunpack.c.l.b16 %v75
  %v106 = vunpack.c.h.b16 %v75
  %v107 = vunpack.c.l.b16 %v76
  %v108 = vunpack.c.h.b16 %v76
  %v109 = vpack.c.b16 %v95, %v93
  %v110 = vpack.c.b16 %v96, %v94
  %v111 = vpack.c.b16 %v99, %v97
  %v112 = vpack.c.b16 %v100, %v98
  %v113 = vpack.c.b16 %v103, %v101
  %v114 = vpack.c.b16 %v104, %v102
  %v115 = vpack.c.b16 %v107, %v105
  %v116 = vpack.c.b16 %v108, %v106
  %vm125 = vcmask 523264
  %v127 = vsel %vm125, %v67, 0
  %v130 = vsel %vm125, %v68, 0
  %132 = vmatprep.subr.bf16.mxu0 %v110
  %133 = vmatpush1.bf16.msra.mxu0 %v109
  %134 = vmatprep.subr.bf16.mxu0 %v112
  %135 = vmatpush1.bf16.msra.mxu0 %v111
  %136 = vmatprep.subr.bf16.mxu0 %v114
  %137 = vmatpush1.bf16.msra.mxu0 %v113
  %138 = vmatprep.subr.bf16.mxu0 %v116
  %139 = vmatpush1.bf16.msra.mxu0 %v115
  %140 = vmatprep.subr.bf16.mxu0 0
  %141 = vmatpush1.bf16.msra.mxu0 0
  %142 = vmatprep.subr.bf16.mxu0 0
  %143 = vmatpush1.bf16.msra.mxu0 0
  %144 = vmatprep.subr.bf16.mxu0 0
  %145 = vmatpush1.bf16.msra.mxu0 0
  %146 = vmatprep.subr.bf16.mxu0 0
  %147 = vmatpush1.bf16.msra.mxu0 0
  %148 = vmatprep.subr.bf16.mxu0 0
  %149 = vmatpush1.bf16.msra.mxu0 0
  %150 = vmatprep.subr.bf16.mxu0 0
  %151 = vmatpush1.bf16.msra.mxu0 0
  %152 = vmatprep.subr.bf16.mxu0 0
  %153 = vmatpush1.bf16.msra.mxu0 0
  %154 = vmatprep.subr.bf16.mxu0 0
  %155 = vmatpush1.bf16.msra.mxu0 0
  %156 = vmatprep.subr.bf16.mxu0 0
  %157 = vmatpush1.bf16.msra.mxu0 0
  %158 = vmatprep.subr.bf16.mxu0 0
  %159 = vmatpush1.bf16.msra.mxu0 0
  %160 = vmatprep.subr.bf16.mxu0 0
  %161 = vmatpush1.bf16.msra.mxu0 0
  %162 = vmatprep.subr.bf16.mxu0 0
  %163 = vmatpush1.bf16.msra.mxu0 0
  %164 = vmatprep.mubr.bf16.mxu0 0
  %165 = vmatmul.mubr.bf16.gmra.mrb[0].mxu0 %v127
  %v166 = vpop.f32.mrb[0].mxu0
  %v167 = vadd.f32 %v80, %v166
  %v168 = vpop.f32.mrb[0].mxu0
  %v169 = vadd.f32 %v84, %v168
  %v170 = vpop.f32.mrb[0].mxu0
  %v171 = vadd.f32 %v80, %v170
  %v172 = vpop.f32.mrb[0].mxu0
  %v173 = vadd.f32 %v84, %v172
  %174 = vmatprep.mubr.bf16.mxu0 0
  %175 = vmatmul.mubr.bf16.gmra.mrb[0].mxu0 %v130
  %v176 = vpop.f32.mrb[0].mxu0
  %v177 = vadd.f32 %v80, %v176
  %v178 = vpop.f32.mrb[0].mxu0
  %v179 = vadd.f32 %v84, %v178
  %v180 = vpop.f32.mrb[0].mxu0
  %v181 = vadd.f32 %v80, %v180
  %v182 = vpop.f32.mrb[0].mxu0
  %v183 = vadd.f32 %v84, %v182
  %184 = vdwg.mxu0
  %189 = vrot.lane.b32.xlu0 %v167, 112
  %v190 = vpop.permute.xlu0 %189
  %191 = vrot.lane.b32.xlu0 %v171, 112
  %v192 = vpop.permute.xlu0 %191
  %193 = vrot.lane.b32.xlu0 %v177, 112
  %v194 = vpop.permute.xlu0 %193
  %195 = vrot.lane.b32.xlu0 %v181, 112
  %v196 = vpop.permute.xlu0 %195
  %201 = vrot.lane.b32.xlu0 %v167, 96
  %v202 = vpop.permute.xlu0 %201
  %203 = vrot.lane.b32.xlu0 %v171, 96
  %v204 = vpop.permute.xlu0 %203
  %205 = vrot.lane.b32.xlu0 %v177, 96
  %v206 = vpop.permute.xlu0 %205
  %207 = vrot.lane.b32.xlu0 %v181, 96
  %v208 = vpop.permute.xlu0 %207
  %213 = vrot.lane.b32.xlu0 %v167, 80
  %v214 = vpop.permute.xlu0 %213
  %215 = vrot.lane.b32.xlu0 %v171, 80
  %v216 = vpop.permute.xlu0 %215
  %217 = vrot.lane.b32.xlu0 %v177, 80
  %v218 = vpop.permute.xlu0 %217
  %219 = vrot.lane.b32.xlu0 %v181, 80
  %v220 = vpop.permute.xlu0 %219
  %v225 = vpack.c.bf16 %v171, %v167
  %v226 = vpack.c.bf16 %v181, %v177
  %v227 = vpack.c.bf16 %v192, %v190
  %v228 = vpack.c.bf16 %v196, %v194
  %v229 = vpack.c.bf16 %v204, %v202
  %v230 = vpack.c.bf16 %v208, %v206
  %v231 = vpack.c.bf16 %v216, %v214
  %v232 = vpack.c.bf16 %v220, %v218
  %237 = vrot.lane.b32.xlu0 %v169, 112
  %v238 = vpop.permute.xlu0 %237
  %239 = vrot.lane.b32.xlu0 %v173, 112
  %v240 = vpop.permute.xlu0 %239
  %241 = vrot.lane.b32.xlu0 %v179, 112
  %v242 = vpop.permute.xlu0 %241
  %243 = vrot.lane.b32.xlu0 %v183, 112
  %v244 = vpop.permute.xlu0 %243
  %249 = vrot.lane.b32.xlu0 %v169, 96
  %v250 = vpop.permute.xlu0 %249
  %251 = vrot.lane.b32.xlu0 %v173, 96
  %v252 = vpop.permute.xlu0 %251
  %253 = vrot.lane.b32.xlu0 %v179, 96
  %v254 = vpop.permute.xlu0 %253
  %255 = vrot.lane.b32.xlu0 %v183, 96
  %v256 = vpop.permute.xlu0 %255
  %261 = vrot.lane.b32.xlu0 %v169, 80
  %v262 = vpop.permute.xlu0 %261
  %263 = vrot.lane.b32.xlu0 %v173, 80
  %v264 = vpop.permute.xlu0 %263
  %265 = vrot.lane.b32.xlu0 %v179, 80
  %v266 = vpop.permute.xlu0 %265
  %267 = vrot.lane.b32.xlu0 %v183, 80
  %v268 = vpop.permute.xlu0 %267
  %v273 = vpack.c.bf16 %v173, %v169
  %v274 = vpack.c.bf16 %v183, %v179
  %v275 = vpack.c.bf16 %v240, %v238
  %v276 = vpack.c.bf16 %v244, %v242
  %v277 = vpack.c.bf16 %v252, %v250
  %v278 = vpack.c.bf16 %v256, %v254
  %v279 = vpack.c.bf16 %v264, %v262
  %v280 = vpack.c.bf16 %v268, %v266
  %289 = vrot.lane.b32.xlu0 %v225, 64
  %v290 = vpop.permute.xlu0 %289
  %291 = vrot.lane.b32.xlu0 %v226, 64
  %v292 = vpop.permute.xlu0 %291
  %293 = vrot.lane.b32.xlu0 %v227, 64
  %v294 = vpop.permute.xlu0 %293
  %295 = vrot.lane.b32.xlu0 %v228, 64
  %v296 = vpop.permute.xlu0 %295
  %297 = vrot.lane.b32.xlu0 %v229, 64
  %v298 = vpop.permute.xlu0 %297
  %299 = vrot.lane.b32.xlu0 %v230, 64
  %v300 = vpop.permute.xlu0 %299
  %301 = vrot.lane.b32.xlu0 %v231, 64
  %v302 = vpop.permute.xlu0 %301
  %303 = vrot.lane.b32.xlu0 %v232, 64
  %v304 = vpop.permute.xlu0 %303
  %vm305 = vcmask 130048
  %v307 = vsel %vm305, %v225, 0
  %v310 = vsel %vm305, %v226, 0
  %v313 = vsel %vm305, %v227, 0
  %v316 = vsel %vm305, %v228, 0
  %v319 = vsel %vm305, %v229, 0
  %v322 = vsel %vm305, %v230, 0
  %v325 = vsel %vm305, %v231, 0
  %v328 = vsel %vm305, %v232, 0
  %v331 = vsel %vm305, %v290, 0
  %v334 = vsel %vm305, %v292, 0
  %v337 = vsel %vm305, %v294, 0
  %v340 = vsel %vm305, %v296, 0
  %v343 = vsel %vm305, %v298, 0
  %v346 = vsel %vm305, %v300, 0
  %v349 = vsel %vm305, %v302, 0
  %v352 = vsel %vm305, %v304, 0
  %354 = vmatprep.subr.bf16.mxu0 0
  %355 = vmatpush1.bf16.xpose.msra.mxu0 %v331
  %356 = vmatprep.subr.bf16.mxu0 0
  %357 = vmatpush1.bf16.xpose.msra.mxu0 %v334
  %358 = vmatprep.subr.bf16.mxu0 0
  %359 = vmatpush1.bf16.xpose.msra.mxu0 %v337
  %360 = vmatprep.subr.bf16.mxu0 0
  %361 = vmatpush1.bf16.xpose.msra.mxu0 %v340
  %362 = vmatprep.subr.bf16.mxu0 0
  %363 = vmatpush1.bf16.xpose.msra.mxu0 %v343
  %364 = vmatprep.subr.bf16.mxu0 0
  %365 = vmatpush1.bf16.xpose.msra.mxu0 %v346
  %366 = vmatprep.subr.bf16.mxu0 0
  %367 = vmatpush1.bf16.xpose.msra.mxu0 %v349
  %368 = vmatprep.subr.bf16.mxu0 0
  %369 = vmatpush1.bf16.xpose.msra.mxu0 %v352
  %370 = vmatprep.subr.bf16.mxu0 0
  %371 = vmatpush1.bf16.xpose.msra.mxu0 0
  %372 = vmatprep.subr.bf16.mxu0 0
  %373 = vmatpush1.bf16.xpose.msra.mxu0 0
  %374 = vmatprep.subr.bf16.mxu0 0
  %375 = vmatpush1.bf16.xpose.msra.mxu0 0
  %376 = vmatprep.subr.bf16.mxu0 0
  %377 = vmatpush1.bf16.xpose.msra.mxu0 0
  %378 = vmatprep.subr.bf16.mxu0 0
  %379 = vmatpush1.bf16.xpose.msra.mxu0 0
  %380 = vmatprep.subr.bf16.mxu0 0
  %381 = vmatpush1.bf16.xpose.msra.mxu0 0
  %382 = vmatprep.subr.bf16.mxu0 0
  %383 = vmatpush1.bf16.xpose.msra.mxu0 0
  %384 = vmatprep.subr.bf16.mxu0 0
  %385 = vmatpush1.bf16.xpose.msra.mxu0 0
  %386 = vmatprep.mubr.bf16.mxu0 0
  %387 = vmatmul.mubr.bf16.gmra.mrb[0].mxu0 %v307
  %v388 = vpop.f32.mrb[0].mxu0
  %v389 = vadd.f32 0.0, %v388
  %v390 = vpop.f32.mrb[0].mxu0
  %v391 = vpop.f32.mrb[0].mxu0
  %v392 = vadd.f32 0.0, %v391
  %v393 = vpop.f32.mrb[0].mxu0
  %394 = vmatprep.mubr.bf16.mxu0 0
  %395 = vmatmul.mubr.bf16.gmra.mrb[0].mxu0 %v310
  %v396 = vpop.f32.mrb[0].mxu0
  %v397 = vadd.f32 0.0, %v396
  %v398 = vpop.f32.mrb[0].mxu0
  %v399 = vpop.f32.mrb[0].mxu0
  %v400 = vadd.f32 0.0, %v399
  %v401 = vpop.f32.mrb[0].mxu0
  %402 = vmatprep.mubr.bf16.mxu0 0
  %403 = vmatmul.mubr.bf16.gmra.mrb[0].mxu0 %v313
  %v404 = vpop.f32.mrb[0].mxu0
  %v405 = vadd.f32 0.0, %v404
  %v406 = vpop.f32.mrb[0].mxu0
  %v407 = vpop.f32.mrb[0].mxu0
  %v408 = vadd.f32 0.0, %v407
  %v409 = vpop.f32.mrb[0].mxu0
  %410 = vmatprep.mubr.bf16.mxu0 0
  %411 = vmatmul.mubr.bf16.gmra.mrb[0].mxu0 %v316
  %v412 = vpop.f32.mrb[0].mxu0
  %v413 = vadd.f32 0.0, %v412
  %v414 = vpop.f32.mrb[0].mxu0
  %v415 = vpop.f32.mrb[0].mxu0
  %v416 = vadd.f32 0.0, %v415
  %v417 = vpop.f32.mrb[0].mxu0
  %418 = vmatprep.mubr.bf16.mxu0 0
  %419 = vmatmul.mubr.bf16.gmra.mrb[0].mxu0 %v319
  %v420 = vpop.f32.mrb[0].mxu0
  %v421 = vadd.f32 0.0, %v420
  %v422 = vpop.f32.mrb[0].mxu0
  %v423 = vpop.f32.mrb[0].mxu0
  %v424 = vadd.f32 0.0, %v423
  %v425 = vpop.f32.mrb[0].mxu0
  %426 = vmatprep.mubr.bf16.mxu0 0
  %427 = vmatmul.mubr.bf16.gmra.mrb[0].mxu0 %v322
  %v428 = vpop.f32.mrb[0].mxu0
  %v429 = vadd.f32 0.0, %v428
  %v430 = vpop.f32.mrb[0].mxu0
  %v431 = vpop.f32.mrb[0].mxu0
  %v432 = vadd.f32 0.0, %v431
  %v433 = vpop.f32.mrb[0].mxu0
  %434 = vmatprep.mubr.bf16.mxu0 0
  %435 = vmatmul.mubr.bf16.gmra.mrb[0].mxu0 %v325
  %v436 = vpop.f32.mrb[0].mxu0
  %v437 = vadd.f32 0.0, %v436
  %v438 = vpop.f32.mrb[0].mxu0
  %v439 = vpop.f32.mrb[0].mxu0
  %v440 = vadd.f32 0.0, %v439
  %v441 = vpop.f32.mrb[0].mxu0
  %442 = vmatprep.mubr.bf16.mxu0 0
  %443 = vmatmul.mubr.bf16.gmra.mrb[0].mxu0 %v328
  %v444 = vpop.f32.mrb[0].mxu0
  %v445 = vadd.f32 0.0, %v444
  %v446 = vpop.f32.mrb[0].mxu0
  %v447 = vpop.f32.mrb[0].mxu0
  %v448 = vadd.f32 0.0, %v447
  %v449 = vpop.f32.mrb[0].mxu0
  %450 = vdwg.mxu0
  %v451 = vmul.f32 %v389, 0.25
  %v452 = vmul.f32 %v392, 0.25
  %v453 = vmul.f32 %v397, 0.25
  %v454 = vmul.f32 %v400, 0.25
  %v455 = vmul.f32 %v405, 0.25
  %v456 = vmul.f32 %v408, 0.25
  %v457 = vmul.f32 %v413, 0.25
  %v458 = vmul.f32 %v416, 0.25
  %v459 = vmul.f32 %v421, 0.25
  %v460 = vmul.f32 %v424, 0.25
  %v461 = vmul.f32 %v429, 0.25
  %v462 = vmul.f32 %v432, 0.25
  %v463 = vmul.f32 %v437, 0.25
  %v464 = vmul.f32 %v440, 0.25
  %v465 = vmul.f32 %v445, 0.25
  %v466 = vmul.f32 %v448, 0.25
  %v467 = vadd.f32 %v451, %v49
  %v468 = vadd.f32 %v452, %v50
  %v469 = vadd.f32 %v453, %v51
  %v470 = vadd.f32 %v454, %v52
  %v471 = vadd.f32 %v455, %v53
  %v472 = vadd.f32 %v456, %v54
  %v473 = vadd.f32 %v457, %v55
  %v474 = vadd.f32 %v458, %v56
  %v475 = vadd.f32 %v459, %v57
  %v476 = vadd.f32 %v460, %v58
  %v477 = vadd.f32 %v461, %v59
  %v478 = vadd.f32 %v462, %v60
  %v479 = vadd.f32 %v463, %v61
  %v480 = vadd.f32 %v464, %v62
  %v481 = vadd.f32 %v465, %v63
  %v482 = vadd.f32 %v466, %v64
  %483 = vmax.xlane.f32.xlu0 %v467
  %v484 = vpop.xlane.xlu0 %483
  %485 = vmax.xlane.f32.xlu0 %v468
  %v486 = vpop.xlane.xlu0 %485
  %487 = vmax.xlane.f32.xlu0 %v469
  %v488 = vpop.xlane.xlu0 %487
  %489 = vmax.xlane.f32.xlu0 %v470
  %v490 = vpop.xlane.xlu0 %489
  %491 = vmax.xlane.f32.xlu0 %v471
  %v492 = vpop.xlane.xlu0 %491
  %493 = vmax.xlane.f32.xlu0 %v472
  %v494 = vpop.xlane.xlu0 %493
  %495 = vmax.xlane.f32.xlu0 %v473
  %v496 = vpop.xlane.xlu0 %495
  %497 = vmax.xlane.f32.xlu0 %v474
  %v498 = vpop.xlane.xlu0 %497
  %499 = vmax.xlane.f32.xlu0 %v475
  %v500 = vpop.xlane.xlu0 %499
  %501 = vmax.xlane.f32.xlu0 %v476
  %v502 = vpop.xlane.xlu0 %501
  %503 = vmax.xlane.f32.xlu0 %v477
  %v504 = vpop.xlane.xlu0 %503
  %505 = vmax.xlane.f32.xlu0 %v478
  %v506 = vpop.xlane.xlu0 %505
  %507 = vmax.xlane.f32.xlu0 %v479
  %v508 = vpop.xlane.xlu0 %507
  %509 = vmax.xlane.f32.xlu0 %v480
  %v510 = vpop.xlane.xlu0 %509
  %511 = vmax.xlane.f32.xlu0 %v481
  %v512 = vpop.xlane.xlu0 %511
  %513 = vmax.xlane.f32.xlu0 %v482
  %v514 = vpop.xlane.xlu0 %513
  %v515 = vsub.f32 %v467, %v484
  %v516 = vsub.f32 %v468, %v486
  %v517 = vsub.f32 %v469, %v488
  %v518 = vsub.f32 %v470, %v490
  %v519 = vsub.f32 %v471, %v492
  %v520 = vsub.f32 %v472, %v494
  %v521 = vsub.f32 %v473, %v496
  %v522 = vsub.f32 %v474, %v498
  %v523 = vsub.f32 %v475, %v500
  %v524 = vsub.f32 %v476, %v502
  %v525 = vsub.f32 %v477, %v504
  %v526 = vsub.f32 %v478, %v506
  %v527 = vsub.f32 %v479, %v508
  %v528 = vsub.f32 %v480, %v510
  %v529 = vsub.f32 %v481, %v512
  %v530 = vsub.f32 %v482, %v514
  %v531 = vmul.f32 %v515, 1.442695
  %v532 = vpow.pop %v531
  %v533 = vmul.f32 %v516, 1.442695
  %v534 = vpow.pop %v533
  %v535 = vmul.f32 %v517, 1.442695
  %v536 = vpow.pop %v535
  %v537 = vmul.f32 %v518, 1.442695
  %v538 = vpow.pop %v537
  %v539 = vmul.f32 %v519, 1.442695
  %v540 = vpow.pop %v539
  %v541 = vmul.f32 %v520, 1.442695
  %v542 = vpow.pop %v541
  %v543 = vmul.f32 %v521, 1.442695
  %v544 = vpow.pop %v543
  %v545 = vmul.f32 %v522, 1.442695
  %v546 = vpow.pop %v545
  %v547 = vmul.f32 %v523, 1.442695
  %v548 = vpow.pop %v547
  %v549 = vmul.f32 %v524, 1.442695
  %v550 = vpow.pop %v549
  %v551 = vmul.f32 %v525, 1.442695
  %v552 = vpow.pop %v551
  %v553 = vmul.f32 %v526, 1.442695
  %v554 = vpow.pop %v553
  %v555 = vmul.f32 %v527, 1.442695
  %v556 = vpow.pop %v555
  %v557 = vmul.f32 %v528, 1.442695
  %v558 = vpow.pop %v557
  %v559 = vmul.f32 %v529, 1.442695
  %v560 = vpow.pop %v559
  %v561 = vmul.f32 %v530, 1.442695
  %v562 = vpow.pop %v561
  %563 = vadd.xlane.f32.xlu0 %v532
  %v564 = vpop.xlane.xlu0 %563
  %565 = vadd.xlane.f32.xlu0 %v534
  %v566 = vpop.xlane.xlu0 %565
  %567 = vadd.xlane.f32.xlu0 %v536
  %v568 = vpop.xlane.xlu0 %567
  %569 = vadd.xlane.f32.xlu0 %v538
  %v570 = vpop.xlane.xlu0 %569
  %571 = vadd.xlane.f32.xlu0 %v540
  %v572 = vpop.xlane.xlu0 %571
  %573 = vadd.xlane.f32.xlu0 %v542
  %v574 = vpop.xlane.xlu0 %573
  %575 = vadd.xlane.f32.xlu0 %v544
  %v576 = vpop.xlane.xlu0 %575
  %577 = vadd.xlane.f32.xlu0 %v546
  %v578 = vpop.xlane.xlu0 %577
  %579 = vadd.xlane.f32.xlu0 %v548
  %v580 = vpop.xlane.xlu0 %579
  %581 = vadd.xlane.f32.xlu0 %v550
  %v582 = vpop.xlane.xlu0 %581
  %583 = vadd.xlane.f32.xlu0 %v552
  %v584 = vpop.xlane.xlu0 %583
  %585 = vadd.xlane.f32.xlu0 %v554
  %v586 = vpop.xlane.xlu0 %585
  %587 = vadd.xlane.f32.xlu0 %v556
  %v588 = vpop.xlane.xlu0 %587
  %589 = vadd.xlane.f32.xlu0 %v558
  %v590 = vpop.xlane.xlu0 %589
  %591 = vadd.xlane.f32.xlu0 %v560
  %v592 = vpop.xlane.xlu0 %591
  %593 = vadd.xlane.f32.xlu0 %v562
  %v594 = vpop.xlane.xlu0 %593
  %v595 = vrcp.pop %v564
  %v596 = vrcp.pop %v566
  %v597 = vrcp.pop %v568
  %v598 = vrcp.pop %v570
  %v599 = vrcp.pop %v572
  %v600 = vrcp.pop %v574
  %v601 = vrcp.pop %v576
  %v602 = vrcp.pop %v578
  %v603 = vrcp.pop %v580
  %v604 = vrcp.pop %v582
  %v605 = vrcp.pop %v584
  %v606 = vrcp.pop %v586
  %v607 = vrcp.pop %v588
  %v608 = vrcp.pop %v590
  %v609 = vrcp.pop %v592
  %v610 = vrcp.pop %v594
  %v611 = vmul.f32 %v532, %v595
  %v612 = vmul.f32 %v534, %v596
  %v613 = vmul.f32 %v536, %v597
  %v614 = vmul.f32 %v538, %v598
  %v615 = vmul.f32 %v540, %v599
  %v616 = vmul.f32 %v542, %v600
  %v617 = vmul.f32 %v544, %v601
  %v618 = vmul.f32 %v546, %v602
  %v619 = vmul.f32 %v548, %v603
  %v620 = vmul.f32 %v550, %v604
  %v621 = vmul.f32 %v552, %v605
  %v622 = vmul.f32 %v554, %v606
  %v623 = vmul.f32 %v556, %v607
  %v624 = vmul.f32 %v558, %v608
  %v625 = vmul.f32 %v560, %v609
  %v626 = vmul.f32 %v562, %v610
  %v627 = vpack.c.bf16 %v612, %v611
  %v628 = vpack.c.bf16 %v614, %v613
  %v629 = vpack.c.bf16 %v616, %v615
  %v630 = vpack.c.bf16 %v618, %v617
  %v631 = vpack.c.bf16 %v620, %v619
  %v632 = vpack.c.bf16 %v622, %v621
  %v633 = vpack.c.bf16 %v624, %v623
  %v634 = vpack.c.bf16 %v626, %v625
  %635 = vmatprep.subr.bf16.mxu0 0
  %636 = vmatpush1.bf16.msra.mxu0 %v273
  %637 = vmatprep.subr.bf16.mxu0 0
  %638 = vmatpush1.bf16.msra.mxu0 %v274
  %639 = vmatprep.subr.bf16.mxu0 0
  %640 = vmatpush1.bf16.msra.mxu0 %v275
  %641 = vmatprep.subr.bf16.mxu0 0
  %642 = vmatpush1.bf16.msra.mxu0 %v276
  %643 = vmatprep.subr.bf16.mxu0 0
  %644 = vmatpush1.bf16.msra.mxu0 %v277
  %645 = vmatprep.subr.bf16.mxu0 0
  %646 = vmatpush1.bf16.msra.mxu0 %v278
  %647 = vmatprep.subr.bf16.mxu0 0
  %648 = vmatpush1.bf16.msra.mxu0 %v279
  %649 = vmatprep.subr.bf16.mxu0 0
  %650 = vmatpush1.bf16.msra.mxu0 %v280
  %651 = vmatprep.subr.bf16.mxu0 0
  %652 = vmatpush1.bf16.msra.mxu0 0
  %653 = vmatprep.subr.bf16.mxu0 0
  %654 = vmatpush1.bf16.msra.mxu0 0
  %655 = vmatprep.subr.bf16.mxu0 0
  %656 = vmatpush1.bf16.msra.mxu0 0
  %657 = vmatprep.subr.bf16.mxu0 0
  %658 = vmatpush1.bf16.msra.mxu0 0
  %659 = vmatprep.subr.bf16.mxu0 0
  %660 = vmatpush1.bf16.msra.mxu0 0
  %661 = vmatprep.subr.bf16.mxu0 0
  %662 = vmatpush1.bf16.msra.mxu0 0
  %663 = vmatprep.subr.bf16.mxu0 0
  %664 = vmatpush1.bf16.msra.mxu0 0
  %665 = vmatprep.subr.bf16.mxu0 0
  %666 = vmatpush1.bf16.msra.mxu0 0
  %667 = vmatprep.mubr.bf16.mxu0 0
  %668 = vmatmul.mubr.bf16.gmra.mrb[0].mxu0 %v627
  %v669 = vpop.f32.mrb[0].mxu0
  %v670 = vadd.f32 0.0, %v669
  %v671 = vpop.f32.mrb[0].mxu0
  %v672 = vpop.f32.mrb[0].mxu0
  %v673 = vadd.f32 0.0, %v672
  %v674 = vpop.f32.mrb[0].mxu0
  %675 = vmatprep.mubr.bf16.mxu0 0
  %676 = vmatmul.mubr.bf16.gmra.mrb[0].mxu0 %v628
  %v677 = vpop.f32.mrb[0].mxu0
  %v678 = vadd.f32 0.0, %v677
  %v679 = vpop.f32.mrb[0].mxu0
  %v680 = vpop.f32.mrb[0].mxu0
  %v681 = vadd.f32 0.0, %v680
  %v682 = vpop.f32.mrb[0].mxu0
  %683 = vmatprep.mubr.bf16.mxu0 0
  %684 = vmatmul.mubr.bf16.gmra.mrb[0].mxu0 %v629
  %v685 = vpop.f32.mrb[0].mxu0
  %v686 = vadd.f32 0.0, %v685
  %v687 = vpop.f32.mrb[0].mxu0
  %v688 = vpop.f32.mrb[0].mxu0
  %v689 = vadd.f32 0.0, %v688
  %v690 = vpop.f32.mrb[0].mxu0
  %691 = vmatprep.mubr.bf16.mxu0 0
  %692 = vmatmul.mubr.bf16.gmra.mrb[0].mxu0 %v630
  %v693 = vpop.f32.mrb[0].mxu0
  %v694 = vadd.f32 0.0, %v693
  %v695 = vpop.f32.mrb[0].mxu0
  %v696 = vpop.f32.mrb[0].mxu0
  %v697 = vadd.f32 0.0, %v696
  %v698 = vpop.f32.mrb[0].mxu0
  %699 = vmatprep.mubr.bf16.mxu0 0
  %700 = vmatmul.mubr.bf16.gmra.mrb[0].mxu0 %v631
  %v701 = vpop.f32.mrb[0].mxu0
  %v702 = vadd.f32 0.0, %v701
  %v703 = vpop.f32.mrb[0].mxu0
  %v704 = vpop.f32.mrb[0].mxu0
  %v705 = vadd.f32 0.0, %v704
  %v706 = vpop.f32.mrb[0].mxu0
  %707 = vmatprep.mubr.bf16.mxu0 0
  %708 = vmatmul.mubr.bf16.gmra.mrb[0].mxu0 %v632
  %v709 = vpop.f32.mrb[0].mxu0
  %v710 = vadd.f32 0.0, %v709
  %v711 = vpop.f32.mrb[0].mxu0
  %v712 = vpop.f32.mrb[0].mxu0
  %v713 = vadd.f32 0.0, %v712
  %v714 = vpop.f32.mrb[0].mxu0
  %715 = vmatprep.mubr.bf16.mxu0 0
  %716 = vmatmul.mubr.bf16.gmra.mrb[0].mxu0 %v633
  %v717 = vpop.f32.mrb[0].mxu0
  %v718 = vadd.f32 0.0, %v717
  %v719 = vpop.f32.mrb[0].mxu0
  %v720 = vpop.f32.mrb[0].mxu0
  %v721 = vadd.f32 0.0, %v720
  %v722 = vpop.f32.mrb[0].mxu0
  %723 = vmatprep.mubr.bf16.mxu0 0
  %724 = vmatmul.mubr.bf16.gmra.mrb[0].mxu0 %v634
  %v725 = vpop.f32.mrb[0].mxu0
  %v726 = vadd.f32 0.0, %v725
  %v727 = vpop.f32.mrb[0].mxu0
  %v728 = vpop.f32.mrb[0].mxu0
  %v729 = vadd.f32 0.0, %v728
  %v730 = vpop.f32.mrb[0].mxu0
  %731 = vdwg.mxu0
  %736 = vrot.lane.b32.xlu0 %v686, 16
  %v737 = vpop.permute.xlu0 %736
  %738 = vrot.lane.b32.xlu0 %v689, 16
  %v739 = vpop.permute.xlu0 %738
  %740 = vrot.lane.b32.xlu0 %v694, 16
  %v741 = vpop.permute.xlu0 %740
  %742 = vrot.lane.b32.xlu0 %v697, 16
  %v743 = vpop.permute.xlu0 %742
  %752 = vrot.lane.b32.xlu0 %v702, 32
  %v753 = vpop.permute.xlu0 %752
  %754 = vrot.lane.b32.xlu0 %v705, 32
  %v755 = vpop.permute.xlu0 %754
  %756 = vrot.lane.b32.xlu0 %v710, 32
  %v757 = vpop.permute.xlu0 %756
  %758 = vrot.lane.b32.xlu0 %v713, 32
  %v759 = vpop.permute.xlu0 %758
  %768 = vrot.lane.b32.xlu0 %v718, 48
  %v769 = vpop.permute.xlu0 %768
  %770 = vrot.lane.b32.xlu0 %v721, 48
  %v771 = vpop.permute.xlu0 %770
  %772 = vrot.lane.b32.xlu0 %v726, 48
  %v773 = vpop.permute.xlu0 %772
  %774 = vrot.lane.b32.xlu0 %v729, 48
  %v775 = vpop.permute.xlu0 %774
  %v780 = vsel %vm305, %v670, %v737
  %v781 = vsel %vm305, %v673, %v739
  %v782 = vsel %vm305, %v678, %v741
  %v783 = vsel %vm305, %v681, %v743
  %vm784 = vcmask 261120
  %v785 = vsel %vm784, %v780, %v753
  %v786 = vsel %vm784, %v781, %v755
  %v787 = vsel %vm784, %v782, %v757
  %v788 = vsel %vm784, %v783, %v759
  %vm789 = vcmask 392192
  %v790 = vsel %vm789, %v785, %v769
  %v791 = vsel %vm789, %v786, %v771
  %v792 = vsel %vm789, %v787, %v773
  %v793 = vsel %vm789, %v788, %v775
  %v794 = vpack.c.bf16 %v791, %v790
  %v795 = vpack.c.bf16 %v793, %v792
  %v796 = vld [vmem:[%s5] sm:$0xf]
  %v797 = vld [vmem:[%s5 + $0x4] sm:$0xf]
  %v798 = vld [vmem:[%s5 + $0x8] sm:$0xf]
  %v799 = vld [vmem:[%s5 + $0xc] sm:$0xf]
  %v800 = vld [vmem:[%s5 + $0x10] sm:$0xf]
  %v801 = vld [vmem:[%s5 + $0x14] sm:$0xf]
  %v802 = vld [vmem:[%s5 + $0x18] sm:$0xf]
  %v803 = vld [vmem:[%s5 + $0x1c] sm:$0xf]
  %v804 = vlaneseq
  %v805 = vshrl.u32 %v804, 7
  %v806 = vsub.s32 1, %v805
  %v807 = vrot.slane %v65, %v806
  %v816 = vunpack.c.l.b16 %v796
  %v817 = vunpack.c.l.b16 %v797
  %v818 = vunpack.c.l.b16 %v798
  %v819 = vunpack.c.l.b16 %v799
  %v820 = vunpack.c.l.b16 %v800
  %v821 = vunpack.c.l.b16 %v801
  %v822 = vunpack.c.l.b16 %v802
  %v823 = vunpack.c.l.b16 %v803
  %v824 = vpack.c.b16 %v817, %v816
  %v825 = vpack.c.b16 %v819, %v818
  %v826 = vpack.c.b16 %v821, %v820
  %v827 = vpack.c.b16 %v823, %v822
  %v833 = vsel %vm125, %v794, 0
  %v836 = vsel %vm125, %v795, 0
  %838 = vmatprep.subr.bf16.mxu0 0
  %839 = vmatpush1.bf16.msra.mxu0 %v824
  %840 = vmatprep.subr.bf16.mxu0 0
  %841 = vmatpush1.bf16.msra.mxu0 %v825
  %842 = vmatprep.subr.bf16.mxu0 0
  %843 = vmatpush1.bf16.msra.mxu0 %v826
  %844 = vmatprep.subr.bf16.mxu0 0
  %845 = vmatpush1.bf16.msra.mxu0 %v827
  %846 = vmatprep.subr.bf16.mxu0 0
  %847 = vmatpush1.bf16.msra.mxu0 0
  %848 = vmatprep.subr.bf16.mxu0 0
  %849 = vmatpush1.bf16.msra.mxu0 0
  %850 = vmatprep.subr.bf16.mxu0 0
  %851 = vmatpush1.bf16.msra.mxu0 0
  %852 = vmatprep.subr.bf16.mxu0 0
  %853 = vmatpush1.bf16.msra.mxu0 0
  %854 = vmatprep.subr.bf16.mxu0 0
  %855 = vmatpush1.bf16.msra.mxu0 0
  %856 = vmatprep.subr.bf16.mxu0 0
  %857 = vmatpush1.bf16.msra.mxu0 0
  %858 = vmatprep.subr.bf16.mxu0 0
  %859 = vmatpush1.bf16.msra.mxu0 0
  %860 = vmatprep.subr.bf16.mxu0 0
  %861 = vmatpush1.bf16.msra.mxu0 0
  %862 = vmatprep.subr.bf16.mxu0 0
  %863 = vmatpush1.bf16.msra.mxu0 0
  %864 = vmatprep.subr.bf16.mxu0 0
  %865 = vmatpush1.bf16.msra.mxu0 0
  %866 = vmatprep.subr.bf16.mxu0 0
  %867 = vmatpush1.bf16.msra.mxu0 0
  %868 = vmatprep.subr.bf16.mxu0 0
  %869 = vmatpush1.bf16.msra.mxu0 0
  %870 = vmatprep.mubr.bf16.mxu0 0
  %871 = vmatmul.mubr.bf16.gmra.mrb[0].mxu0 %v833
  %v872 = vpop.f32.mrb[0].mxu0
  %v873 = vadd.f32 %v807, %v872
  %v874 = vpop.f32.mrb[0].mxu0
  %v875 = vpop.f32.mrb[0].mxu0
  %v876 = vadd.f32 %v807, %v875
  %v877 = vpop.f32.mrb[0].mxu0
  %878 = vmatprep.mubr.bf16.mxu0 0
  %879 = vmatmul.mubr.bf16.gmra.mrb[0].mxu0 %v836
  %v880 = vpop.f32.mrb[0].mxu0
  %v881 = vadd.f32 %v807, %v880
  %v882 = vpop.f32.mrb[0].mxu0
  %v883 = vpop.f32.mrb[0].mxu0
  %v884 = vadd.f32 %v807, %v883
  %v885 = vpop.f32.mrb[0].mxu0
  %886 = vdwg.mxu0
  %v887 = vadd.f32 %v45, %v873
  %v888 = vadd.f32 %v46, %v876
  %v889 = vadd.f32 %v47, %v881
  %v890 = vadd.f32 %v48, %v884
  %v891 = vsel %vm125, %v887, 0.0
  %892 = vadd.xlane.f32.xlu0 %v891
  %v893 = vpop.xlane.xlu0 %892
  %v894 = vsel %vm125, %v888, 0.0
  %895 = vadd.xlane.f32.xlu0 %v894
  %v896 = vpop.xlane.xlu0 %895
  %v897 = vsel %vm125, %v889, 0.0
  %898 = vadd.xlane.f32.xlu0 %v897
  %v899 = vpop.xlane.xlu0 %898
  %v900 = vsel %vm125, %v890, 0.0
  %901 = vadd.xlane.f32.xlu0 %v900
  %v902 = vpop.xlane.xlu0 %901
  %v903 = vrcp.pop 64.0
  %v904 = vmul.f32 %v893, %v903
  %v905 = vmul.f32 %v896, %v903
  %v906 = vmul.f32 %v899, %v903
  %v907 = vmul.f32 %v902, %v903
  %v908 = vsub.f32 %v887, %v904
  %v909 = vsub.f32 %v888, %v905
  %v910 = vsub.f32 %v889, %v906
  %v911 = vsub.f32 %v890, %v907
  %v912 = vmul.f32 %v908, %v908
  %v913 = vmul.f32 %v909, %v909
  %v914 = vmul.f32 %v910, %v910
  %v915 = vmul.f32 %v911, %v911
  %v916 = vsel %vm125, %v912, 0.0
  %917 = vadd.xlane.f32.xlu0 %v916
  %v918 = vpop.xlane.xlu0 %917
  %v919 = vsel %vm125, %v913, 0.0
  %920 = vadd.xlane.f32.xlu0 %v919
  %v921 = vpop.xlane.xlu0 %920
  %v922 = vsel %vm125, %v914, 0.0
  %923 = vadd.xlane.f32.xlu0 %v922
  %v924 = vpop.xlane.xlu0 %923
  %v925 = vsel %vm125, %v915, 0.0
  %926 = vadd.xlane.f32.xlu0 %v925
  %v927 = vpop.xlane.xlu0 %926
  %v928 = vmul.f32 %v918, %v903
  %v929 = vmul.f32 %v921, %v903
  %v930 = vmul.f32 %v924, %v903
  %v931 = vmul.f32 %v927, %v903
  %v932 = vadd.f32 %v928, 1e-12
  %v933 = vadd.f32 %v929, 1e-12
  %v934 = vadd.f32 %v930, 1e-12
  %v935 = vadd.f32 %v931, 1e-12
  %v936 = vrsqrt.pop %v932
  %v937 = vrsqrt.pop %v933
  %v938 = vrsqrt.pop %v934
  %v939 = vrsqrt.pop %v935
  %v940 = vmul.f32 %v908, %v936
  %v941 = vmul.f32 %v909, %v937
  %v942 = vmul.f32 %v910, %v938
  %v943 = vmul.f32 %v911, %v939
  %v944 = vlaneseq
  %v945 = vshrl.u32 %v944, 7
  %v946 = vsub.s32 2, %v945
  %v947 = vrot.slane %v65, %v946
  %v948 = vmul.f32 %v940, %v947
  %v949 = vmul.f32 %v941, %v947
  %v950 = vmul.f32 %v942, %v947
  %v951 = vmul.f32 %v943, %v947
  %v952 = vlaneseq
  %v953 = vshrl.u32 %v952, 7
  %v954 = vsub.s32 3, %v953
  %v955 = vrot.slane %v65, %v954
  %v956 = vadd.f32 %v948, %v955
  %v957 = vadd.f32 %v949, %v955
  %v958 = vadd.f32 %v950, %v955
  %v959 = vadd.f32 %v951, %v955
  %v960 = vpack.c.bf16 %v957, %v956
  %v961 = vpack.c.bf16 %v959, %v958
  %v962 = vld [vmem:[%s6] sm:$0xff]
  %v963 = vld [vmem:[%s6 + $0x8] sm:$0xff]
  %v964 = vld [vmem:[%s6 + $0x10] sm:$0xff]
  %v965 = vld [vmem:[%s6 + $0x18] sm:$0xff]
  %v966 = vld [vmem:[%s6 + $0x20] sm:$0xff]
  %v967 = vld [vmem:[%s6 + $0x28] sm:$0xff]
  %v968 = vld [vmem:[%s6 + $0x30] sm:$0xff]
  %v969 = vld [vmem:[%s6 + $0x38] sm:$0xff]
  %v970 = vlaneseq
  %v971 = vshrl.u32 %v970, 7
  %v972 = vsub.s32 4, %v971
  %v973 = vrot.slane %v65, %v972
  %v974 = vlaneseq
  %v975 = vshrl.u32 %v974, 7
  %v976 = vsub.s32 4, %v975
  %v977 = vrot.slane %v66, %v976
  %v986 = vunpack.c.l.b16 %v962
  %v987 = vunpack.c.h.b16 %v962
  %v988 = vunpack.c.l.b16 %v963
  %v989 = vunpack.c.h.b16 %v963
  %v990 = vunpack.c.l.b16 %v964
  %v991 = vunpack.c.h.b16 %v964
  %v992 = vunpack.c.l.b16 %v965
  %v993 = vunpack.c.h.b16 %v965
  %v994 = vunpack.c.l.b16 %v966
  %v995 = vunpack.c.h.b16 %v966
  %v996 = vunpack.c.l.b16 %v967
  %v997 = vunpack.c.h.b16 %v967
  %v998 = vunpack.c.l.b16 %v968
  %v999 = vunpack.c.h.b16 %v968
  %v1000 = vunpack.c.l.b16 %v969
  %v1001 = vunpack.c.h.b16 %v969
  %v1002 = vpack.c.b16 %v988, %v986
  %v1003 = vpack.c.b16 %v989, %v987
  %v1004 = vpack.c.b16 %v992, %v990
  %v1005 = vpack.c.b16 %v993, %v991
  %v1006 = vpack.c.b16 %v996, %v994
  %v1007 = vpack.c.b16 %v997, %v995
  %v1008 = vpack.c.b16 %v1000, %v998
  %v1009 = vpack.c.b16 %v1001, %v999
  %v1019 = vsel %vm125, %v960, 0
  %v1022 = vsel %vm125, %v961, 0
  %1024 = vmatprep.subr.bf16.mxu0 %v1003
  %1025 = vmatpush1.bf16.msra.mxu0 %v1002
  %1026 = vmatprep.subr.bf16.mxu0 %v1005
  %1027 = vmatpush1.bf16.msra.mxu0 %v1004
  %1028 = vmatprep.subr.bf16.mxu0 %v1007
  %1029 = vmatpush1.bf16.msra.mxu0 %v1006
  %1030 = vmatprep.subr.bf16.mxu0 %v1009
  %1031 = vmatpush1.bf16.msra.mxu0 %v1008
  %1032 = vmatprep.subr.bf16.mxu0 0
  %1033 = vmatpush1.bf16.msra.mxu0 0
  %1034 = vmatprep.subr.bf16.mxu0 0
  %1035 = vmatpush1.bf16.msra.mxu0 0
  %1036 = vmatprep.subr.bf16.mxu0 0
  %1037 = vmatpush1.bf16.msra.mxu0 0
  %1038 = vmatprep.subr.bf16.mxu0 0
  %1039 = vmatpush1.bf16.msra.mxu0 0
  %1040 = vmatprep.subr.bf16.mxu0 0
  %1041 = vmatpush1.bf16.msra.mxu0 0
  %1042 = vmatprep.subr.bf16.mxu0 0
  %1043 = vmatpush1.bf16.msra.mxu0 0
  %1044 = vmatprep.subr.bf16.mxu0 0
  %1045 = vmatpush1.bf16.msra.mxu0 0
  %1046 = vmatprep.subr.bf16.mxu0 0
  %1047 = vmatpush1.bf16.msra.mxu0 0
  %1048 = vmatprep.subr.bf16.mxu0 0
  %1049 = vmatpush1.bf16.msra.mxu0 0
  %1050 = vmatprep.subr.bf16.mxu0 0
  %1051 = vmatpush1.bf16.msra.mxu0 0
  %1052 = vmatprep.subr.bf16.mxu0 0
  %1053 = vmatpush1.bf16.msra.mxu0 0
  %1054 = vmatprep.subr.bf16.mxu0 0
  %1055 = vmatpush1.bf16.msra.mxu0 0
  %1056 = vmatprep.mubr.bf16.mxu0 0
  %1057 = vmatmul.mubr.bf16.gmra.mrb[0].mxu0 %v1019
  %v1058 = vpop.f32.mrb[0].mxu0
  %v1059 = vadd.f32 %v973, %v1058
  %v1060 = vpop.f32.mrb[0].mxu0
  %v1061 = vadd.f32 %v977, %v1060
  %v1062 = vpop.f32.mrb[0].mxu0
  %v1063 = vadd.f32 %v973, %v1062
  %v1064 = vpop.f32.mrb[0].mxu0
  %v1065 = vadd.f32 %v977, %v1064
  %1066 = vmatprep.mubr.bf16.mxu0 0
  %1067 = vmatmul.mubr.bf16.gmra.mrb[0].mxu0 %v1022
  %v1068 = vpop.f32.mrb[0].mxu0
  %v1069 = vadd.f32 %v973, %v1068
  %v1070 = vpop.f32.mrb[0].mxu0
  %v1071 = vadd.f32 %v977, %v1070
  %v1072 = vpop.f32.mrb[0].mxu0
  %v1073 = vadd.f32 %v973, %v1072
  %v1074 = vpop.f32.mrb[0].mxu0
  %v1075 = vadd.f32 %v977, %v1074
  %1076 = vdwg.mxu0
  %v1077 = vmul.f32 %v1059, 0.5
  %v1078 = vmul.f32 %v1061, 0.5
  %v1079 = vmul.f32 %v1063, 0.5
  %v1080 = vmul.f32 %v1065, 0.5
  %v1081 = vmul.f32 %v1069, 0.5
  %v1082 = vmul.f32 %v1071, 0.5
  %v1083 = vmul.f32 %v1073, 0.5
  %v1084 = vmul.f32 %v1075, 0.5
  %v1085 = vmul.f32 %v1059, 0.044715
  %v1086 = vmul.f32 %v1061, 0.044715
  %v1087 = vmul.f32 %v1063, 0.044715
  %v1088 = vmul.f32 %v1065, 0.044715
  %v1089 = vmul.f32 %v1069, 0.044715
  %v1090 = vmul.f32 %v1071, 0.044715
  %v1091 = vmul.f32 %v1073, 0.044715
  %v1092 = vmul.f32 %v1075, 0.044715
  %v1093 = vmul.f32 %v1085, %v1059
  %v1094 = vmul.f32 %v1086, %v1061
  %v1095 = vmul.f32 %v1087, %v1063
  %v1096 = vmul.f32 %v1088, %v1065
  %v1097 = vmul.f32 %v1089, %v1069
  %v1098 = vmul.f32 %v1090, %v1071
  %v1099 = vmul.f32 %v1091, %v1073
  %v1100 = vmul.f32 %v1092, %v1075
  %v1101 = vmul.f32 %v1093, %v1059
  %v1102 = vmul.f32 %v1094, %v1061
  %v1103 = vmul.f32 %v1095, %v1063
  %v1104 = vmul.f32 %v1096, %v1065
  %v1105 = vmul.f32 %v1097, %v1069
  %v1106 = vmul.f32 %v1098, %v1071
  %v1107 = vmul.f32 %v1099, %v1073
  %v1108 = vmul.f32 %v1100, %v1075
  %v1109 = vadd.f32 %v1059, %v1101
  %v1110 = vadd.f32 %v1061, %v1102
  %v1111 = vadd.f32 %v1063, %v1103
  %v1112 = vadd.f32 %v1065, %v1104
  %v1113 = vadd.f32 %v1069, %v1105
  %v1114 = vadd.f32 %v1071, %v1106
  %v1115 = vadd.f32 %v1073, %v1107
  %v1116 = vadd.f32 %v1075, %v1108
  %v1117 = vmul.f32 %v1109, 0.7978846
  %v1118 = vmul.f32 %v1110, 0.7978846
  %v1119 = vmul.f32 %v1111, 0.7978846
  %v1120 = vmul.f32 %v1112, 0.7978846
  %v1121 = vmul.f32 %v1113, 0.7978846
  %v1122 = vmul.f32 %v1114, 0.7978846
  %v1123 = vmul.f32 %v1115, 0.7978846
  %v1124 = vmul.f32 %v1116, 0.7978846
  %v1125 = vtanh.pop %v1117
  %v1126 = vtanh.pop %v1118
  %v1127 = vtanh.pop %v1119
  %v1128 = vtanh.pop %v1120
  %v1129 = vtanh.pop %v1121
  %v1130 = vtanh.pop %v1122
  %v1131 = vtanh.pop %v1123
  %v1132 = vtanh.pop %v1124
  %v1133 = vadd.f32 %v1125, 1.0
  %v1134 = vadd.f32 %v1126, 1.0
  %v1135 = vadd.f32 %v1127, 1.0
  %v1136 = vadd.f32 %v1128, 1.0
  %v1137 = vadd.f32 %v1129, 1.0
  %v1138 = vadd.f32 %v1130, 1.0
  %v1139 = vadd.f32 %v1131, 1.0
  %v1140 = vadd.f32 %v1132, 1.0
  %v1141 = vmul.f32 %v1077, %v1133
  %v1142 = vmul.f32 %v1078, %v1134
  %v1143 = vmul.f32 %v1079, %v1135
  %v1144 = vmul.f32 %v1080, %v1136
  %v1145 = vmul.f32 %v1081, %v1137
  %v1146 = vmul.f32 %v1082, %v1138
  %v1147 = vmul.f32 %v1083, %v1139
  %v1148 = vmul.f32 %v1084, %v1140
  %v1149 = vpack.c.bf16 %v1143, %v1141
  %v1150 = vpack.c.bf16 %v1144, %v1142
  %v1151 = vpack.c.bf16 %v1147, %v1145
  %v1152 = vpack.c.bf16 %v1148, %v1146
  %v1153 = vld [vmem:[%s7] sm:$0xf]
  %v1154 = vld [vmem:[%s7 + $0x4] sm:$0xf]
  %v1155 = vld [vmem:[%s7 + $0x8] sm:$0xf]
  %v1156 = vld [vmem:[%s7 + $0xc] sm:$0xf]
  %v1157 = vld [vmem:[%s7 + $0x10] sm:$0xf]
  %v1158 = vld [vmem:[%s7 + $0x14] sm:$0xf]
  %v1159 = vld [vmem:[%s7 + $0x18] sm:$0xf]
  %v1160 = vld [vmem:[%s7 + $0x1c] sm:$0xf]
  %v1161 = vld [vmem:[%s7 + $0x20] sm:$0xf]
  %v1162 = vld [vmem:[%s7 + $0x24] sm:$0xf]
  %v1163 = vld [vmem:[%s7 + $0x28] sm:$0xf]
  %v1164 = vld [vmem:[%s7 + $0x2c] sm:$0xf]
  %v1165 = vld [vmem:[%s7 + $0x30] sm:$0xf]
  %v1166 = vld [vmem:[%s7 + $0x34] sm:$0xf]
  %v1167 = vld [vmem:[%s7 + $0x38] sm:$0xf]
  %v1168 = vld [vmem:[%s7 + $0x3c] sm:$0xf]
  %v1169 = vld [vmem:[%s7 + $0x40] sm:$0xf]
  %v1170 = vld [vmem:[%s7 + $0x44] sm:$0xf]
  %v1171 = vld [vmem:[%s7 + $0x48] sm:$0xf]
  %v1172 = vld [vmem:[%s7 + $0x4c] sm:$0xf]
  %v1173 = vld [vmem:[%s7 + $0x50] sm:$0xf]
  %v1174 = vld [vmem:[%s7 + $0x54] sm:$0xf]
  %v1175 = vld [vmem:[%s7 + $0x58] sm:$0xf]
  %v1176 = vld [vmem:[%s7 + $0x5c] sm:$0xf]
  %v1177 = vld [vmem:[%s7 + $0x60] sm:$0xf]
  %v1178 = vld [vmem:[%s7 + $0x64] sm:$0xf]
  %v1179 = vld [vmem:[%s7 + $0x68] sm:$0xf]
  %v1180 = vld [vmem:[%s7 + $0x6c] sm:$0xf]
  %v1181 = vld [vmem:[%s7 + $0x70] sm:$0xf]
  %v1182 = vld [vmem:[%s7 + $0x74] sm:$0xf]
  %v1183 = vld [vmem:[%s7 + $0x78] sm:$0xf]
  %v1184 = vld [vmem:[%s7 + $0x7c] sm:$0xf]
  %v1185 = vlaneseq
  %v1186 = vshrl.u32 %v1185, 7
  %v1187 = vsub.s32 5, %v1186
  %v1188 = vrot.slane %v65, %v1187
  %v1221 = vunpack.c.l.b16 %v1153
  %v1222 = vunpack.c.l.b16 %v1154
  %v1223 = vunpack.c.l.b16 %v1155
  %v1224 = vunpack.c.l.b16 %v1156
  %v1225 = vunpack.c.l.b16 %v1157
  %v1226 = vunpack.c.l.b16 %v1158
  %v1227 = vunpack.c.l.b16 %v1159
  %v1228 = vunpack.c.l.b16 %v1160
  %v1229 = vunpack.c.l.b16 %v1161
  %v1230 = vunpack.c.l.b16 %v1162
  %v1231 = vunpack.c.l.b16 %v1163
  %v1232 = vunpack.c.l.b16 %v1164
  %v1233 = vunpack.c.l.b16 %v1165
  %v1234 = vunpack.c.l.b16 %v1166
  %v1235 = vunpack.c.l.b16 %v1167
  %v1236 = vunpack.c.l.b16 %v1168
  %v1237 = vunpack.c.l.b16 %v1169
  %v1238 = vunpack.c.l.b16 %v1170
  %v1239 = vunpack.c.l.b16 %v1171
  %v1240 = vunpack.c.l.b16 %v1172
  %v1241 = vunpack.c.l.b16 %v1173
  %v1242 = vunpack.c.l.b16 %v1174
  %v1243 = vunpack.c.l.b16 %v1175
  %v1244 = vunpack.c.l.b16 %v1176
  %v1245 = vunpack.c.l.b16 %v1177
  %v1246 = vunpack.c.l.b16 %v1178
  %v1247 = vunpack.c.l.b16 %v1179
  %v1248 = vunpack.c.l.b16 %v1180
  %v1249 = vunpack.c.l.b16 %v1181
  %v1250 = vunpack.c.l.b16 %v1182
  %v1251 = vunpack.c.l.b16 %v1183
  %v1252 = vunpack.c.l.b16 %v1184
  %v1253 = vpack.c.b16 %v1222, %v1221
  %v1254 = vpack.c.b16 %v1224, %v1223
  %v1255 = vpack.c.b16 %v1226, %v1225
  %v1256 = vpack.c.b16 %v1228, %v1227
  %v1257 = vpack.c.b16 %v1230, %v1229
  %v1258 = vpack.c.b16 %v1232, %v1231
  %v1259 = vpack.c.b16 %v1234, %v1233
  %v1260 = vpack.c.b16 %v1236, %v1235
  %v1261 = vpack.c.b16 %v1238, %v1237
  %v1262 = vpack.c.b16 %v1240, %v1239
  %v1263 = vpack.c.b16 %v1242, %v1241
  %v1264 = vpack.c.b16 %v1244, %v1243
  %v1265 = vpack.c.b16 %v1246, %v1245
  %v1266 = vpack.c.b16 %v1248, %v1247
  %v1267 = vpack.c.b16 %v1250, %v1249
  %v1268 = vpack.c.b16 %v1252, %v1251
  %1285 = vmatprep.subr.bf16.mxu0 0
  %1286 = vmatpush1.bf16.msra.mxu0 %v1253
  %1287 = vmatprep.subr.bf16.mxu0 0
  %1288 = vmatpush1.bf16.msra.mxu0 %v1254
  %1289 = vmatprep.subr.bf16.mxu0 0
  %1290 = vmatpush1.bf16.msra.mxu0 %v1255
  %1291 = vmatprep.subr.bf16.mxu0 0
  %1292 = vmatpush1.bf16.msra.mxu0 %v1256
  %1293 = vmatprep.subr.bf16.mxu0 0
  %1294 = vmatpush1.bf16.msra.mxu0 %v1257
  %1295 = vmatprep.subr.bf16.mxu0 0
  %1296 = vmatpush1.bf16.msra.mxu0 %v1258
  %1297 = vmatprep.subr.bf16.mxu0 0
  %1298 = vmatpush1.bf16.msra.mxu0 %v1259
  %1299 = vmatprep.subr.bf16.mxu0 0
  %1300 = vmatpush1.bf16.msra.mxu0 %v1260
  %1301 = vmatprep.subr.bf16.mxu0 0
  %1302 = vmatpush1.bf16.msra.mxu0 %v1261
  %1303 = vmatprep.subr.bf16.mxu0 0
  %1304 = vmatpush1.bf16.msra.mxu0 %v1262
  %1305 = vmatprep.subr.bf16.mxu0 0
  %1306 = vmatpush1.bf16.msra.mxu0 %v1263
  %1307 = vmatprep.subr.bf16.mxu0 0
  %1308 = vmatpush1.bf16.msra.mxu0 %v1264
  %1309 = vmatprep.subr.bf16.mxu0 0
  %1310 = vmatpush1.bf16.msra.mxu0 %v1265
  %1311 = vmatprep.subr.bf16.mxu0 0
  %1312 = vmatpush1.bf16.msra.mxu0 %v1266
  %1313 = vmatprep.subr.bf16.mxu0 0
  %1314 = vmatpush1.bf16.msra.mxu0 %v1267
  %1315 = vmatprep.subr.bf16.mxu0 0
  %1316 = vmatpush1.bf16.msra.mxu0 %v1268
  %1317 = vmatprep.mubr.bf16.mxu0 %v1150
  %1318 = vmatmul.mubr.bf16.gmra.mrb[0].mxu0 %v1149
  %v1319 = vpop.f32.mrb[0].mxu0
  %v1320 = vadd.f32 %v1188, %v1319
  %v1321 = vpop.f32.mrb[0].mxu0
  %v1322 = vpop.f32.mrb[0].mxu0
  %v1323 = vadd.f32 %v1188, %v1322
  %v1324 = vpop.f32.mrb[0].mxu0
  %1325 = vmatprep.mubr.bf16.mxu0 %v1152
  %1326 = vmatmul.mubr.bf16.gmra.mrb[0].mxu0 %v1151
  %v1327 = vpop.f32.mrb[0].mxu0
  %v1328 = vadd.f32 %v1188, %v1327
  %v1329 = vpop.f32.mrb[0].mxu0
  %v1330 = vpop.f32.mrb[0].mxu0
  %v1331 = vadd.f32 %v1188, %v1330
  %v1332 = vpop.f32.mrb[0].mxu0
  %1333 = vdwg.mxu0
  %v1334 = vadd.f32 %v956, %v1320
  %v1335 = vadd.f32 %v957, %v1323
  %v1336 = vadd.f32 %v958, %v1328
  %v1337 = vadd.f32 %v959, %v1331
  %v1338 = vsel %vm125, %v1334, 0.0
  %1339 = vadd.xlane.f32.xlu0 %v1338
  %v1340 = vpop.xlane.xlu0 %1339
  %v1341 = vsel %vm125, %v1335, 0.0
  %1342 = vadd.xlane.f32.xlu0 %v1341
  %v1343 = vpop.xlane.xlu0 %1342
  %v1344 = vsel %vm125, %v1336, 0.0
  %1345 = vadd.xlane.f32.xlu0 %v1344
  %v1346 = vpop.xlane.xlu0 %1345
  %v1347 = vsel %vm125, %v1337, 0.0
  %1348 = vadd.xlane.f32.xlu0 %v1347
  %v1349 = vpop.xlane.xlu0 %1348
  %v1350 = vmul.f32 %v1340, %v903
  %v1351 = vmul.f32 %v1343, %v903
  %v1352 = vmul.f32 %v1346, %v903
  %v1353 = vmul.f32 %v1349, %v903
  %v1354 = vsub.f32 %v1334, %v1350
  %v1355 = vsub.f32 %v1335, %v1351
  %v1356 = vsub.f32 %v1336, %v1352
  %v1357 = vsub.f32 %v1337, %v1353
  %v1358 = vmul.f32 %v1354, %v1354
  %v1359 = vmul.f32 %v1355, %v1355
  %v1360 = vmul.f32 %v1356, %v1356
  %v1361 = vmul.f32 %v1357, %v1357
  %v1362 = vsel %vm125, %v1358, 0.0
  %1363 = vadd.xlane.f32.xlu0 %v1362
  %v1364 = vpop.xlane.xlu0 %1363
  %v1365 = vsel %vm125, %v1359, 0.0
  %1366 = vadd.xlane.f32.xlu0 %v1365
  %v1367 = vpop.xlane.xlu0 %1366
  %v1368 = vsel %vm125, %v1360, 0.0
  %1369 = vadd.xlane.f32.xlu0 %v1368
  %v1370 = vpop.xlane.xlu0 %1369
  %v1371 = vsel %vm125, %v1361, 0.0
  %1372 = vadd.xlane.f32.xlu0 %v1371
  %v1373 = vpop.xlane.xlu0 %1372
  %v1374 = vmul.f32 %v1364, %v903
  %v1375 = vmul.f32 %v1367, %v903
  %v1376 = vmul.f32 %v1370, %v903
  %v1377 = vmul.f32 %v1373, %v903
  %v1378 = vadd.f32 %v1374, 1e-12
  %v1379 = vadd.f32 %v1375, 1e-12
  %v1380 = vadd.f32 %v1376, 1e-12
  %v1381 = vadd.f32 %v1377, 1e-12
  %v1382 = vrsqrt.pop %v1378
  %v1383 = vrsqrt.pop %v1379
  %v1384 = vrsqrt.pop %v1380
  %v1385 = vrsqrt.pop %v1381
  %v1386 = vmul.f32 %v1354, %v1382
  %v1387 = vmul.f32 %v1355, %v1383
  %v1388 = vmul.f32 %v1356, %v1384
  %v1389 = vmul.f32 %v1357, %v1385
  %v1390 = vlaneseq
  %v1391 = vshrl.u32 %v1390, 7
  %v1392 = vsub.s32 6, %v1391
  %v1393 = vrot.slane %v65, %v1392
  %v1394 = vmul.f32 %v1386, %v1393
  %v1395 = vmul.f32 %v1387, %v1393
  %v1396 = vmul.f32 %v1388, %v1393
  %v1397 = vmul.f32 %v1389, %v1393
  %v1398 = vlaneseq
  %v1399 = vshrl.u32 %v1398, 7
  %v1400 = vsub.s32 7, %v1399
  %v1401 = vrot.slane %v65, %v1400
  %v1402 = vadd.f32 %v1394, %v1401
  %v1403 = vadd.f32 %v1395, %v1401
  %v1404 = vadd.f32 %v1396, %v1401
  %v1405 = vadd.f32 %v1397, %v1401
  %s1406 = scalar_lea.vmem %s8, 16
  %v1407 = vld [vmem:[%s1406] sm:$0xff]
  %v1408 = vld [vmem:[%s1406 + $0x8] sm:$0xff]
  %v1409 = vpack.c.bf16 %v1403, %v1402
  %v1410 = vpack.c.bf16 %v1405, %v1404
  %s1411 = scalar_lea.vmem %s4, 64
  %v1412 = vld [vmem:[%s1411] sm:$0xff]
  %v1413 = vld [vmem:[%s1411 + $0x8] sm:$0xff]
  %v1414 = vld [vmem:[%s1411 + $0x10] sm:$0xff]
  %v1415 = vld [vmem:[%s1411 + $0x18] sm:$0xff]
  %v1416 = vld [vmem:[%s1411 + $0x20] sm:$0xff]
  %v1417 = vld [vmem:[%s1411 + $0x28] sm:$0xff]
  %v1418 = vld [vmem:[%s1411 + $0x30] sm:$0xff]
  %v1419 = vld [vmem:[%s1411 + $0x38] sm:$0xff]
  %v1420 = vlaneseq
  %v1421 = vshrl.u32 %v1420, 7
  %v1422 = vsub.s32 0, %v1421
  %v1423 = vrot.slane %v1407, %v1422
  %v1424 = vlaneseq
  %v1425 = vshrl.u32 %v1424, 7
  %v1426 = vsub.s32 0, %v1425
  %v1427 = vrot.slane %v1408, %v1426
  %v1436 = vunpack.c.l.b16 %v1412
  %v1437 = vunpack.c.h.b16 %v1412
  %v1438 = vunpack.c.l.b16 %v1413
  %v1439 = vunpack.c.h.b16 %v1413
  %v1440 = vunpack.c.l.b16 %v1414
  %v1441 = vunpack.c.h.b16 %v1414
  %v1442 = vunpack.c.l.b16 %v1415
  %v1443 = vunpack.c.h.b16 %v1415
  %v1444 = vunpack.c.l.b16 %v1416
  %v1445 = vunpack.c.h.b16 %v1416
  %v1446 = vunpack.c.l.b16 %v1417
  %v1447 = vunpack.c.h.b16 %v1417
  %v1448 = vunpack.c.l.b16 %v1418
  %v1449 = vunpack.c.h.b16 %v1418
  %v1450 = vunpack.c.l.b16 %v1419
  %v1451 = vunpack.c.h.b16 %v1419
  %v1452 = vpack.c.b16 %v1438, %v1436
  %v1453 = vpack.c.b16 %v1439, %v1437
  %v1454 = vpack.c.b16 %v1442, %v1440
  %v1455 = vpack.c.b16 %v1443, %v1441
  %v1456 = vpack.c.b16 %v1446, %v1444
  %v1457 = vpack.c.b16 %v1447, %v1445
  %v1458 = vpack.c.b16 %v1450, %v1448
  %v1459 = vpack.c.b16 %v1451, %v1449
  %v1469 = vsel %vm125, %v1409, 0
  %v1472 = vsel %vm125, %v1410, 0
  %1474 = vmatprep.subr.bf16.mxu0 %v1453
  %1475 = vmatpush1.bf16.msra.mxu0 %v1452
  %1476 = vmatprep.subr.bf16.mxu0 %v1455
  %1477 = vmatpush1.bf16.msra.mxu0 %v1454
  %1478 = vmatprep.subr.bf16.mxu0 %v1457
  %1479 = vmatpush1.bf16.msra.mxu0 %v1456
  %1480 = vmatprep.subr.bf16.mxu0 %v1459
  %1481 = vmatpush1.bf16.msra.mxu0 %v1458
  %1482 = vmatprep.subr.bf16.mxu0 0
  %1483 = vmatpush1.bf16.msra.mxu0 0
  %1484 = vmatprep.subr.bf16.mxu0 0
  %1485 = vmatpush1.bf16.msra.mxu0 0
  %1486 = vmatprep.subr.bf16.mxu0 0
  %1487 = vmatpush1.bf16.msra.mxu0 0
  %1488 = vmatprep.subr.bf16.mxu0 0
  %1489 = vmatpush1.bf16.msra.mxu0 0
  %1490 = vmatprep.subr.bf16.mxu0 0
  %1491 = vmatpush1.bf16.msra.mxu0 0
  %1492 = vmatprep.subr.bf16.mxu0 0
  %1493 = vmatpush1.bf16.msra.mxu0 0
  %1494 = vmatprep.subr.bf16.mxu0 0
  %1495 = vmatpush1.bf16.msra.mxu0 0
  %1496 = vmatprep.subr.bf16.mxu0 0
  %1497 = vmatpush1.bf16.msra.mxu0 0
  %1498 = vmatprep.subr.bf16.mxu0 0
  %1499 = vmatpush1.bf16.msra.mxu0 0
  %1500 = vmatprep.subr.bf16.mxu0 0
  %1501 = vmatpush1.bf16.msra.mxu0 0
  %1502 = vmatprep.subr.bf16.mxu0 0
  %1503 = vmatpush1.bf16.msra.mxu0 0
  %1504 = vmatprep.subr.bf16.mxu0 0
  %1505 = vmatpush1.bf16.msra.mxu0 0
  %1506 = vmatprep.mubr.bf16.mxu0 0
  %1507 = vmatmul.mubr.bf16.gmra.mrb[0].mxu0 %v1469
  %v1508 = vpop.f32.mrb[0].mxu0
  %v1509 = vadd.f32 %v1423, %v1508
  %v1510 = vpop.f32.mrb[0].mxu0
  %v1511 = vadd.f32 %v1427, %v1510
  %v1512 = vpop.f32.mrb[0].mxu0
  %v1513 = vadd.f32 %v1423, %v1512
  %v1514 = vpop.f32.mrb[0].mxu0
  %v1515 = vadd.f32 %v1427, %v1514
  %1516 = vmatprep.mubr.bf16.mxu0 0
  %1517 = vmatmul.mubr.bf16.gmra.mrb[0].mxu0 %v1472
  %v1518 = vpop.f32.mrb[0].mxu0
  %v1519 = vadd.f32 %v1423, %v1518
  %v1520 = vpop.f32.mrb[0].mxu0
  %v1521 = vadd.f32 %v1427, %v1520
  %v1522 = vpop.f32.mrb[0].mxu0
  %v1523 = vadd.f32 %v1423, %v1522
  %v1524 = vpop.f32.mrb[0].mxu0
  %v1525 = vadd.f32 %v1427, %v1524
  %1526 = vdwg.mxu0
  %1531 = vrot.lane.b32.xlu0 %v1509, 112
  %v1532 = vpop.permute.xlu0 %1531
  %1533 = vrot.lane.b32.xlu0 %v1513, 112
  %v1534 = vpop.permute.xlu0 %1533
  %1535 = vrot.lane.b32.xlu0 %v1519, 112
  %v1536 = vpop.permute.xlu0 %1535
  %1537 = vrot.lane.b32.xlu0 %v1523, 112
  %v1538 = vpop.permute.xlu0 %1537
  %1543 = vrot.lane.b32.xlu0 %v1509, 96
  %v1544 = vpop.permute.xlu0 %1543
  %1545 = vrot.lane.b32.xlu0 %v1513, 96
  %v1546 = vpop.permute.xlu0 %1545
  %1547 = vrot.lane.b32.xlu0 %v1519, 96
  %v1548 = vpop.permute.xlu0 %1547
  %1549 = vrot.lane.b32.xlu0 %v1523, 96
  %v1550 = vpop.permute.xlu0 %1549
  %1555 = vrot.lane.b32.xlu0 %v1509, 80
  %v1556 = vpop.permute.xlu0 %1555
  %1557 = vrot.lane.b32.xlu0 %v1513, 80
  %v1558 = vpop.permute.xlu0 %1557
  %1559 = vrot.lane.b32.xlu0 %v1519, 80
  %v1560 = vpop.permute.xlu0 %1559
  %1561 = vrot.lane.b32.xlu0 %v1523, 80
  %v1562 = vpop.permute.xlu0 %1561
  %v1567 = vpack.c.bf16 %v1513, %v1509
  %v1568 = vpack.c.bf16 %v1523, %v1519
  %v1569 = vpack.c.bf16 %v1534, %v1532
  %v1570 = vpack.c.bf16 %v1538, %v1536
  %v1571 = vpack.c.bf16 %v1546, %v1544
  %v1572 = vpack.c.bf16 %v1550, %v1548
  %v1573 = vpack.c.bf16 %v1558, %v1556
  %v1574 = vpack.c.bf16 %v1562, %v1560
  %1579 = vrot.lane.b32.xlu0 %v1511, 112
  %v1580 = vpop.permute.xlu0 %1579
  %1581 = vrot.lane.b32.xlu0 %v1515, 112
  %v1582 = vpop.permute.xlu0 %1581
  %1583 = vrot.lane.b32.xlu0 %v1521, 112
  %v1584 = vpop.permute.xlu0 %1583
  %1585 = vrot.lane.b32.xlu0 %v1525, 112
  %v1586 = vpop.permute.xlu0 %1585
  %1591 = vrot.lane.b32.xlu0 %v1511, 96
  %v1592 = vpop.permute.xlu0 %1591
  %1593 = vrot.lane.b32.xlu0 %v1515, 96
  %v1594 = vpop.permute.xlu0 %1593
  %1595 = vrot.lane.b32.xlu0 %v1521, 96
  %v1596 = vpop.permute.xlu0 %1595
  %1597 = vrot.lane.b32.xlu0 %v1525, 96
  %v1598 = vpop.permute.xlu0 %1597
  %1603 = vrot.lane.b32.xlu0 %v1511, 80
  %v1604 = vpop.permute.xlu0 %1603
  %1605 = vrot.lane.b32.xlu0 %v1515, 80
  %v1606 = vpop.permute.xlu0 %1605
  %1607 = vrot.lane.b32.xlu0 %v1521, 80
  %v1608 = vpop.permute.xlu0 %1607
  %1609 = vrot.lane.b32.xlu0 %v1525, 80
  %v1610 = vpop.permute.xlu0 %1609
  %v1615 = vpack.c.bf16 %v1515, %v1511
  %v1616 = vpack.c.bf16 %v1525, %v1521
  %v1617 = vpack.c.bf16 %v1582, %v1580
  %v1618 = vpack.c.bf16 %v1586, %v1584
  %v1619 = vpack.c.bf16 %v1594, %v1592
  %v1620 = vpack.c.bf16 %v1598, %v1596
  %v1621 = vpack.c.bf16 %v1606, %v1604
  %v1622 = vpack.c.bf16 %v1610, %v1608
  %1631 = vrot.lane.b32.xlu0 %v1567, 64
  %v1632 = vpop.permute.xlu0 %1631
  %1633 = vrot.lane.b32.xlu0 %v1568, 64
  %v1634 = vpop.permute.xlu0 %1633
  %1635 = vrot.lane.b32.xlu0 %v1569, 64
  %v1636 = vpop.permute.xlu0 %1635
  %1637 = vrot.lane.b32.xlu0 %v1570, 64
  %v1638 = vpop.permute.xlu0 %1637
  %1639 = vrot.lane.b32.xlu0 %v1571, 64
  %v1640 = vpop.permute.xlu0 %1639
  %1641 = vrot.lane.b32.xlu0 %v1572, 64
  %v1642 = vpop.permute.xlu0 %1641
  %1643 = vrot.lane.b32.xlu0 %v1573, 64
  %v1644 = vpop.permute.xlu0 %1643
  %1645 = vrot.lane.b32.xlu0 %v1574, 64
  %v1646 = vpop.permute.xlu0 %1645
  %v1648 = vsel %vm305, %v1567, 0
  %v1651 = vsel %vm305, %v1568, 0
  %v1654 = vsel %vm305, %v1569, 0
  %v1657 = vsel %vm305, %v1570, 0
  %v1660 = vsel %vm305, %v1571, 0
  %v1663 = vsel %vm305, %v1572, 0
  %v1666 = vsel %vm305, %v1573, 0
  %v1669 = vsel %vm305, %v1574, 0
  %v1672 = vsel %vm305, %v1632, 0
  %v1675 = vsel %vm305, %v1634, 0
  %v1678 = vsel %vm305, %v1636, 0
  %v1681 = vsel %vm305, %v1638, 0
  %v1684 = vsel %vm305, %v1640, 0
  %v1687 = vsel %vm305, %v1642, 0
  %v1690 = vsel %vm305, %v1644, 0
  %v1693 = vsel %vm305, %v1646, 0
  %1695 = vmatprep.subr.bf16.mxu0 0
  %1696 = vmatpush1.bf16.xpose.msra.mxu0 %v1672
  %1697 = vmatprep.subr.bf16.mxu0 0
  %1698 = vmatpush1.bf16.xpose.msra.mxu0 %v1675
  %1699 = vmatprep.subr.bf16.mxu0 0
  %1700 = vmatpush1.bf16.xpose.msra.mxu0 %v1678
  %1701 = vmatprep.subr.bf16.mxu0 0
  %1702 = vmatpush1.bf16.xpose.msra.mxu0 %v1681
  %1703 = vmatprep.subr.bf16.mxu0 0
  %1704 = vmatpush1.bf16.xpose.msra.mxu0 %v1684
  %1705 = vmatprep.subr.bf16.mxu0 0
  %1706 = vmatpush1.bf16.xpose.msra.mxu0 %v1687
  %1707 = vmatprep.subr.bf16.mxu0 0
  %1708 = vmatpush1.bf16.xpose.msra.mxu0 %v1690
  %1709 = vmatprep.subr.bf16.mxu0 0
  %1710 = vmatpush1.bf16.xpose.msra.mxu0 %v1693
  %1711 = vmatprep.subr.bf16.mxu0 0
  %1712 = vmatpush1.bf16.xpose.msra.mxu0 0
  %1713 = vmatprep.subr.bf16.mxu0 0
  %1714 = vmatpush1.bf16.xpose.msra.mxu0 0
  %1715 = vmatprep.subr.bf16.mxu0 0
  %1716 = vmatpush1.bf16.xpose.msra.mxu0 0
  %1717 = vmatprep.subr.bf16.mxu0 0
  %1718 = vmatpush1.bf16.xpose.msra.mxu0 0
  %1719 = vmatprep.subr.bf16.mxu0 0
  %1720 = vmatpush1.bf16.xpose.msra.mxu0 0
  %1721 = vmatprep.subr.bf16.mxu0 0
  %1722 = vmatpush1.bf16.xpose.msra.mxu0 0
  %1723 = vmatprep.subr.bf16.mxu0 0
  %1724 = vmatpush1.bf16.xpose.msra.mxu0 0
  %1725 = vmatprep.subr.bf16.mxu0 0
  %1726 = vmatpush1.bf16.xpose.msra.mxu0 0
  %1727 = vmatprep.mubr.bf16.mxu0 0
  %1728 = vmatmul.mubr.bf16.gmra.mrb[0].mxu0 %v1648
  %v1729 = vpop.f32.mrb[0].mxu0
  %v1730 = vadd.f32 0.0, %v1729
  %v1731 = vpop.f32.mrb[0].mxu0
  %v1732 = vpop.f32.mrb[0].mxu0
  %v1733 = vadd.f32 0.0, %v1732
  %v1734 = vpop.f32.mrb[0].mxu0
  %1735 = vmatprep.mubr.bf16.mxu0 0
  %1736 = vmatmul.mubr.bf16.gmra.mrb[0].mxu0 %v1651
  %v1737 = vpop.f32.mrb[0].mxu0
  %v1738 = vadd.f32 0.0, %v1737
  %v1739 = vpop.f32.mrb[0].mxu0
  %v1740 = vpop.f32.mrb[0].mxu0
  %v1741 = vadd.f32 0.0, %v1740
  %v1742 = vpop.f32.mrb[0].mxu0
  %1743 = vmatprep.mubr.bf16.mxu0 0
  %1744 = vmatmul.mubr.bf16.gmra.mrb[0].mxu0 %v1654
  %v1745 = vpop.f32.mrb[0].mxu0
  %v1746 = vadd.f32 0.0, %v1745
  %v1747 = vpop.f32.mrb[0].mxu0
  %v1748 = vpop.f32.mrb[0].mxu0
  %v1749 = vadd.f32 0.0, %v1748
  %v1750 = vpop.f32.mrb[0].mxu0
  %1751 = vmatprep.mubr.bf16.mxu0 0
  %1752 = vmatmul.mubr.bf16.gmra.mrb[0].mxu0 %v1657
  %v1753 = vpop.f32.mrb[0].mxu0
  %v1754 = vadd.f32 0.0, %v1753
  %v1755 = vpop.f32.mrb[0].mxu0
  %v1756 = vpop.f32.mrb[0].mxu0
  %v1757 = vadd.f32 0.0, %v1756
  %v1758 = vpop.f32.mrb[0].mxu0
  %1759 = vmatprep.mubr.bf16.mxu0 0
  %1760 = vmatmul.mubr.bf16.gmra.mrb[0].mxu0 %v1660
  %v1761 = vpop.f32.mrb[0].mxu0
  %v1762 = vadd.f32 0.0, %v1761
  %v1763 = vpop.f32.mrb[0].mxu0
  %v1764 = vpop.f32.mrb[0].mxu0
  %v1765 = vadd.f32 0.0, %v1764
  %v1766 = vpop.f32.mrb[0].mxu0
  %1767 = vmatprep.mubr.bf16.mxu0 0
  %1768 = vmatmul.mubr.bf16.gmra.mrb[0].mxu0 %v1663
  %v1769 = vpop.f32.mrb[0].mxu0
  %v1770 = vadd.f32 0.0, %v1769
  %v1771 = vpop.f32.mrb[0].mxu0
  %v1772 = vpop.f32.mrb[0].mxu0
  %v1773 = vadd.f32 0.0, %v1772
  %v1774 = vpop.f32.mrb[0].mxu0
  %1775 = vmatprep.mubr.bf16.mxu0 0
  %1776 = vmatmul.mubr.bf16.gmra.mrb[0].mxu0 %v1666
  %v1777 = vpop.f32.mrb[0].mxu0
  %v1778 = vadd.f32 0.0, %v1777
  %v1779 = vpop.f32.mrb[0].mxu0
  %v1780 = vpop.f32.mrb[0].mxu0
  %v1781 = vadd.f32 0.0, %v1780
  %v1782 = vpop.f32.mrb[0].mxu0
  %1783 = vmatprep.mubr.bf16.mxu0 0
  %1784 = vmatmul.mubr.bf16.gmra.mrb[0].mxu0 %v1669
  %v1785 = vpop.f32.mrb[0].mxu0
  %v1786 = vadd.f32 0.0, %v1785
  %v1787 = vpop.f32.mrb[0].mxu0
  %v1788 = vpop.f32.mrb[0].mxu0
  %v1789 = vadd.f32 0.0, %v1788
  %v1790 = vpop.f32.mrb[0].mxu0
  %1791 = vdwg.mxu0
  %v1792 = vmul.f32 %v1730, 0.25
  %v1793 = vmul.f32 %v1733, 0.25
  %v1794 = vmul.f32 %v1738, 0.25
  %v1795 = vmul.f32 %v1741, 0.25
  %v1796 = vmul.f32 %v1746, 0.25
  %v1797 = vmul.f32 %v1749, 0.25
  %v1798 = vmul.f32 %v1754, 0.25
  %v1799 = vmul.f32 %v1757, 0.25
  %v1800 = vmul.f32 %v1762, 0.25
  %v1801 = vmul.f32 %v1765, 0.25
  %v1802 = vmul.f32 %v1770, 0.25
  %v1803 = vmul.f32 %v1773, 0.25
  %v1804 = vmul.f32 %v1778, 0.25
  %v1805 = vmul.f32 %v1781, 0.25
  %v1806 = vmul.f32 %v1786, 0.25
  %v1807 = vmul.f32 %v1789, 0.25
  %v1808 = vadd.f32 %v1792, %v49
  %v1809 = vadd.f32 %v1793, %v50
  %v1810 = vadd.f32 %v1794, %v51
  %v1811 = vadd.f32 %v1795, %v52
  %v1812 = vadd.f32 %v1796, %v53
  %v1813 = vadd.f32 %v1797, %v54
  %v1814 = vadd.f32 %v1798, %v55
  %v1815 = vadd.f32 %v1799, %v56
  %v1816 = vadd.f32 %v1800, %v57
  %v1817 = vadd.f32 %v1801, %v58
  %v1818 = vadd.f32 %v1802, %v59
  %v1819 = vadd.f32 %v1803, %v60
  %v1820 = vadd.f32 %v1804, %v61
  %v1821 = vadd.f32 %v1805, %v62
  %v1822 = vadd.f32 %v1806, %v63
  %v1823 = vadd.f32 %v1807, %v64
  %1824 = vmax.xlane.f32.xlu0 %v1808
  %v1825 = vpop.xlane.xlu0 %1824
  %1826 = vmax.xlane.f32.xlu0 %v1809
  %v1827 = vpop.xlane.xlu0 %1826
  %1828 = vmax.xlane.f32.xlu0 %v1810
  %v1829 = vpop.xlane.xlu0 %1828
  %1830 = vmax.xlane.f32.xlu0 %v1811
  %v1831 = vpop.xlane.xlu0 %1830
  %1832 = vmax.xlane.f32.xlu0 %v1812
  %v1833 = vpop.xlane.xlu0 %1832
  %1834 = vmax.xlane.f32.xlu0 %v1813
  %v1835 = vpop.xlane.xlu0 %1834
  %1836 = vmax.xlane.f32.xlu0 %v1814
  %v1837 = vpop.xlane.xlu0 %1836
  %1838 = vmax.xlane.f32.xlu0 %v1815
  %v1839 = vpop.xlane.xlu0 %1838
  %1840 = vmax.xlane.f32.xlu0 %v1816
  %v1841 = vpop.xlane.xlu0 %1840
  %1842 = vmax.xlane.f32.xlu0 %v1817
  %v1843 = vpop.xlane.xlu0 %1842
  %1844 = vmax.xlane.f32.xlu0 %v1818
  %v1845 = vpop.xlane.xlu0 %1844
  %1846 = vmax.xlane.f32.xlu0 %v1819
  %v1847 = vpop.xlane.xlu0 %1846
  %1848 = vmax.xlane.f32.xlu0 %v1820
  %v1849 = vpop.xlane.xlu0 %1848
  %1850 = vmax.xlane.f32.xlu0 %v1821
  %v1851 = vpop.xlane.xlu0 %1850
  %1852 = vmax.xlane.f32.xlu0 %v1822
  %v1853 = vpop.xlane.xlu0 %1852
  %1854 = vmax.xlane.f32.xlu0 %v1823
  %v1855 = vpop.xlane.xlu0 %1854
  %v1856 = vsub.f32 %v1808, %v1825
  %v1857 = vsub.f32 %v1809, %v1827
  %v1858 = vsub.f32 %v1810, %v1829
  %v1859 = vsub.f32 %v1811, %v1831
  %v1860 = vsub.f32 %v1812, %v1833
  %v1861 = vsub.f32 %v1813, %v1835
  %v1862 = vsub.f32 %v1814, %v1837
  %v1863 = vsub.f32 %v1815, %v1839
  %v1864 = vsub.f32 %v1816, %v1841
  %v1865 = vsub.f32 %v1817, %v1843
  %v1866 = vsub.f32 %v1818, %v1845
  %v1867 = vsub.f32 %v1819, %v1847
  %v1868 = vsub.f32 %v1820, %v1849
  %v1869 = vsub.f32 %v1821, %v1851
  %v1870 = vsub.f32 %v1822, %v1853
  %v1871 = vsub.f32 %v1823, %v1855
  %v1872 = vmul.f32 %v1856, 1.442695
  %v1873 = vpow.pop %v1872
  %v1874 = vmul.f32 %v1857, 1.442695
  %v1875 = vpow.pop %v1874
  %v1876 = vmul.f32 %v1858, 1.442695
  %v1877 = vpow.pop %v1876
  %v1878 = vmul.f32 %v1859, 1.442695
  %v1879 = vpow.pop %v1878
  %v1880 = vmul.f32 %v1860, 1.442695
  %v1881 = vpow.pop %v1880
  %v1882 = vmul.f32 %v1861, 1.442695
  %v1883 = vpow.pop %v1882
  %v1884 = vmul.f32 %v1862, 1.442695
  %v1885 = vpow.pop %v1884
  %v1886 = vmul.f32 %v1863, 1.442695
  %v1887 = vpow.pop %v1886
  %v1888 = vmul.f32 %v1864, 1.442695
  %v1889 = vpow.pop %v1888
  %v1890 = vmul.f32 %v1865, 1.442695
  %v1891 = vpow.pop %v1890
  %v1892 = vmul.f32 %v1866, 1.442695
  %v1893 = vpow.pop %v1892
  %v1894 = vmul.f32 %v1867, 1.442695
  %v1895 = vpow.pop %v1894
  %v1896 = vmul.f32 %v1868, 1.442695
  %v1897 = vpow.pop %v1896
  %v1898 = vmul.f32 %v1869, 1.442695
  %v1899 = vpow.pop %v1898
  %v1900 = vmul.f32 %v1870, 1.442695
  %v1901 = vpow.pop %v1900
  %v1902 = vmul.f32 %v1871, 1.442695
  %v1903 = vpow.pop %v1902
  %1904 = vadd.xlane.f32.xlu0 %v1873
  %v1905 = vpop.xlane.xlu0 %1904
  %1906 = vadd.xlane.f32.xlu0 %v1875
  %v1907 = vpop.xlane.xlu0 %1906
  %1908 = vadd.xlane.f32.xlu0 %v1877
  %v1909 = vpop.xlane.xlu0 %1908
  %1910 = vadd.xlane.f32.xlu0 %v1879
  %v1911 = vpop.xlane.xlu0 %1910
  %1912 = vadd.xlane.f32.xlu0 %v1881
  %v1913 = vpop.xlane.xlu0 %1912
  %1914 = vadd.xlane.f32.xlu0 %v1883
  %v1915 = vpop.xlane.xlu0 %1914
  %1916 = vadd.xlane.f32.xlu0 %v1885
  %v1917 = vpop.xlane.xlu0 %1916
  %1918 = vadd.xlane.f32.xlu0 %v1887
  %v1919 = vpop.xlane.xlu0 %1918
  %1920 = vadd.xlane.f32.xlu0 %v1889
  %v1921 = vpop.xlane.xlu0 %1920
  %1922 = vadd.xlane.f32.xlu0 %v1891
  %v1923 = vpop.xlane.xlu0 %1922
  %1924 = vadd.xlane.f32.xlu0 %v1893
  %v1925 = vpop.xlane.xlu0 %1924
  %1926 = vadd.xlane.f32.xlu0 %v1895
  %v1927 = vpop.xlane.xlu0 %1926
  %1928 = vadd.xlane.f32.xlu0 %v1897
  %v1929 = vpop.xlane.xlu0 %1928
  %1930 = vadd.xlane.f32.xlu0 %v1899
  %v1931 = vpop.xlane.xlu0 %1930
  %1932 = vadd.xlane.f32.xlu0 %v1901
  %v1933 = vpop.xlane.xlu0 %1932
  %1934 = vadd.xlane.f32.xlu0 %v1903
  %v1935 = vpop.xlane.xlu0 %1934
  %v1936 = vrcp.pop %v1905
  %v1937 = vrcp.pop %v1907
  %v1938 = vrcp.pop %v1909
  %v1939 = vrcp.pop %v1911
  %v1940 = vrcp.pop %v1913
  %v1941 = vrcp.pop %v1915
  %v1942 = vrcp.pop %v1917
  %v1943 = vrcp.pop %v1919
  %v1944 = vrcp.pop %v1921
  %v1945 = vrcp.pop %v1923
  %v1946 = vrcp.pop %v1925
  %v1947 = vrcp.pop %v1927
  %v1948 = vrcp.pop %v1929
  %v1949 = vrcp.pop %v1931
  %v1950 = vrcp.pop %v1933
  %v1951 = vrcp.pop %v1935
  %v1952 = vmul.f32 %v1873, %v1936
  %v1953 = vmul.f32 %v1875, %v1937
  %v1954 = vmul.f32 %v1877, %v1938
  %v1955 = vmul.f32 %v1879, %v1939
  %v1956 = vmul.f32 %v1881, %v1940
  %v1957 = vmul.f32 %v1883, %v1941
  %v1958 = vmul.f32 %v1885, %v1942
  %v1959 = vmul.f32 %v1887, %v1943
  %v1960 = vmul.f32 %v1889, %v1944
  %v1961 = vmul.f32 %v1891, %v1945
  %v1962 = vmul.f32 %v1893, %v1946
  %v1963 = vmul.f32 %v1895, %v1947
  %v1964 = vmul.f32 %v1897, %v1948
  %v1965 = vmul.f32 %v1899, %v1949
  %v1966 = vmul.f32 %v1901, %v1950
  %v1967 = vmul.f32 %v1903, %v1951
  %v1968 = vpack.c.bf16 %v1953, %v1952
  %v1969 = vpack.c.bf16 %v1955, %v1954
  %v1970 = vpack.c.bf16 %v1957, %v1956
  %v1971 = vpack.c.bf16 %v1959, %v1958
  %v1972 = vpack.c.bf16 %v1961, %v1960
  %v1973 = vpack.c.bf16 %v1963, %v1962
  %v1974 = vpack.c.bf16 %v1965, %v1964
  %v1975 = vpack.c.bf16 %v1967, %v1966
  %1976 = vmatprep.subr.bf16.mxu0 0
  %1977 = vmatpush1.bf16.msra.mxu0 %v1615
  %1978 = vmatprep.subr.bf16.mxu0 0
  %1979 = vmatpush1.bf16.msra.mxu0 %v1616
  %1980 = vmatprep.subr.bf16.mxu0 0
  %1981 = vmatpush1.bf16.msra.mxu0 %v1617
  %1982 = vmatprep.subr.bf16.mxu0 0
  %1983 = vmatpush1.bf16.msra.mxu0 %v1618
  %1984 = vmatprep.subr.bf16.mxu0 0
  %1985 = vmatpush1.bf16.msra.mxu0 %v1619
  %1986 = vmatprep.subr.bf16.mxu0 0
  %1987 = vmatpush1.bf16.msra.mxu0 %v1620
  %1988 = vmatprep.subr.bf16.mxu0 0
  %1989 = vmatpush1.bf16.msra.mxu0 %v1621
  %1990 = vmatprep.subr.bf16.mxu0 0
  %1991 = vmatpush1.bf16.msra.mxu0 %v1622
  %1992 = vmatprep.subr.bf16.mxu0 0
  %1993 = vmatpush1.bf16.msra.mxu0 0
  %1994 = vmatprep.subr.bf16.mxu0 0
  %1995 = vmatpush1.bf16.msra.mxu0 0
  %1996 = vmatprep.subr.bf16.mxu0 0
  %1997 = vmatpush1.bf16.msra.mxu0 0
  %1998 = vmatprep.subr.bf16.mxu0 0
  %1999 = vmatpush1.bf16.msra.mxu0 0
  %2000 = vmatprep.subr.bf16.mxu0 0
  %2001 = vmatpush1.bf16.msra.mxu0 0
  %2002 = vmatprep.subr.bf16.mxu0 0
  %2003 = vmatpush1.bf16.msra.mxu0 0
  %2004 = vmatprep.subr.bf16.mxu0 0
  %2005 = vmatpush1.bf16.msra.mxu0 0
  %2006 = vmatprep.subr.bf16.mxu0 0
  %2007 = vmatpush1.bf16.msra.mxu0 0
  %2008 = vmatprep.mubr.bf16.mxu0 0
  %2009 = vmatmul.mubr.bf16.gmra.mrb[0].mxu0 %v1968
  %v2010 = vpop.f32.mrb[0].mxu0
  %v2011 = vadd.f32 0.0, %v2010
  %v2012 = vpop.f32.mrb[0].mxu0
  %v2013 = vpop.f32.mrb[0].mxu0
  %v2014 = vadd.f32 0.0, %v2013
  %v2015 = vpop.f32.mrb[0].mxu0
  %2016 = vmatprep.mubr.bf16.mxu0 0
  %2017 = vmatmul.mubr.bf16.gmra.mrb[0].mxu0 %v1969
  %v2018 = vpop.f32.mrb[0].mxu0
  %v2019 = vadd.f32 0.0, %v2018
  %v2020 = vpop.f32.mrb[0].mxu0
  %v2021 = vpop.f32.mrb[0].mxu0
  %v2022 = vadd.f32 0.0, %v2021
  %v2023 = vpop.f32.mrb[0].mxu0
  %2024 = vmatprep.mubr.bf16.mxu0 0
  %2025 = vmatmul.mubr.bf16.gmra.mrb[0].mxu0 %v1970
  %v2026 = vpop.f32.mrb[0].mxu0
  %v2027 = vadd.f32 0.0, %v2026
  %v2028 = vpop.f32.mrb[0].mxu0
  %v2029 = vpop.f32.mrb[0].mxu0
  %v2030 = vadd.f32 0.0, %v2029
  %v2031 = vpop.f32.mrb[0].mxu0
  %2032 = vmatprep.mubr.bf16.mxu0 0
  %2033 = vmatmul.mubr.bf16.gmra.mrb[0].mxu0 %v1971
  %v2034 = vpop.f32.mrb[0].mxu0
  %v2035 = vadd.f32 0.0, %v2034
  %v2036 = vpop.f32.mrb[0].mxu0
  %v2037 = vpop.f32.mrb[0].mxu0
  %v2038 = vadd.f32 0.0, %v2037
  %v2039 = vpop.f32.mrb[0].mxu0
  %2040 = vmatprep.mubr.bf16.mxu0 0
  %2041 = vmatmul.mubr.bf16.gmra.mrb[0].mxu0 %v1972
  %v2042 = vpop.f32.mrb[0].mxu0
  %v2043 = vadd.f32 0.0, %v2042
  %v2044 = vpop.f32.mrb[0].mxu0
  %v2045 = vpop.f32.mrb[0].mxu0
  %v2046 = vadd.f32 0.0, %v2045
  %v2047 = vpop.f32.mrb[0].mxu0
  %2048 = vmatprep.mubr.bf16.mxu0 0
  %2049 = vmatmul.mubr.bf16.gmra.mrb[0].mxu0 %v1973
  %v2050 = vpop.f32.mrb[0].mxu0
  %v2051 = vadd.f32 0.0, %v2050
  %v2052 = vpop.f32.mrb[0].mxu0
  %v2053 = vpop.f32.mrb[0].mxu0
  %v2054 = vadd.f32 0.0, %v2053
  %v2055 = vpop.f32.mrb[0].mxu0
  %2056 = vmatprep.mubr.bf16.mxu0 0
  %2057 = vmatmul.mubr.bf16.gmra.mrb[0].mxu0 %v1974
  %v2058 = vpop.f32.mrb[0].mxu0
  %v2059 = vadd.f32 0.0, %v2058
  %v2060 = vpop.f32.mrb[0].mxu0
  %v2061 = vpop.f32.mrb[0].mxu0
  %v2062 = vadd.f32 0.0, %v2061
  %v2063 = vpop.f32.mrb[0].mxu0
  %2064 = vmatprep.mubr.bf16.mxu0 0
  %2065 = vmatmul.mubr.bf16.gmra.mrb[0].mxu0 %v1975
  %v2066 = vpop.f32.mrb[0].mxu0
  %v2067 = vadd.f32 0.0, %v2066
  %v2068 = vpop.f32.mrb[0].mxu0
  %v2069 = vpop.f32.mrb[0].mxu0
  %v2070 = vadd.f32 0.0, %v2069
  %v2071 = vpop.f32.mrb[0].mxu0
  %2072 = vdwg.mxu0
  %2077 = vrot.lane.b32.xlu0 %v2027, 16
  %v2078 = vpop.permute.xlu0 %2077
  %2079 = vrot.lane.b32.xlu0 %v2030, 16
  %v2080 = vpop.permute.xlu0 %2079
  %2081 = vrot.lane.b32.xlu0 %v2035, 16
  %v2082 = vpop.permute.xlu0 %2081
  %2083 = vrot.lane.b32.xlu0 %v2038, 16
  %v2084 = vpop.permute.xlu0 %2083
  %2093 = vrot.lane.b32.xlu0 %v2043, 32
  %v2094 = vpop.permute.xlu0 %2093
  %2095 = vrot.lane.b32.xlu0 %v2046, 32
  %v2096 = vpop.permute.xlu0 %2095
  %2097 = vrot.lane.b32.xlu0 %v2051, 32
  %v2098 = vpop.permute.xlu0 %2097
  %2099 = vrot.lane.b32.xlu0 %v2054, 32
  %v2100 = vpop.permute.xlu0 %2099
  %2109 = vrot.lane.b32.xlu0 %v2059, 48
  %v2110 = vpop.permute.xlu0 %2109
  %2111 = vrot.lane.b32.xlu0 %v2062, 48
  %v2112 = vpop.permute.xlu0 %2111
  %2113 = vrot.lane.b32.xlu0 %v2067, 48
  %v2114 = vpop.permute.xlu0 %2113
  %2115 = vrot.lane.b32.xlu0 %v2070, 48
  %v2116 = vpop.permute.xlu0 %2115
  %v2121 = vsel %vm305, %v2011, %v2078
  %v2122 = vsel %vm305, %v2014, %v2080
  %v2123 = vsel %vm305, %v2019, %v2082
  %v2124 = vsel %vm305, %v2022, %v2084
  %v2125 = vsel %vm784, %v2121, %v2094
  %v2126 = vsel %vm784, %v2122, %v2096
  %v2127 = vsel %vm784, %v2123, %v2098
  %v2128 = vsel %vm784, %v2124, %v2100
  %v2129 = vsel %vm789, %v2125, %v2110
  %v2130 = vsel %vm789, %v2126, %v2112
  %v2131 = vsel %vm789, %v2127, %v2114
  %v2132 = vsel %vm789, %v2128, %v2116
  %v2133 = vpack.c.bf16 %v2130, %v2129
  %v2134 = vpack.c.bf16 %v2132, %v2131
  %s2135 = scalar_lea.vmem %s5, 32
  %v2136 = vld [vmem:[%s2135] sm:$0xf]
  %v2137 = vld [vmem:[%s2135 + $0x4] sm:$0xf]
  %v2138 = vld [vmem:[%s2135 + $0x8] sm:$0xf]
  %v2139 = vld [vmem:[%s2135 + $0xc] sm:$0xf]
  %v2140 = vld [vmem:[%s2135 + $0x10] sm:$0xf]
  %v2141 = vld [vmem:[%s2135 + $0x14] sm:$0xf]
  %v2142 = vld [vmem:[%s2135 + $0x18] sm:$0xf]
  %v2143 = vld [vmem:[%s2135 + $0x1c] sm:$0xf]
  %v2144 = vlaneseq
  %v2145 = vshrl.u32 %v2144, 7
  %v2146 = vsub.s32 1, %v2145
  %v2147 = vrot.slane %v1407, %v2146
  %v2156 = vunpack.c.l.b16 %v2136
  %v2157 = vunpack.c.l.b16 %v2137
  %v2158 = vunpack.c.l.b16 %v2138
  %v2159 = vunpack.c.l.b16 %v2139
  %v2160 = vunpack.c.l.b16 %v2140
  %v2161 = vunpack.c.l.b16 %v2141
  %v2162 = vunpack.c.l.b16 %v2142
  %v2163 = vunpack.c.l.b16 %v2143
  %v2164 = vpack.c.b16 %v2157, %v2156
  %v2165 = vpack.c.b16 %v2159, %v2158
  %v2166 = vpack.c.b16 %v2161, %v2160
  %v2167 = vpack.c.b16 %v2163, %v2162
  %v2173 = vsel %vm125, %v2133, 0
  %v2176 = vsel %vm125, %v2134, 0
  %2178 = vmatprep.subr.bf16.mxu0 0
  %2179 = vmatpush1.bf16.msra.mxu0 %v2164
  %2180 = vmatprep.subr.bf16.mxu0 0
  %2181 = vmatpush1.bf16.msra.mxu0 %v2165
  %2182 = vmatprep.subr.bf16.mxu0 0
  %2183 = vmatpush1.bf16.msra.mxu0 %v2166
  %2184 = vmatprep.subr.bf16.mxu0 0
  %2185 = vmatpush1.bf16.msra.mxu0 %v2167
  %2186 = vmatprep.subr.bf16.mxu0 0
  %2187 = vmatpush1.bf16.msra.mxu0 0
  %2188 = vmatprep.subr.bf16.mxu0 0
  %2189 = vmatpush1.bf16.msra.mxu0 0
  %2190 = vmatprep.subr.bf16.mxu0 0
  %2191 = vmatpush1.bf16.msra.mxu0 0
  %2192 = vmatprep.subr.bf16.mxu0 0
  %2193 = vmatpush1.bf16.msra.mxu0 0
  %2194 = vmatprep.subr.bf16.mxu0 0
  %2195 = vmatpush1.bf16.msra.mxu0 0
  %2196 = vmatprep.subr.bf16.mxu0 0
  %2197 = vmatpush1.bf16.msra.mxu0 0
  %2198 = vmatprep.subr.bf16.mxu0 0
  %2199 = vmatpush1.bf16.msra.mxu0 0
  %2200 = vmatprep.subr.bf16.mxu0 0
  %2201 = vmatpush1.bf16.msra.mxu0 0
  %2202 = vmatprep.subr.bf16.mxu0 0
  %2203 = vmatpush1.bf16.msra.mxu0 0
  %2204 = vmatprep.subr.bf16.mxu0 0
  %2205 = vmatpush1.bf16.msra.mxu0 0
  %2206 = vmatprep.subr.bf16.mxu0 0
  %2207 = vmatpush1.bf16.msra.mxu0 0
  %2208 = vmatprep.subr.bf16.mxu0 0
  %2209 = vmatpush1.bf16.msra.mxu0 0
  %2210 = vmatprep.mubr.bf16.mxu0 0
  %2211 = vmatmul.mubr.bf16.gmra.mrb[0].mxu0 %v2173
  %v2212 = vpop.f32.mrb[0].mxu0
  %v2213 = vadd.f32 %v2147, %v2212
  %v2214 = vpop.f32.mrb[0].mxu0
  %v2215 = vpop.f32.mrb[0].mxu0
  %v2216 = vadd.f32 %v2147, %v2215
  %v2217 = vpop.f32.mrb[0].mxu0
  %2218 = vmatprep.mubr.bf16.mxu0 0
  %2219 = vmatmul.mubr.bf16.gmra.mrb[0].mxu0 %v2176
  %v2220 = vpop.f32.mrb[0].mxu0
  %v2221 = vadd.f32 %v2147, %v2220
  %v2222 = vpop.f32.mrb[0].mxu0
  %v2223 = vpop.f32.mrb[0].mxu0
  %v2224 = vadd.f32 %v2147, %v2223
  %v2225 = vpop.f32.mrb[0].mxu0
  %2226 = vdwg.mxu0
  %v2227 = vadd.f32 %v1402, %v2213
  %v2228 = vadd.f32 %v1403, %v2216
  %v2229 = vadd.f32 %v1404, %v2221
  %v2230 = vadd.f32 %v1405, %v2224
  %v2231 = vsel %vm125, %v2227, 0.0
  %2232 = vadd.xlane.f32.xlu0 %v2231
  %v2233 = vpop.xlane.xlu0 %2232
  %v2234 = vsel %vm125, %v2228, 0.0
  %2235 = vadd.xlane.f32.xlu0 %v2234
  %v2236 = vpop.xlane.xlu0 %2235
  %v2237 = vsel %vm125, %v2229, 0.0
  %2238 = vadd.xlane.f32.xlu0 %v2237
  %v2239 = vpop.xlane.xlu0 %2238
  %v2240 = vsel %vm125, %v2230, 0.0
  %2241 = vadd.xlane.f32.xlu0 %v2240
  %v2242 = vpop.xlane.xlu0 %2241
  %v2243 = vmul.f32 %v2233, %v903
  %v2244 = vmul.f32 %v2236, %v903
  %v2245 = vmul.f32 %v2239, %v903
  %v2246 = vmul.f32 %v2242, %v903
  %v2247 = vsub.f32 %v2227, %v2243
  %v2248 = vsub.f32 %v2228, %v2244
  %v2249 = vsub.f32 %v2229, %v2245
  %v2250 = vsub.f32 %v2230, %v2246
  %v2251 = vmul.f32 %v2247, %v2247
  %v2252 = vmul.f32 %v2248, %v2248
  %v2253 = vmul.f32 %v2249, %v2249
  %v2254 = vmul.f32 %v2250, %v2250
  %v2255 = vsel %vm125, %v2251, 0.0
  %2256 = vadd.xlane.f32.xlu0 %v2255
  %v2257 = vpop.xlane.xlu0 %2256
  %v2258 = vsel %vm125, %v2252, 0.0
  %2259 = vadd.xlane.f32.xlu0 %v2258
  %v2260 = vpop.xlane.xlu0 %2259
  %v2261 = vsel %vm125, %v2253, 0.0
  %2262 = vadd.xlane.f32.xlu0 %v2261
  %v2263 = vpop.xlane.xlu0 %2262
  %v2264 = vsel %vm125, %v2254, 0.0
  %2265 = vadd.xlane.f32.xlu0 %v2264
  %v2266 = vpop.xlane.xlu0 %2265
  %v2267 = vmul.f32 %v2257, %v903
  %v2268 = vmul.f32 %v2260, %v903
  %v2269 = vmul.f32 %v2263, %v903
  %v2270 = vmul.f32 %v2266, %v903
  %v2271 = vadd.f32 %v2267, 1e-12
  %v2272 = vadd.f32 %v2268, 1e-12
  %v2273 = vadd.f32 %v2269, 1e-12
  %v2274 = vadd.f32 %v2270, 1e-12
  %v2275 = vrsqrt.pop %v2271
  %v2276 = vrsqrt.pop %v2272
  %v2277 = vrsqrt.pop %v2273
  %v2278 = vrsqrt.pop %v2274
  %v2279 = vmul.f32 %v2247, %v2275
  %v2280 = vmul.f32 %v2248, %v2276
  %v2281 = vmul.f32 %v2249, %v2277
  %v2282 = vmul.f32 %v2250, %v2278
  %v2283 = vlaneseq
  %v2284 = vshrl.u32 %v2283, 7
  %v2285 = vsub.s32 2, %v2284
  %v2286 = vrot.slane %v1407, %v2285
  %v2287 = vmul.f32 %v2279, %v2286
  %v2288 = vmul.f32 %v2280, %v2286
  %v2289 = vmul.f32 %v2281, %v2286
  %v2290 = vmul.f32 %v2282, %v2286
  %v2291 = vlaneseq
  %v2292 = vshrl.u32 %v2291, 7
  %v2293 = vsub.s32 3, %v2292
  %v2294 = vrot.slane %v1407, %v2293
  %v2295 = vadd.f32 %v2287, %v2294
  %v2296 = vadd.f32 %v2288, %v2294
  %v2297 = vadd.f32 %v2289, %v2294
  %v2298 = vadd.f32 %v2290, %v2294
  %v2299 = vpack.c.bf16 %v2296, %v2295
  %v2300 = vpack.c.bf16 %v2298, %v2297
  %s2301 = scalar_lea.vmem %s6, 64
  %v2302 = vld [vmem:[%s2301] sm:$0xff]
  %v2303 = vld [vmem:[%s2301 + $0x8] sm:$0xff]
  %v2304 = vld [vmem:[%s2301 + $0x10] sm:$0xff]
  %v2305 = vld [vmem:[%s2301 + $0x18] sm:$0xff]
  %v2306 = vld [vmem:[%s2301 + $0x20] sm:$0xff]
  %v2307 = vld [vmem:[%s2301 + $0x28] sm:$0xff]
  %v2308 = vld [vmem:[%s2301 + $0x30] sm:$0xff]
  %v2309 = vld [vmem:[%s2301 + $0x38] sm:$0xff]
  %v2310 = vlaneseq
  %v2311 = vshrl.u32 %v2310, 7
  %v2312 = vsub.s32 4, %v2311
  %v2313 = vrot.slane %v1407, %v2312
  %v2314 = vlaneseq
  %v2315 = vshrl.u32 %v2314, 7
  %v2316 = vsub.s32 4, %v2315
  %v2317 = vrot.slane %v1408, %v2316
  %v2326 = vunpack.c.l.b16 %v2302
  %v2327 = vunpack.c.h.b16 %v2302
  %v2328 = vunpack.c.l.b16 %v2303
  %v2329 = vunpack.c.h.b16 %v2303
  %v2330 = vunpack.c.l.b16 %v2304
  %v2331 = vunpack.c.h.b16 %v2304
  %v2332 = vunpack.c.l.b16 %v2305
  %v2333 = vunpack.c.h.b16 %v2305
  %v2334 = vunpack.c.l.b16 %v2306
  %v2335 = vunpack.c.h.b16 %v2306
  %v2336 = vunpack.c.l.b16 %v2307
  %v2337 = vunpack.c.h.b16 %v2307
  %v2338 = vunpack.c.l.b16 %v2308
  %v2339 = vunpack.c.h.b16 %v2308
  %v2340 = vunpack.c.l.b16 %v2309
  %v2341 = vunpack.c.h.b16 %v2309
  %v2342 = vpack.c.b16 %v2328, %v2326
  %v2343 = vpack.c.b16 %v2329, %v2327
  %v2344 = vpack.c.b16 %v2332, %v2330
  %v2345 = vpack.c.b16 %v2333, %v2331
  %v2346 = vpack.c.b16 %v2336, %v2334
  %v2347 = vpack.c.b16 %v2337, %v2335
  %v2348 = vpack.c.b16 %v2340, %v2338
  %v2349 = vpack.c.b16 %v2341, %v2339
  %v2359 = vsel %vm125, %v2299, 0
  %v2362 = vsel %vm125, %v2300, 0
  %2364 = vmatprep.subr.bf16.mxu0 %v2343
  %2365 = vmatpush1.bf16.msra.mxu0 %v2342
  %2366 = vmatprep.subr.bf16.mxu0 %v2345
  %2367 = vmatpush1.bf16.msra.mxu0 %v2344
  %2368 = vmatprep.subr.bf16.mxu0 %v2347
  %2369 = vmatpush1.bf16.msra.mxu0 %v2346
  %2370 = vmatprep.subr.bf16.mxu0 %v2349
  %2371 = vmatpush1.bf16.msra.mxu0 %v2348
  %2372 = vmatprep.subr.bf16.mxu0 0
  %2373 = vmatpush1.bf16.msra.mxu0 0
  %2374 = vmatprep.subr.bf16.mxu0 0
  %2375 = vmatpush1.bf16.msra.mxu0 0
  %2376 = vmatprep.subr.bf16.mxu0 0
  %2377 = vmatpush1.bf16.msra.mxu0 0
  %2378 = vmatprep.subr.bf16.mxu0 0
  %2379 = vmatpush1.bf16.msra.mxu0 0
  %2380 = vmatprep.subr.bf16.mxu0 0
  %2381 = vmatpush1.bf16.msra.mxu0 0
  %2382 = vmatprep.subr.bf16.mxu0 0
  %2383 = vmatpush1.bf16.msra.mxu0 0
  %2384 = vmatprep.subr.bf16.mxu0 0
  %2385 = vmatpush1.bf16.msra.mxu0 0
  %2386 = vmatprep.subr.bf16.mxu0 0
  %2387 = vmatpush1.bf16.msra.mxu0 0
  %2388 = vmatprep.subr.bf16.mxu0 0
  %2389 = vmatpush1.bf16.msra.mxu0 0
  %2390 = vmatprep.subr.bf16.mxu0 0
  %2391 = vmatpush1.bf16.msra.mxu0 0
  %2392 = vmatprep.subr.bf16.mxu0 0
  %2393 = vmatpush1.bf16.msra.mxu0 0
  %2394 = vmatprep.subr.bf16.mxu0 0
  %2395 = vmatpush1.bf16.msra.mxu0 0
  %2396 = vmatprep.mubr.bf16.mxu0 0
  %2397 = vmatmul.mubr.bf16.gmra.mrb[0].mxu0 %v2359
  %v2398 = vpop.f32.mrb[0].mxu0
  %v2399 = vadd.f32 %v2313, %v2398
  %v2400 = vpop.f32.mrb[0].mxu0
  %v2401 = vadd.f32 %v2317, %v2400
  %v2402 = vpop.f32.mrb[0].mxu0
  %v2403 = vadd.f32 %v2313, %v2402
  %v2404 = vpop.f32.mrb[0].mxu0
  %v2405 = vadd.f32 %v2317, %v2404
  %2406 = vmatprep.mubr.bf16.mxu0 0
  %2407 = vmatmul.mubr.bf16.gmra.mrb[0].mxu0 %v2362
  %v2408 = vpop.f32.mrb[0].mxu0
  %v2409 = vadd.f32 %v2313, %v2408
  %v2410 = vpop.f32.mrb[0].mxu0
  %v2411 = vadd.f32 %v2317, %v2410
  %v2412 = vpop.f32.mrb[0].mxu0
  %v2413 = vadd.f32 %v2313, %v2412
  %v2414 = vpop.f32.mrb[0].mxu0
  %v2415 = vadd.f32 %v2317, %v2414
  %2416 = vdwg.mxu0
  %v2417 = vmul.f32 %v2399, 0.5
  %v2418 = vmul.f32 %v2401, 0.5
  %v2419 = vmul.f32 %v2403, 0.5
  %v2420 = vmul.f32 %v2405, 0.5
  %v2421 = vmul.f32 %v2409, 0.5
  %v2422 = vmul.f32 %v2411, 0.5
  %v2423 = vmul.f32 %v2413, 0.5
  %v2424 = vmul.f32 %v2415, 0.5
  %v2425 = vmul.f32 %v2399, 0.044715
  %v2426 = vmul.f32 %v2401, 0.044715
  %v2427 = vmul.f32 %v2403, 0.044715
  %v2428 = vmul.f32 %v2405, 0.044715
  %v2429 = vmul.f32 %v2409, 0.044715
  %v2430 = vmul.f32 %v2411, 0.044715
  %v2431 = vmul.f32 %v2413, 0.044715
  %v2432 = vmul.f32 %v2415, 0.044715
  %v2433 = vmul.f32 %v2425, %v2399
  %v2434 = vmul.f32 %v2426, %v2401
  %v2435 = vmul.f32 %v2427, %v2403
  %v2436 = vmul.f32 %v2428, %v2405
  %v2437 = vmul.f32 %v2429, %v2409
  %v2438 = vmul.f32 %v2430, %v2411
  %v2439 = vmul.f32 %v2431, %v2413
  %v2440 = vmul.f32 %v2432, %v2415
  %v2441 = vmul.f32 %v2433, %v2399
  %v2442 = vmul.f32 %v2434, %v2401
  %v2443 = vmul.f32 %v2435, %v2403
  %v2444 = vmul.f32 %v2436, %v2405
  %v2445 = vmul.f32 %v2437, %v2409
  %v2446 = vmul.f32 %v2438, %v2411
  %v2447 = vmul.f32 %v2439, %v2413
  %v2448 = vmul.f32 %v2440, %v2415
  %v2449 = vadd.f32 %v2399, %v2441
  %v2450 = vadd.f32 %v2401, %v2442
  %v2451 = vadd.f32 %v2403, %v2443
  %v2452 = vadd.f32 %v2405, %v2444
  %v2453 = vadd.f32 %v2409, %v2445
  %v2454 = vadd.f32 %v2411, %v2446
  %v2455 = vadd.f32 %v2413, %v2447
  %v2456 = vadd.f32 %v2415, %v2448
  %v2457 = vmul.f32 %v2449, 0.7978846
  %v2458 = vmul.f32 %v2450, 0.7978846
  %v2459 = vmul.f32 %v2451, 0.7978846
  %v2460 = vmul.f32 %v2452, 0.7978846
  %v2461 = vmul.f32 %v2453, 0.7978846
  %v2462 = vmul.f32 %v2454, 0.7978846
  %v2463 = vmul.f32 %v2455, 0.7978846
  %v2464 = vmul.f32 %v2456, 0.7978846
  %v2465 = vtanh.pop %v2457
  %v2466 = vtanh.pop %v2458
  %v2467 = vtanh.pop %v2459
  %v2468 = vtanh.pop %v2460
  %v2469 = vtanh.pop %v2461
  %v2470 = vtanh.pop %v2462
  %v2471 = vtanh.pop %v2463
  %v2472 = vtanh.pop %v2464
  %v2473 = vadd.f32 %v2465, 1.0
  %v2474 = vadd.f32 %v2466, 1.0
  %v2475 = vadd.f32 %v2467, 1.0
  %v2476 = vadd.f32 %v2468, 1.0
  %v2477 = vadd.f32 %v2469, 1.0
  %v2478 = vadd.f32 %v2470, 1.0
  %v2479 = vadd.f32 %v2471, 1.0
  %v2480 = vadd.f32 %v2472, 1.0
  %v2481 = vmul.f32 %v2417, %v2473
  %v2482 = vmul.f32 %v2418, %v2474
  %v2483 = vmul.f32 %v2419, %v2475
  %v2484 = vmul.f32 %v2420, %v2476
  %v2485 = vmul.f32 %v2421, %v2477
  %v2486 = vmul.f32 %v2422, %v2478
  %v2487 = vmul.f32 %v2423, %v2479
  %v2488 = vmul.f32 %v2424, %v2480
  %v2489 = vpack.c.bf16 %v2483, %v2481
  %v2490 = vpack.c.bf16 %v2484, %v2482
  %v2491 = vpack.c.bf16 %v2487, %v2485
  %v2492 = vpack.c.bf16 %v2488, %v2486
  %s2493 = scalar_lea.vmem %s7, 128
  %v2494 = vld [vmem:[%s2493] sm:$0xf]
  %v2495 = vld [vmem:[%s2493 + $0x4] sm:$0xf]
  %v2496 = vld [vmem:[%s2493 + $0x8] sm:$0xf]
  %v2497 = vld [vmem:[%s2493 + $0xc] sm:$0xf]
  %v2498 = vld [vmem:[%s2493 + $0x10] sm:$0xf]
  %v2499 = vld [vmem:[%s2493 + $0x14] sm:$0xf]
  %v2500 = vld [vmem:[%s2493 + $0x18] sm:$0xf]
  %v2501 = vld [vmem:[%s2493 + $0x1c] sm:$0xf]
  %v2502 = vld [vmem:[%s2493 + $0x20] sm:$0xf]
  %v2503 = vld [vmem:[%s2493 + $0x24] sm:$0xf]
  %v2504 = vld [vmem:[%s2493 + $0x28] sm:$0xf]
  %v2505 = vld [vmem:[%s2493 + $0x2c] sm:$0xf]
  %v2506 = vld [vmem:[%s2493 + $0x30] sm:$0xf]
  %v2507 = vld [vmem:[%s2493 + $0x34] sm:$0xf]
  %v2508 = vld [vmem:[%s2493 + $0x38] sm:$0xf]
  %v2509 = vld [vmem:[%s2493 + $0x3c] sm:$0xf]
  %v2510 = vld [vmem:[%s2493 + $0x40] sm:$0xf]
  %v2511 = vld [vmem:[%s2493 + $0x44] sm:$0xf]
  %v2512 = vld [vmem:[%s2493 + $0x48] sm:$0xf]
  %v2513 = vld [vmem:[%s2493 + $0x4c] sm:$0xf]
  %v2514 = vld [vmem:[%s2493 + $0x50] sm:$0xf]
  %v2515 = vld [vmem:[%s2493 + $0x54] sm:$0xf]
  %v2516 = vld [vmem:[%s2493 + $0x58] sm:$0xf]
  %v2517 = vld [vmem:[%s2493 + $0x5c] sm:$0xf]
  %v2518 = vld [vmem:[%s2493 + $0x60] sm:$0xf]
  %v2519 = vld [vmem:[%s2493 + $0x64] sm:$0xf]
  %v2520 = vld [vmem:[%s2493 + $0x68] sm:$0xf]
  %v2521 = vld [vmem:[%s2493 + $0x6c] sm:$0xf]
  %v2522 = vld [vmem:[%s2493 + $0x70] sm:$0xf]
  %v2523 = vld [vmem:[%s2493 + $0x74] sm:$0xf]
  %v2524 = vld [vmem:[%s2493 + $0x78] sm:$0xf]
  %v2525 = vld [vmem:[%s2493 + $0x7c] sm:$0xf]
  %v2526 = vlaneseq
  %v2527 = vshrl.u32 %v2526, 7
  %v2528 = vsub.s32 5, %v2527
  %v2529 = vrot.slane %v1407, %v2528
  %v2562 = vunpack.c.l.b16 %v2494
  %v2563 = vunpack.c.l.b16 %v2495
  %v2564 = vunpack.c.l.b16 %v2496
  %v2565 = vunpack.c.l.b16 %v2497
  %v2566 = vunpack.c.l.b16 %v2498
  %v2567 = vunpack.c.l.b16 %v2499
  %v2568 = vunpack.c.l.b16 %v2500
  %v2569 = vunpack.c.l.b16 %v2501
  %v2570 = vunpack.c.l.b16 %v2502
  %v2571 = vunpack.c.l.b16 %v2503
  %v2572 = vunpack.c.l.b16 %v2504
  %v2573 = vunpack.c.l.b16 %v2505
  %v2574 = vunpack.c.l.b16 %v2506
  %v2575 = vunpack.c.l.b16 %v2507
  %v2576 = vunpack.c.l.b16 %v2508
  %v2577 = vunpack.c.l.b16 %v2509
  %v2578 = vunpack.c.l.b16 %v2510
  %v2579 = vunpack.c.l.b16 %v2511
  %v2580 = vunpack.c.l.b16 %v2512
  %v2581 = vunpack.c.l.b16 %v2513
  %v2582 = vunpack.c.l.b16 %v2514
  %v2583 = vunpack.c.l.b16 %v2515
  %v2584 = vunpack.c.l.b16 %v2516
  %v2585 = vunpack.c.l.b16 %v2517
  %v2586 = vunpack.c.l.b16 %v2518
  %v2587 = vunpack.c.l.b16 %v2519
  %v2588 = vunpack.c.l.b16 %v2520
  %v2589 = vunpack.c.l.b16 %v2521
  %v2590 = vunpack.c.l.b16 %v2522
  %v2591 = vunpack.c.l.b16 %v2523
  %v2592 = vunpack.c.l.b16 %v2524
  %v2593 = vunpack.c.l.b16 %v2525
  %v2594 = vpack.c.b16 %v2563, %v2562
  %v2595 = vpack.c.b16 %v2565, %v2564
  %v2596 = vpack.c.b16 %v2567, %v2566
  %v2597 = vpack.c.b16 %v2569, %v2568
  %v2598 = vpack.c.b16 %v2571, %v2570
  %v2599 = vpack.c.b16 %v2573, %v2572
  %v2600 = vpack.c.b16 %v2575, %v2574
  %v2601 = vpack.c.b16 %v2577, %v2576
  %v2602 = vpack.c.b16 %v2579, %v2578
  %v2603 = vpack.c.b16 %v2581, %v2580
  %v2604 = vpack.c.b16 %v2583, %v2582
  %v2605 = vpack.c.b16 %v2585, %v2584
  %v2606 = vpack.c.b16 %v2587, %v2586
  %v2607 = vpack.c.b16 %v2589, %v2588
  %v2608 = vpack.c.b16 %v2591, %v2590
  %v2609 = vpack.c.b16 %v2593, %v2592
  %2626 = vmatprep.subr.bf16.mxu0 0
  %2627 = vmatpush1.bf16.msra.mxu0 %v2594
  %2628 = vmatprep.subr.bf16.mxu0 0
  %2629 = vmatpush1.bf16.msra.mxu0 %v2595
  %2630 = vmatprep.subr.bf16.mxu0 0
  %2631 = vmatpush1.bf16.msra.mxu0 %v2596
  %2632 = vmatprep.subr.bf16.mxu0 0
  %2633 = vmatpush1.bf16.msra.mxu0 %v2597
  %2634 = vmatprep.subr.bf16.mxu0 0
  %2635 = vmatpush1.bf16.msra.mxu0 %v2598
  %2636 = vmatprep.subr.bf16.mxu0 0
  %2637 = vmatpush1.bf16.msra.mxu0 %v2599
  %2638 = vmatprep.subr.bf16.mxu0 0
  %2639 = vmatpush1.bf16.msra.mxu0 %v2600
  %2640 = vmatprep.subr.bf16.mxu0 0
  %2641 = vmatpush1.bf16.msra.mxu0 %v2601
  %2642 = vmatprep.subr.bf16.mxu0 0
  %2643 = vmatpush1.bf16.msra.mxu0 %v2602
  %2644 = vmatprep.subr.bf16.mxu0 0
  %2645 = vmatpush1.bf16.msra.mxu0 %v2603
  %2646 = vmatprep.subr.bf16.mxu0 0
  %2647 = vmatpush1.bf16.msra.mxu0 %v2604
  %2648 = vmatprep.subr.bf16.mxu0 0
  %2649 = vmatpush1.bf16.msra.mxu0 %v2605
  %2650 = vmatprep.subr.bf16.mxu0 0
  %2651 = vmatpush1.bf16.msra.mxu0 %v2606
  %2652 = vmatprep.subr.bf16.mxu0 0
  %2653 = vmatpush1.bf16.msra.mxu0 %v2607
  %2654 = vmatprep.subr.bf16.mxu0 0
  %2655 = vmatpush1.bf16.msra.mxu0 %v2608
  %2656 = vmatprep.subr.bf16.mxu0 0
  %2657 = vmatpush1.bf16.msra.mxu0 %v2609
  %2658 = vmatprep.mubr.bf16.mxu0 %v2490
  %2659 = vmatmul.mubr.bf16.gmra.mrb[0].mxu0 %v2489
  %v2660 = vpop.f32.mrb[0].mxu0
  %v2661 = vadd.f32 %v2529, %v2660
  %v2662 = vpop.f32.mrb[0].mxu0
  %v2663 = vpop.f32.mrb[0].mxu0
  %v2664 = vadd.f32 %v2529, %v2663
  %v2665 = vpop.f32.mrb[0].mxu0
  %2666 = vmatprep.mubr.bf16.mxu0 %v2492
  %2667 = vmatmul.mubr.bf16.gmra.mrb[0].mxu0 %v2491
  %v2668 = vpop.f32.mrb[0].mxu0
  %v2669 = vadd.f32 %v2529, %v2668
  %v2670 = vpop.f32.mrb[0].mxu0
  %v2671 = vpop.f32.mrb[0].mxu0
  %v2672 = vadd.f32 %v2529, %v2671
  %v2673 = vpop.f32.mrb[0].mxu0
  %2674 = vdwg.mxu0
  %v2675 = vadd.f32 %v2295, %v2661
  %v2676 = vadd.f32 %v2296, %v2664
  %v2677 = vadd.f32 %v2297, %v2669
  %v2678 = vadd.f32 %v2298, %v2672
  %v2679 = vsel %vm125, %v2675, 0.0
  %2680 = vadd.xlane.f32.xlu0 %v2679
  %v2681 = vpop.xlane.xlu0 %2680
  %v2682 = vsel %vm125, %v2676, 0.0
  %2683 = vadd.xlane.f32.xlu0 %v2682
  %v2684 = vpop.xlane.xlu0 %2683
  %v2685 = vsel %vm125, %v2677, 0.0
  %2686 = vadd.xlane.f32.xlu0 %v2685
  %v2687 = vpop.xlane.xlu0 %2686
  %v2688 = vsel %vm125, %v2678, 0.0
  %2689 = vadd.xlane.f32.xlu0 %v2688
  %v2690 = vpop.xlane.xlu0 %2689
  %v2691 = vmul.f32 %v2681, %v903
  %v2692 = vmul.f32 %v2684, %v903
  %v2693 = vmul.f32 %v2687, %v903
  %v2694 = vmul.f32 %v2690, %v903
  %v2695 = vsub.f32 %v2675, %v2691
  %v2696 = vsub.f32 %v2676, %v2692
  %v2697 = vsub.f32 %v2677, %v2693
  %v2698 = vsub.f32 %v2678, %v2694
  %v2699 = vmul.f32 %v2695, %v2695
  %v2700 = vmul.f32 %v2696, %v2696
  %v2701 = vmul.f32 %v2697, %v2697
  %v2702 = vmul.f32 %v2698, %v2698
  %v2703 = vsel %vm125, %v2699, 0.0
  %2704 = vadd.xlane.f32.xlu0 %v2703
  %v2705 = vpop.xlane.xlu0 %2704
  %v2706 = vsel %vm125, %v2700, 0.0
  %2707 = vadd.xlane.f32.xlu0 %v2706
  %v2708 = vpop.xlane.xlu0 %2707
  %v2709 = vsel %vm125, %v2701, 0.0
  %2710 = vadd.xlane.f32.xlu0 %v2709
  %v2711 = vpop.xlane.xlu0 %2710
  %v2712 = vsel %vm125, %v2702, 0.0
  %2713 = vadd.xlane.f32.xlu0 %v2712
  %v2714 = vpop.xlane.xlu0 %2713
  %v2715 = vmul.f32 %v2705, %v903
  %v2716 = vmul.f32 %v2708, %v903
  %v2717 = vmul.f32 %v2711, %v903
  %v2718 = vmul.f32 %v2714, %v903
  %v2719 = vadd.f32 %v2715, 1e-12
  %v2720 = vadd.f32 %v2716, 1e-12
  %v2721 = vadd.f32 %v2717, 1e-12
  %v2722 = vadd.f32 %v2718, 1e-12
  %v2723 = vrsqrt.pop %v2719
  %v2724 = vrsqrt.pop %v2720
  %v2725 = vrsqrt.pop %v2721
  %v2726 = vrsqrt.pop %v2722
  %v2727 = vmul.f32 %v2695, %v2723
  %v2728 = vmul.f32 %v2696, %v2724
  %v2729 = vmul.f32 %v2697, %v2725
  %v2730 = vmul.f32 %v2698, %v2726
  %v2731 = vlaneseq
  %v2732 = vshrl.u32 %v2731, 7
  %v2733 = vsub.s32 6, %v2732
  %v2734 = vrot.slane %v1407, %v2733
  %v2735 = vmul.f32 %v2727, %v2734
  %v2736 = vmul.f32 %v2728, %v2734
  %v2737 = vmul.f32 %v2729, %v2734
  %v2738 = vmul.f32 %v2730, %v2734
  %v2739 = vlaneseq
  %v2740 = vshrl.u32 %v2739, 7
  %v2741 = vsub.s32 7, %v2740
  %v2742 = vrot.slane %v1407, %v2741
  %v2743 = vadd.f32 %v2735, %v2742
  %v2744 = vadd.f32 %v2736, %v2742
  %v2745 = vadd.f32 %v2737, %v2742
  %v2746 = vadd.f32 %v2738, %v2742
  %v2747 = vld [vmem:[%s12] sm:$0xff]
  %v2748 = vld [vmem:[%s12 + $0x8] sm:$0xff]
  %v2749 = vpack.c.bf16 %v2744, %v2743
  %v2750 = vpack.c.bf16 %v2746, %v2745
  %v2751 = vld [vmem:[%s9] sm:$0xff]
  %v2752 = vld [vmem:[%s9 + $0x8] sm:$0xff]
  %v2753 = vld [vmem:[%s9 + $0x10] sm:$0xff]
  %v2754 = vld [vmem:[%s9 + $0x18] sm:$0xff]
  %v2755 = vld [vmem:[%s9 + $0x20] sm:$0xff]
  %v2756 = vld [vmem:[%s9 + $0x28] sm:$0xff]
  %v2757 = vld [vmem:[%s9 + $0x30] sm:$0xff]
  %v2758 = vld [vmem:[%s9 + $0x38] sm:$0xff]
  %v2759 = vlaneseq
  %v2760 = vshrl.u32 %v2759, 7
  %v2761 = vsub.s32 0, %v2760
  %v2762 = vrot.slane %v2747, %v2761
  %v2763 = vlaneseq
  %v2764 = vshrl.u32 %v2763, 7
  %v2765 = vsub.s32 0, %v2764
  %v2766 = vrot.slane %v2748, %v2765
  %v2775 = vunpack.c.l.b16 %v2751
  %v2776 = vunpack.c.h.b16 %v2751
  %v2777 = vunpack.c.l.b16 %v2752
  %v2778 = vunpack.c.h.b16 %v2752
  %v2779 = vunpack.c.l.b16 %v2753
  %v2780 = vunpack.c.h.b16 %v2753
  %v2781 = vunpack.c.l.b16 %v2754
  %v2782 = vunpack.c.h.b16 %v2754
  %v2783 = vunpack.c.l.b16 %v2755
  %v2784 = vunpack.c.h.b16 %v2755
  %v2785 = vunpack.c.l.b16 %v2756
  %v2786 = vunpack.c.h.b16 %v2756
  %v2787 = vunpack.c.l.b16 %v2757
  %v2788 = vunpack.c.h.b16 %v2757
  %v2789 = vunpack.c.l.b16 %v2758
  %v2790 = vunpack.c.h.b16 %v2758
  %v2791 = vpack.c.b16 %v2777, %v2775
  %v2792 = vpack.c.b16 %v2778, %v2776
  %v2793 = vpack.c.b16 %v2781, %v2779
  %v2794 = vpack.c.b16 %v2782, %v2780
  %v2795 = vpack.c.b16 %v2785, %v2783
  %v2796 = vpack.c.b16 %v2786, %v2784
  %v2797 = vpack.c.b16 %v2789, %v2787
  %v2798 = vpack.c.b16 %v2790, %v2788
  %v2808 = vsel %vm125, %v2749, 0
  %v2811 = vsel %vm125, %v2750, 0
  %2813 = vmatprep.subr.bf16.mxu0 %v2792
  %2814 = vmatpush1.bf16.msra.mxu0 %v2791
  %2815 = vmatprep.subr.bf16.mxu0 %v2794
  %2816 = vmatpush1.bf16.msra.mxu0 %v2793
  %2817 = vmatprep.subr.bf16.mxu0 %v2796
  %2818 = vmatpush1.bf16.msra.mxu0 %v2795
  %2819 = vmatprep.subr.bf16.mxu0 %v2798
  %2820 = vmatpush1.bf16.msra.mxu0 %v2797
  %2821 = vmatprep.subr.bf16.mxu0 0
  %2822 = vmatpush1.bf16.msra.mxu0 0
  %2823 = vmatprep.subr.bf16.mxu0 0
  %2824 = vmatpush1.bf16.msra.mxu0 0
  %2825 = vmatprep.subr.bf16.mxu0 0
  %2826 = vmatpush1.bf16.msra.mxu0 0
  %2827 = vmatprep.subr.bf16.mxu0 0
  %2828 = vmatpush1.bf16.msra.mxu0 0
  %2829 = vmatprep.subr.bf16.mxu0 0
  %2830 = vmatpush1.bf16.msra.mxu0 0
  %2831 = vmatprep.subr.bf16.mxu0 0
  %2832 = vmatpush1.bf16.msra.mxu0 0
  %2833 = vmatprep.subr.bf16.mxu0 0
  %2834 = vmatpush1.bf16.msra.mxu0 0
  %2835 = vmatprep.subr.bf16.mxu0 0
  %2836 = vmatpush1.bf16.msra.mxu0 0
  %2837 = vmatprep.subr.bf16.mxu0 0
  %2838 = vmatpush1.bf16.msra.mxu0 0
  %2839 = vmatprep.subr.bf16.mxu0 0
  %2840 = vmatpush1.bf16.msra.mxu0 0
  %2841 = vmatprep.subr.bf16.mxu0 0
  %2842 = vmatpush1.bf16.msra.mxu0 0
  %2843 = vmatprep.subr.bf16.mxu0 0
  %2844 = vmatpush1.bf16.msra.mxu0 0
  %2845 = vmatprep.mubr.bf16.mxu0 0
  %2846 = vmatmul.mubr.bf16.gmra.mrb[0].mxu0 %v2808
  %v2847 = vpop.f32.mrb[0].mxu0
  %v2848 = vadd.f32 %v2762, %v2847
  %v2849 = vpop.f32.mrb[0].mxu0
  %v2850 = vadd.f32 %v2766, %v2849
  %v2851 = vpop.f32.mrb[0].mxu0
  %v2852 = vadd.f32 %v2762, %v2851
  %v2853 = vpop.f32.mrb[0].mxu0
  %v2854 = vadd.f32 %v2766, %v2853
  %2855 = vmatprep.mubr.bf16.mxu0 0
  %2856 = vmatmul.mubr.bf16.gmra.mrb[0].mxu0 %v2811
  %v2857 = vpop.f32.mrb[0].mxu0
  %v2858 = vadd.f32 %v2762, %v2857
  %v2859 = vpop.f32.mrb[0].mxu0
  %v2860 = vadd.f32 %v2766, %v2859
  %v2861 = vpop.f32.mrb[0].mxu0
  %v2862 = vadd.f32 %v2762, %v2861
  %v2863 = vpop.f32.mrb[0].mxu0
  %v2864 = vadd.f32 %v2766, %v2863
  %2865 = vdwg.mxu0
  %v2866 = vmul.f32 %v2848, 0.5
  %v2867 = vmul.f32 %v2850, 0.5
  %v2868 = vmul.f32 %v2852, 0.5
  %v2869 = vmul.f32 %v2854, 0.5
  %v2870 = vmul.f32 %v2858, 0.5
  %v2871 = vmul.f32 %v2860, 0.5
  %v2872 = vmul.f32 %v2862, 0.5
  %v2873 = vmul.f32 %v2864, 0.5
  %v2874 = vmul.f32 %v2848, 0.044715
  %v2875 = vmul.f32 %v2850, 0.044715
  %v2876 = vmul.f32 %v2852, 0.044715
  %v2877 = vmul.f32 %v2854, 0.044715
  %v2878 = vmul.f32 %v2858, 0.044715
  %v2879 = vmul.f32 %v2860, 0.044715
  %v2880 = vmul.f32 %v2862, 0.044715
  %v2881 = vmul.f32 %v2864, 0.044715
  %v2882 = vmul.f32 %v2874, %v2848
  %v2883 = vmul.f32 %v2875, %v2850
  %v2884 = vmul.f32 %v2876, %v2852
  %v2885 = vmul.f32 %v2877, %v2854
  %v2886 = vmul.f32 %v2878, %v2858
  %v2887 = vmul.f32 %v2879, %v2860
  %v2888 = vmul.f32 %v2880, %v2862
  %v2889 = vmul.f32 %v2881, %v2864
  %v2890 = vmul.f32 %v2882, %v2848
  %v2891 = vmul.f32 %v2883, %v2850
  %v2892 = vmul.f32 %v2884, %v2852
  %v2893 = vmul.f32 %v2885, %v2854
  %v2894 = vmul.f32 %v2886, %v2858
  %v2895 = vmul.f32 %v2887, %v2860
  %v2896 = vmul.f32 %v2888, %v2862
  %v2897 = vmul.f32 %v2889, %v2864
  %v2898 = vadd.f32 %v2848, %v2890
  %v2899 = vadd.f32 %v2850, %v2891
  %v2900 = vadd.f32 %v2852, %v2892
  %v2901 = vadd.f32 %v2854, %v2893
  %v2902 = vadd.f32 %v2858, %v2894
  %v2903 = vadd.f32 %v2860, %v2895
  %v2904 = vadd.f32 %v2862, %v2896
  %v2905 = vadd.f32 %v2864, %v2897
  %v2906 = vmul.f32 %v2898, 0.7978846
  %v2907 = vmul.f32 %v2899, 0.7978846
  %v2908 = vmul.f32 %v2900, 0.7978846
  %v2909 = vmul.f32 %v2901, 0.7978846
  %v2910 = vmul.f32 %v2902, 0.7978846
  %v2911 = vmul.f32 %v2903, 0.7978846
  %v2912 = vmul.f32 %v2904, 0.7978846
  %v2913 = vmul.f32 %v2905, 0.7978846
  %v2914 = vtanh.pop %v2906
  %v2915 = vtanh.pop %v2907
  %v2916 = vtanh.pop %v2908
  %v2917 = vtanh.pop %v2909
  %v2918 = vtanh.pop %v2910
  %v2919 = vtanh.pop %v2911
  %v2920 = vtanh.pop %v2912
  %v2921 = vtanh.pop %v2913
  %v2922 = vadd.f32 %v2914, 1.0
  %v2923 = vadd.f32 %v2915, 1.0
  %v2924 = vadd.f32 %v2916, 1.0
  %v2925 = vadd.f32 %v2917, 1.0
  %v2926 = vadd.f32 %v2918, 1.0
  %v2927 = vadd.f32 %v2919, 1.0
  %v2928 = vadd.f32 %v2920, 1.0
  %v2929 = vadd.f32 %v2921, 1.0
  %v2930 = vmul.f32 %v2866, %v2922
  %v2931 = vmul.f32 %v2867, %v2923
  %v2932 = vmul.f32 %v2868, %v2924
  %v2933 = vmul.f32 %v2869, %v2925
  %v2934 = vmul.f32 %v2870, %v2926
  %v2935 = vmul.f32 %v2871, %v2927
  %v2936 = vmul.f32 %v2872, %v2928
  %v2937 = vmul.f32 %v2873, %v2929
  %v2938 = vsel %vm125, %v2930, 0.0
  %2939 = vadd.xlane.f32.xlu0 %v2938
  %v2940 = vpop.xlane.xlu0 %2939
  %v2941 = vsel %vm125, %v2932, 0.0
  %2942 = vadd.xlane.f32.xlu0 %v2941
  %v2943 = vpop.xlane.xlu0 %2942
  %v2944 = vsel %vm125, %v2934, 0.0
  %2945 = vadd.xlane.f32.xlu0 %v2944
  %v2946 = vpop.xlane.xlu0 %2945
  %v2947 = vsel %vm125, %v2936, 0.0
  %2948 = vadd.xlane.f32.xlu0 %v2947
  %v2949 = vpop.xlane.xlu0 %2948
  %v2950 = vmul.f32 %v2940, %v903
  %v2951 = vmul.f32 %v2943, %v903
  %v2952 = vmul.f32 %v2946, %v903
  %v2953 = vmul.f32 %v2949, %v903
  %v2954 = vsub.f32 %v2930, %v2950
  %v2955 = vsub.f32 %v2932, %v2951
  %v2956 = vsub.f32 %v2934, %v2952
  %v2957 = vsub.f32 %v2936, %v2953
  %v2958 = vmul.f32 %v2954, %v2954
  %v2959 = vmul.f32 %v2955, %v2955
  %v2960 = vmul.f32 %v2956, %v2956
  %v2961 = vmul.f32 %v2957, %v2957
  %v2962 = vsel %vm125, %v2958, 0.0
  %2963 = vadd.xlane.f32.xlu0 %v2962
  %v2964 = vpop.xlane.xlu0 %2963
  %v2965 = vsel %vm125, %v2959, 0.0
  %2966 = vadd.xlane.f32.xlu0 %v2965
  %v2967 = vpop.xlane.xlu0 %2966
  %v2968 = vsel %vm125, %v2960, 0.0
  %2969 = vadd.xlane.f32.xlu0 %v2968
  %v2970 = vpop.xlane.xlu0 %2969
  %v2971 = vsel %vm125, %v2961, 0.0
  %2972 = vadd.xlane.f32.xlu0 %v2971
  %v2973 = vpop.xlane.xlu0 %2972
  %v2974 = vmul.f32 %v2964, %v903
  %v2975 = vmul.f32 %v2967, %v903
  %v2976 = vmul.f32 %v2970, %v903
  %v2977 = vmul.f32 %v2973, %v903
  %v2978 = vadd.f32 %v2974, 1e-12
  %v2979 = vadd.f32 %v2975, 1e-12
  %v2980 = vadd.f32 %v2976, 1e-12
  %v2981 = vadd.f32 %v2977, 1e-12
  %v2982 = vrsqrt.pop %v2978
  %v2983 = vrsqrt.pop %v2979
  %v2984 = vrsqrt.pop %v2980
  %v2985 = vrsqrt.pop %v2981
  %v2986 = vmul.f32 %v2954, %v2982
  %v2987 = vmul.f32 %v2955, %v2983
  %v2988 = vmul.f32 %v2956, %v2984
  %v2989 = vmul.f32 %v2957, %v2985
  %v2990 = vlaneseq
  %v2991 = vshrl.u32 %v2990, 7
  %v2992 = vsub.s32 2, %v2991
  %v2993 = vrot.slane %v2747, %v2992
  %v2994 = vmul.f32 %v2986, %v2993
  %v2995 = vmul.f32 %v2987, %v2993
  %v2996 = vmul.f32 %v2988, %v2993
  %v2997 = vmul.f32 %v2989, %v2993
  %v2998 = vlaneseq
  %v2999 = vshrl.u32 %v2998, 7
  %v3000 = vsub.s32 3, %v2999
  %v3001 = vrot.slane %v2747, %v3000
  %v3002 = vadd.f32 %v2994, %v3001
  %v3003 = vadd.f32 %v2995, %v3001
  %v3004 = vadd.f32 %v2996, %v3001
  %v3005 = vadd.f32 %v2997, %v3001
  %v3006 = vpack.c.bf16 %v3003, %v3002
  %v3007 = vpack.c.bf16 %v3005, %v3004
  %v3008 = vld [vmem:[%s11] sm:$0xf]
  %v3009 = vld [vmem:[%s11 + $0x4] sm:$0xf]
  %v3010 = vld [vmem:[%s11 + $0x8] sm:$0xf]
  %v3011 = vld [vmem:[%s11 + $0xc] sm:$0xf]
  %v3012 = vld [vmem:[%s11 + $0x10] sm:$0xf]
  %v3013 = vld [vmem:[%s11 + $0x14] sm:$0xf]
  %v3014 = vld [vmem:[%s11 + $0x18] sm:$0xf]
  %v3015 = vld [vmem:[%s11 + $0x1c] sm:$0xf]
  %v3016 = vlaneseq
  %v3017 = vshrl.u32 %v3016, 7
  %v3018 = vsub.s32 4, %v3017
  %v3019 = vrot.slane %v2747, %v3018
  %v3028 = vunpack.c.l.b16 %v3008
  %v3029 = vunpack.c.l.b16 %v3009
  %v3030 = vunpack.c.l.b16 %v3010
  %v3031 = vunpack.c.l.b16 %v3011
  %v3032 = vunpack.c.l.b16 %v3012
  %v3033 = vunpack.c.l.b16 %v3013
  %v3034 = vunpack.c.l.b16 %v3014
  %v3035 = vunpack.c.l.b16 %v3015
  %v3036 = vpack.c.b16 %v3029, %v3028
  %v3037 = vpack.c.b16 %v3031, %v3030
  %v3038 = vpack.c.b16 %v3033, %v3032
  %v3039 = vpack.c.b16 %v3035, %v3034
  %v3045 = vsel %vm125, %v3006, 0
  %v3048 = vsel %vm125, %v3007, 0
  %3050 = vmatprep.subr.bf16.mxu0 0
  %3051 = vmatpush1.bf16.msra.mxu0 %v3036
  %3052 = vmatprep.subr.bf16.mxu0 0
  %3053 = vmatpush1.bf16.msra.mxu0 %v3037
  %3054 = vmatprep.subr.bf16.mxu0 0
  %3055 = vmatpush1.bf16.msra.mxu0 %v3038
  %3056 = vmatprep.subr.bf16.mxu0 0
  %3057 = vmatpush1.bf16.msra.mxu0 %v3039
  %3058 = vmatprep.subr.bf16.mxu0 0
  %3059 = vmatpush1.bf16.msra.mxu0 0
  %3060 = vmatprep.subr.bf16.mxu0 0
  %3061 = vmatpush1.bf16.msra.mxu0 0
  %3062 = vmatprep.subr.bf16.mxu0 0
  %3063 = vmatpush1.bf16.msra.mxu0 0
  %3064 = vmatprep.subr.bf16.mxu0 0
  %3065 = vmatpush1.bf16.msra.mxu0 0
  %3066 = vmatprep.subr.bf16.mxu0 0
  %3067 = vmatpush1.bf16.msra.mxu0 0
  %3068 = vmatprep.subr.bf16.mxu0 0
  %3069 = vmatpush1.bf16.msra.mxu0 0
  %3070 = vmatprep.subr.bf16.mxu0 0
  %3071 = vmatpush1.bf16.msra.mxu0 0
  %3072 = vmatprep.subr.bf16.mxu0 0
  %3073 = vmatpush1.bf16.msra.mxu0 0
  %3074 = vmatprep.subr.bf16.mxu0 0
  %3075 = vmatpush1.bf16.msra.mxu0 0
  %3076 = vmatprep.subr.bf16.mxu0 0
  %3077 = vmatpush1.bf16.msra.mxu0 0
  %3078 = vmatprep.subr.bf16.mxu0 0
  %3079 = vmatpush1.bf16.msra.mxu0 0
  %3080 = vmatprep.subr.bf16.mxu0 0
  %3081 = vmatpush1.bf16.msra.mxu0 0
  %3082 = vmatprep.mubr.bf16.mxu0 0
  %3083 = vmatmul.mubr.bf16.gmra.mrb[0].mxu0 %v3045
  %v3084 = vpop.f32.mrb[0].mxu0
  %v3085 = vadd.f32 %v3019, %v3084
  %v3086 = vpop.f32.mrb[0].mxu0
  %v3087 = vpop.f32.mrb[0].mxu0
  %v3088 = vadd.f32 %v3019, %v3087
  %v3089 = vpop.f32.mrb[0].mxu0
  %3090 = vmatprep.mubr.bf16.mxu0 0
  %3091 = vmatmul.mubr.bf16.gmra.mrb[0].mxu0 %v3048
  %v3092 = vpop.f32.mrb[0].mxu0
  %v3093 = vadd.f32 %v3019, %v3092
  %v3094 = vpop.f32.mrb[0].mxu0
  %v3095 = vpop.f32.mrb[0].mxu0
  %v3096 = vadd.f32 %v3019, %v3095
  %v3097 = vpop.f32.mrb[0].mxu0
  %3098 = vdwg.mxu0
  %3099 = vmax.xlane.f32.xlu0 %v3085
  %v3100 = vpop.xlane.xlu0 %3099
  %3101 = vmax.xlane.f32.xlu0 %v3088
  %v3102 = vpop.xlane.xlu0 %3101
  %3103 = vmax.xlane.f32.xlu0 %v3093
  %v3104 = vpop.xlane.xlu0 %3103
  %3105 = vmax.xlane.f32.xlu0 %v3096
  %v3106 = vpop.xlane.xlu0 %3105
  %v3107 = vsub.f32 %v3085, %v3100
  %v3108 = vsub.f32 %v3088, %v3102
  %v3109 = vsub.f32 %v3093, %v3104
  %v3110 = vsub.f32 %v3096, %v3106
  %v3111 = vmul.f32 %v3107, 1.442695
  %v3112 = vpow.pop %v3111
  %v3113 = vmul.f32 %v3108, 1.442695
  %v3114 = vpow.pop %v3113
  %v3115 = vmul.f32 %v3109, 1.442695
  %v3116 = vpow.pop %v3115
  %v3117 = vmul.f32 %v3110, 1.442695
  %v3118 = vpow.pop %v3117
  %3119 = vadd.xlane.f32.xlu0 %v3112
  %v3120 = vpop.xlane.xlu0 %3119
  %3121 = vadd.xlane.f32.xlu0 %v3114
  %v3122 = vpop.xlane.xlu0 %3121
  %3123 = vadd.xlane.f32.xlu0 %v3116
  %v3124 = vpop.xlane.xlu0 %3123
  %3125 = vadd.xlane.f32.xlu0 %v3118
  %v3126 = vpop.xlane.xlu0 %3125
  %v3127 = vlog2.pop %v3120
  %v3128 = vmul.f32 %v3127, 0.6931472
  %v3129 = vlog2.pop %v3122
  %v3130 = vmul.f32 %v3129, 0.6931472
  %v3131 = vlog2.pop %v3124
  %v3132 = vmul.f32 %v3131, 0.6931472
  %v3133 = vlog2.pop %v3126
  %v3134 = vmul.f32 %v3133, 0.6931472
  %v3135 = vadd.f32 %v3100, %v3128
  %v3136 = vadd.f32 %v3102, %v3130
  %v3137 = vadd.f32 %v3104, %v3132
  %v3138 = vadd.f32 %v3106, %v3134
  %v3139 = vsub.f32 %v3085, %v3135
  %v3140 = vsub.f32 %v3088, %v3136
  %v3141 = vsub.f32 %v3093, %v3137
  %v3142 = vsub.f32 %v3096, %v3138
  %v3143 = vpack.c.bf16 %v2932, %v2930
  %v3144 = vpack.c.bf16 %v2936, %v2934
  %s3145 = scalar_lea.vmem %s11, 32
  %v3146 = vld [vmem:[%s3145] sm:$0xf]
  %v3147 = vld [vmem:[%s3145 + $0x4] sm:$0xf]
  %v3148 = vld [vmem:[%s3145 + $0x8] sm:$0xf]
  %v3149 = vld [vmem:[%s3145 + $0xc] sm:$0xf]
  %v3150 = vld [vmem:[%s3145 + $0x10] sm:$0xf]
  %v3151 = vld [vmem:[%s3145 + $0x14] sm:$0xf]
  %v3152 = vld [vmem:[%s3145 + $0x18] sm:$0xf]
  %v3153 = vld [vmem:[%s3145 + $0x1c] sm:$0xf]
  %v3154 = vlaneseq
  %v3155 = vshrl.u32 %v3154, 7
  %v3156 = vsub.s32 5, %v3155
  %v3157 = vrot.slane %v2747, %v3156
  %3160 = vrot.lane.b32.xlu0 %v3143, 64
  %v3161 = vpop.permute.xlu0 %3160
  %3162 = vrot.lane.b32.xlu0 %v3144, 64
  %v3163 = vpop.permute.xlu0 %3162
  %v3172 = vunpack.c.l.b16 %v3146
  %v3173 = vunpack.c.l.b16 %v3147
  %v3174 = vunpack.c.l.b16 %v3148
  %v3175 = vunpack.c.l.b16 %v3149
  %v3176 = vunpack.c.l.b16 %v3150
  %v3177 = vunpack.c.l.b16 %v3151
  %v3178 = vunpack.c.l.b16 %v3152
  %v3179 = vunpack.c.l.b16 %v3153
  %v3180 = vpack.c.b16 %v3173, %v3172
  %v3181 = vpack.c.b16 %v3175, %v3174
  %v3182 = vpack.c.b16 %v3177, %v3176
  %v3183 = vpack.c.b16 %v3179, %v3178
  %v3189 = vsel %vm125, %v3161, 0
  %v3192 = vsel %vm125, %v3163, 0
  %3194 = vmatprep.subr.bf16.mxu0 0
  %3195 = vmatpush1.bf16.msra.mxu0 %v3180
  %3196 = vmatprep.subr.bf16.mxu0 0
  %3197 = vmatpush1.bf16.msra.mxu0 %v3181
  %3198 = vmatprep.subr.bf16.mxu0 0
  %3199 = vmatpush1.bf16.msra.mxu0 %v3182
  %3200 = vmatprep.subr.bf16.mxu0 0
  %3201 = vmatpush1.bf16.msra.mxu0 %v3183
  %3202 = vmatprep.subr.bf16.mxu0 0
  %3203 = vmatpush1.bf16.msra.mxu0 0
  %3204 = vmatprep.subr.bf16.mxu0 0
  %3205 = vmatpush1.bf16.msra.mxu0 0
  %3206 = vmatprep.subr.bf16.mxu0 0
  %3207 = vmatpush1.bf16.msra.mxu0 0
  %3208 = vmatprep.subr.bf16.mxu0 0
  %3209 = vmatpush1.bf16.msra.mxu0 0
  %3210 = vmatprep.subr.bf16.mxu0 0
  %3211 = vmatpush1.bf16.msra.mxu0 0
  %3212 = vmatprep.subr.bf16.mxu0 0
  %3213 = vmatpush1.bf16.msra.mxu0 0
  %3214 = vmatprep.subr.bf16.mxu0 0
  %3215 = vmatpush1.bf16.msra.mxu0 0
  %3216 = vmatprep.subr.bf16.mxu0 0
  %3217 = vmatpush1.bf16.msra.mxu0 0
  %3218 = vmatprep.subr.bf16.mxu0 0
  %3219 = vmatpush1.bf16.msra.mxu0 0
  %3220 = vmatprep.subr.bf16.mxu0 0
  %3221 = vmatpush1.bf16.msra.mxu0 0
  %3222 = vmatprep.subr.bf16.mxu0 0
  %3223 = vmatpush1.bf16.msra.mxu0 0
  %3224 = vmatprep.subr.bf16.mxu0 0
  %3225 = vmatpush1.bf16.msra.mxu0 0
  %3226 = vmatprep.mubr.bf16.mxu0 0
  %3227 = vmatmul.mubr.bf16.gmra.mrb[0].mxu0 %v3189
  %v3228 = vpop.f32.mrb[0].mxu0
  %v3229 = vadd.f32 %v3157, %v3228
  %v3230 = vpop.f32.mrb[0].mxu0
  %v3231 = vpop.f32.mrb[0].mxu0
  %v3232 = vadd.f32 %v3157, %v3231
  %v3233 = vpop.f32.mrb[0].mxu0
  %3234 = vmatprep.mubr.bf16.mxu0 0
  %3235 = vmatmul.mubr.bf16.gmra.mrb[0].mxu0 %v3192
  %v3236 = vpop.f32.mrb[0].mxu0
  %v3237 = vadd.f32 %v3157, %v3236
  %v3238 = vpop.f32.mrb[0].mxu0
  %v3239 = vpop.f32.mrb[0].mxu0
  %v3240 = vadd.f32 %v3157, %v3239
  %v3241 = vpop.f32.mrb[0].mxu0
  %3242 = vdwg.mxu0
  %3243 = vmax.xlane.f32.xlu0 %v3229
  %v3244 = vpop.xlane.xlu0 %3243
  %3245 = vmax.xlane.f32.xlu0 %v3232
  %v3246 = vpop.xlane.xlu0 %3245
  %3247 = vmax.xlane.f32.xlu0 %v3237
  %v3248 = vpop.xlane.xlu0 %3247
  %3249 = vmax.xlane.f32.xlu0 %v3240
  %v3250 = vpop.xlane.xlu0 %3249
  %v3251 = vsub.f32 %v3229, %v3244
  %v3252 = vsub.f32 %v3232, %v3246
  %v3253 = vsub.f32 %v3237, %v3248
  %v3254 = vsub.f32 %v3240, %v3250
  %v3255 = vmul.f32 %v3251, 1.442695
  %v3256 = vpow.pop %v3255
  %v3257 = vmul.f32 %v3252, 1.442695
  %v3258 = vpow.pop %v3257
  %v3259 = vmul.f32 %v3253, 1.442695
  %v3260 = vpow.pop %v3259
  %v3261 = vmul.f32 %v3254, 1.442695
  %v3262 = vpow.pop %v3261
  %3263 = vadd.xlane.f32.xlu0 %v3256
  %v3264 = vpop.xlane.xlu0 %3263
  %3265 = vadd.xlane.f32.xlu0 %v3258
  %v3266 = vpop.xlane.xlu0 %3265
  %3267 = vadd.xlane.f32.xlu0 %v3260
  %v3268 = vpop.xlane.xlu0 %3267
  %3269 = vadd.xlane.f32.xlu0 %v3262
  %v3270 = vpop.xlane.xlu0 %3269
  %v3271 = vlog2.pop %v3264
  %v3272 = vmul.f32 %v3271, 0.6931472
  %v3273 = vlog2.pop %v3266
  %v3274 = vmul.f32 %v3273, 0.6931472
  %v3275 = vlog2.pop %v3268
  %v3276 = vmul.f32 %v3275, 0.6931472
  %v3277 = vlog2.pop %v3270
  %v3278 = vmul.f32 %v3277, 0.6931472
  %v3279 = vadd.f32 %v3244, %v3272
  %v3280 = vadd.f32 %v3246, %v3274
  %v3281 = vadd.f32 %v3248, %v3276
  %v3282 = vadd.f32 %v3250, %v3278
  %v3283 = vsub.f32 %v3229, %v3279
  %v3284 = vsub.f32 %v3232, %v3280
  %v3285 = vsub.f32 %v3237, %v3281
  %v3286 = vsub.f32 %v3240, %v3282
  %v3287 = vld [vmem:[%s2] sm:$0xff]
  %v3288 = vld [vmem:[%s2 + $0x8] sm:$0xff]
  %v3289 = vld [vmem:[%s2 + $0x10] sm:$0xff]
  %v3290 = vld [vmem:[%s2 + $0x18] sm:$0xff]
  %v3291 = vsel %vm784, %v3287, 0.0
  %3292 = vadd.xlane.f32.xlu0 %v3291
  %v3293 = vpop.xlane.xlu0 %3292
  %v3294 = vsel %vm784, %v3288, 0.0
  %3295 = vadd.xlane.f32.xlu0 %v3294
  %v3296 = vpop.xlane.xlu0 %3295
  %v3297 = vsel %vm784, %v3289, 0.0
  %3298 = vadd.xlane.f32.xlu0 %v3297
  %v3299 = vpop.xlane.xlu0 %3298
  %v3300 = vsel %vm784, %v3290, 0.0
  %3301 = vadd.xlane.f32.xlu0 %v3300
  %v3302 = vpop.xlane.xlu0 %3301
  %v3303 = vmax.f32 %v3293, 1.0
  %v3304 = vmax.f32 %v3296, 1.0
  %v3305 = vmax.f32 %v3299, 1.0
  %v3306 = vmax.f32 %v3302, 1.0
  %v3307 = vpack.c.bf16 %v3288, %v3287
  %v3308 = vpack.c.bf16 %v3290, %v3289
  %v3310 = vsel %vm784, %v3307, 0
  %v3313 = vsel %vm784, %v3308, 0
  %3315 = vmatprep.subr.bf16.mxu0 0
  %3316 = vmatpush1.bf16.msra.mxu0 %v2749
  %3317 = vmatprep.subr.bf16.mxu0 0
  %3318 = vmatpush1.bf16.msra.mxu0 %v2750
  %3319 = vmatprep.subr.bf16.mxu0 0
  %3320 = vmatpush1.bf16.msra.mxu0 0
  %3321 = vmatprep.subr.bf16.mxu0 0
  %3322 = vmatpush1.bf16.msra.mxu0 0
  %3323 = vmatprep.subr.bf16.mxu0 0
  %3324 = vmatpush1.bf16.msra.mxu0 0
  %3325 = vmatprep.subr.bf16.mxu0 0
  %3326 = vmatpush1.bf16.msra.mxu0 0
  %3327 = vmatprep.subr.bf16.mxu0 0
  %3328 = vmatpush1.bf16.msra.mxu0 0
  %3329 = vmatprep.subr.bf16.mxu0 0
  %3330 = vmatpush1.bf16.msra.mxu0 0
  %3331 = vmatprep.subr.bf16.mxu0 0
  %3332 = vmatpush1.bf16.msra.mxu0 0
  %3333 = vmatprep.subr.bf16.mxu0 0
  %3334 = vmatpush1.bf16.msra.mxu0 0
  %3335 = vmatprep.subr.bf16.mxu0 0
  %3336 = vmatpush1.bf16.msra.mxu0 0
  %3337 = vmatprep.subr.bf16.mxu0 0
  %3338 = vmatpush1.bf16.msra.mxu0 0
  %3339 = vmatprep.subr.bf16.mxu0 0
  %3340 = vmatpush1.bf16.msra.mxu0 0
  %3341 = vmatprep.subr.bf16.mxu0 0
  %3342 = vmatpush1.bf16.msra.mxu0 0
  %3343 = vmatprep.subr.bf16.mxu0 0
  %3344 = vmatpush1.bf16.msra.mxu0 0
  %3345 = vmatprep.subr.bf16.mxu0 0
  %3346 = vmatpush1.bf16.msra.mxu0 0
  %3347 = vmatprep.mubr.bf16.mxu0 0
  %3348 = vmatmul.mubr.bf16.gmra.mrb[0].mxu0 %v3310
  %v3349 = vpop.f32.mrb[0].mxu0
  %v3350 = vadd.f32 0.0, %v3349
  %v3351 = vpop.f32.mrb[0].mxu0
  %v3352 = vpop.f32.mrb[0].mxu0
  %v3353 = vadd.f32 0.0, %v3352
  %v3354 = vpop.f32.mrb[0].mxu0
  %3355 = vmatprep.mubr.bf16.mxu0 0
  %3356 = vmatmul.mubr.bf16.gmra.mrb[0].mxu0 %v3313
  %v3357 = vpop.f32.mrb[0].mxu0
  %v3358 = vadd.f32 0.0, %v3357
  %v3359 = vpop.f32.mrb[0].mxu0
  %v3360 = vpop.f32.mrb[0].mxu0
  %v3361 = vadd.f32 0.0, %v3360
  %v3362 = vpop.f32.mrb[0].mxu0
  %3363 = vdwg.mxu0
  %v3364 = vrcp.pop %v3303
  %v3365 = vmul.f32 %v3350, %v3364
  %v3366 = vrcp.pop %v3304
  %v3367 = vmul.f32 %v3353, %v3366
  %v3368 = vrcp.pop %v3305
  %v3369 = vmul.f32 %v3358, %v3368
  %v3370 = vrcp.pop %v3306
  %v3371 = vmul.f32 %v3361, %v3370
  %v3372 = vpack.c.bf16 %v3367, %v3365
  %v3373 = vpack.c.bf16 %v3371, %v3369
  %v3374 = vld [vmem:[%s10] sm:$0xf]
  %v3375 = vld [vmem:[%s10 + $0x4] sm:$0xf]
  %v3376 = vld [vmem:[%s10 + $0x8] sm:$0xf]
  %v3377 = vld [vmem:[%s10 + $0xc] sm:$0xf]
  %v3378 = vld [vmem:[%s10 + $0x10] sm:$0xf]
  %v3379 = vld [vmem:[%s10 + $0x14] sm:$0xf]
  %v3380 = vld [vmem:[%s10 + $0x18] sm:$0xf]
  %v3381 = vld [vmem:[%s10 + $0x1c] sm:$0xf]
  %v3382 = vlaneseq
  %v3383 = vshrl.u32 %v3382, 7
  %v3384 = vsub.s32 1, %v3383
  %v3385 = vrot.slane %v2747, %v3384
  %v3394 = vunpack.c.l.b16 %v3374
  %v3395 = vunpack.c.l.b16 %v3375
  %v3396 = vunpack.c.l.b16 %v3376
  %v3397 = vunpack.c.l.b16 %v3377
  %v3398 = vunpack.c.l.b16 %v3378
  %v3399 = vunpack.c.l.b16 %v3379
  %v3400 = vunpack.c.l.b16 %v3380
  %v3401 = vunpack.c.l.b16 %v3381
  %v3402 = vpack.c.b16 %v3395, %v3394
  %v3403 = vpack.c.b16 %v3397, %v3396
  %v3404 = vpack.c.b16 %v3399, %v3398
  %v3405 = vpack.c.b16 %v3401, %v3400
  %v3411 = vsel %vm125, %v3372, 0
  %v3414 = vsel %vm125, %v3373, 0
  %3416 = vmatprep.subr.bf16.mxu0 0
  %3417 = vmatpush1.bf16.msra.mxu0 %v3402
  %3418 = vmatprep.subr.bf16.mxu0 0
  %3419 = vmatpush1.bf16.msra.mxu0 %v3403
  %3420 = vmatprep.subr.bf16.mxu0 0
  %3421 = vmatpush1.bf16.msra.mxu0 %v3404
  %3422 = vmatprep.subr.bf16.mxu0 0
  %3423 = vmatpush1.bf16.msra.mxu0 %v3405
  %3424 = vmatprep.subr.bf16.mxu0 0
  %3425 = vmatpush1.bf16.msra.mxu0 0
  %3426 = vmatprep.subr.bf16.mxu0 0
  %3427 = vmatpush1.bf16.msra.mxu0 0
  %3428 = vmatprep.subr.bf16.mxu0 0
  %3429 = vmatpush1.bf16.msra.mxu0 0
  %3430 = vmatprep.subr.bf16.mxu0 0
  %3431 = vmatpush1.bf16.msra.mxu0 0
  %3432 = vmatprep.subr.bf16.mxu0 0
  %3433 = vmatpush1.bf16.msra.mxu0 0
  %3434 = vmatprep.subr.bf16.mxu0 0
  %3435 = vmatpush1.bf16.msra.mxu0 0
  %3436 = vmatprep.subr.bf16.mxu0 0
  %3437 = vmatpush1.bf16.msra.mxu0 0
  %3438 = vmatprep.subr.bf16.mxu0 0
  %3439 = vmatpush1.bf16.msra.mxu0 0
  %3440 = vmatprep.subr.bf16.mxu0 0
  %3441 = vmatpush1.bf16.msra.mxu0 0
  %3442 = vmatprep.subr.bf16.mxu0 0
  %3443 = vmatpush1.bf16.msra.mxu0 0
  %3444 = vmatprep.subr.bf16.mxu0 0
  %3445 = vmatpush1.bf16.msra.mxu0 0
  %3446 = vmatprep.subr.bf16.mxu0 0
  %3447 = vmatpush1.bf16.msra.mxu0 0
  %3448 = vmatprep.mubr.bf16.mxu0 0
  %3449 = vmatmul.mubr.bf16.gmra.mrb[0].mxu0 %v3411
  %v3450 = vpop.f32.mrb[0].mxu0
  %v3451 = vadd.f32 %v3385, %v3450
  %v3452 = vpop.f32.mrb[0].mxu0
  %v3453 = vpop.f32.mrb[0].mxu0
  %v3454 = vadd.f32 %v3385, %v3453
  %v3455 = vpop.f32.mrb[0].mxu0
  %3456 = vmatprep.mubr.bf16.mxu0 0
  %3457 = vmatmul.mubr.bf16.gmra.mrb[0].mxu0 %v3414
  %v3458 = vpop.f32.mrb[0].mxu0
  %v3459 = vadd.f32 %v3385, %v3458
  %v3460 = vpop.f32.mrb[0].mxu0
  %v3461 = vpop.f32.mrb[0].mxu0
  %v3462 = vadd.f32 %v3385, %v3461
  %v3463 = vpop.f32.mrb[0].mxu0
  %3464 = vdwg.mxu0
  %v3465 = vmul.f32 %v3451, 0.5
  %v3466 = vmul.f32 %v3454, 0.5
  %v3467 = vmul.f32 %v3459, 0.5
  %v3468 = vmul.f32 %v3462, 0.5
  %v3469 = vmul.f32 %v3451, 0.044715
  %v3470 = vmul.f32 %v3454, 0.044715
  %v3471 = vmul.f32 %v3459, 0.044715
  %v3472 = vmul.f32 %v3462, 0.044715
  %v3473 = vmul.f32 %v3469, %v3451
  %v3474 = vmul.f32 %v3470, %v3454
  %v3475 = vmul.f32 %v3471, %v3459
  %v3476 = vmul.f32 %v3472, %v3462
  %v3477 = vmul.f32 %v3473, %v3451
  %v3478 = vmul.f32 %v3474, %v3454
  %v3479 = vmul.f32 %v3475, %v3459
  %v3480 = vmul.f32 %v3476, %v3462
  %v3481 = vadd.f32 %v3451, %v3477
  %v3482 = vadd.f32 %v3454, %v3478
  %v3483 = vadd.f32 %v3459, %v3479
  %v3484 = vadd.f32 %v3462, %v3480
  %v3485 = vmul.f32 %v3481, 0.7978846
  %v3486 = vmul.f32 %v3482, 0.7978846
  %v3487 = vmul.f32 %v3483, 0.7978846
  %v3488 = vmul.f32 %v3484, 0.7978846
  %v3489 = vtanh.pop %v3485
  %v3490 = vtanh.pop %v3486
  %v3491 = vtanh.pop %v3487
  %v3492 = vtanh.pop %v3488
  %v3493 = vadd.f32 %v3489, 1.0
  %v3494 = vadd.f32 %v3490, 1.0
  %v3495 = vadd.f32 %v3491, 1.0
  %v3496 = vadd.f32 %v3492, 1.0
  %v3497 = vmul.f32 %v3465, %v3493
  %v3498 = vmul.f32 %v3466, %v3494
  %v3499 = vmul.f32 %v3467, %v3495
  %v3500 = vmul.f32 %v3468, %v3496
  %v3501 = vpack.c.bf16 %v3498, %v3497
  %v3502 = vpack.c.bf16 %v3500, %v3499
  %s3503 = scalar_lea.vmem %s11, 64
  %v3504 = vld [vmem:[%s3503] sm:$0xf]
  %v3505 = vld [vmem:[%s3503 + $0x4] sm:$0xf]
  %v3506 = vld [vmem:[%s3503 + $0x8] sm:$0xf]
  %v3507 = vld [vmem:[%s3503 + $0xc] sm:$0xf]
  %v3508 = vld [vmem:[%s3503 + $0x10] sm:$0xf]
  %v3509 = vld [vmem:[%s3503 + $0x14] sm:$0xf]
  %v3510 = vld [vmem:[%s3503 + $0x18] sm:$0xf]
  %v3511 = vld [vmem:[%s3503 + $0x1c] sm:$0xf]
  %v3512 = vlaneseq
  %v3513 = vshrl.u32 %v3512, 7
  %v3514 = vsub.s32 6, %v3513
  %v3515 = vrot.slane %v2747, %v3514
  %v3524 = vunpack.c.l.b16 %v3504
  %v3525 = vunpack.c.l.b16 %v3505
  %v3526 = vunpack.c.l.b16 %v3506
  %v3527 = vunpack.c.l.b16 %v3507
  %v3528 = vunpack.c.l.b16 %v3508
  %v3529 = vunpack.c.l.b16 %v3509
  %v3530 = vunpack.c.l.b16 %v3510
  %v3531 = vunpack.c.l.b16 %v3511
  %v3532 = vpack.c.b16 %v3525, %v3524
  %v3533 = vpack.c.b16 %v3527, %v3526
  %v3534 = vpack.c.b16 %v3529, %v3528
  %v3535 = vpack.c.b16 %v3531, %v3530
  %v3541 = vsel %vm125, %v3501, 0
  %v3544 = vsel %vm125, %v3502, 0
  %3546 = vmatprep.subr.bf16.mxu0 0
  %3547 = vmatpush1.bf16.msra.mxu0 %v3532
  %3548 = vmatprep.subr.bf16.mxu0 0
  %3549 = vmatpush1.bf16.msra.mxu0 %v3533
  %3550 = vmatprep.subr.bf16.mxu0 0
  %3551 = vmatpush1.bf16.msra.mxu0 %v3534
  %3552 = vmatprep.subr.bf16.mxu0 0
  %3553 = vmatpush1.bf16.msra.mxu0 %v3535
  %3554 = vmatprep.subr.bf16.mxu0 0
  %3555 = vmatpush1.bf16.msra.mxu0 0
  %3556 = vmatprep.subr.bf16.mxu0 0
  %3557 = vmatpush1.bf16.msra.mxu0 0
  %3558 = vmatprep.subr.bf16.mxu0 0
  %3559 = vmatpush1.bf16.msra.mxu0 0
  %3560 = vmatprep.subr.bf16.mxu0 0
  %3561 = vmatpush1.bf16.msra.mxu0 0
  %3562 = vmatprep.subr.bf16.mxu0 0
  %3563 = vmatpush1.bf16.msra.mxu0 0
  %3564 = vmatprep.subr.bf16.mxu0 0
  %3565 = vmatpush1.bf16.msra.mxu0 0
  %3566 = vmatprep.subr.bf16.mxu0 0
  %3567 = vmatpush1.bf16.msra.mxu0 0
  %3568 = vmatprep.subr.bf16.mxu0 0
  %3569 = vmatpush1.bf16.msra.mxu0 0
  %3570 = vmatprep.subr.bf16.mxu0 0
  %3571 = vmatpush1.bf16.msra.mxu0 0
  %3572 = vmatprep.subr.bf16.mxu0 0
  %3573 = vmatpush1.bf16.msra.mxu0 0
  %3574 = vmatprep.subr.bf16.mxu0 0
  %3575 = vmatpush1.bf16.msra.mxu0 0
  %3576 = vmatprep.subr.bf16.mxu0 0
  %3577 = vmatpush1.bf16.msra.mxu0 0
  %3578 = vmatprep.mubr.bf16.mxu0 0
  %3579 = vmatmul.mubr.bf16.gmra.mrb[0].mxu0 %v3541
  %v3580 = vpop.f32.mrb[0].mxu0
  %v3581 = vadd.f32 %v3515, %v3580
  %v3582 = vpop.f32.mrb[0].mxu0
  %v3583 = vpop.f32.mrb[0].mxu0
  %v3584 = vadd.f32 %v3515, %v3583
  %v3585 = vpop.f32.mrb[0].mxu0
  %3586 = vmatprep.mubr.bf16.mxu0 0
  %3587 = vmatmul.mubr.bf16.gmra.mrb[0].mxu0 %v3544
  %v3588 = vpop.f32.mrb[0].mxu0
  %v3589 = vadd.f32 %v3515, %v3588
  %v3590 = vpop.f32.mrb[0].mxu0
  %v3591 = vpop.f32.mrb[0].mxu0
  %v3592 = vadd.f32 %v3515, %v3591
  %v3593 = vpop.f32.mrb[0].mxu0
  %3594 = vdwg.mxu0
  %3595 = vmax.xlane.f32.xlu0 %v3581
  %v3596 = vpop.xlane.xlu0 %3595
  %3597 = vmax.xlane.f32.xlu0 %v3584
  %v3598 = vpop.xlane.xlu0 %3597
  %3599 = vmax.xlane.f32.xlu0 %v3589
  %v3600 = vpop.xlane.xlu0 %3599
  %3601 = vmax.xlane.f32.xlu0 %v3592
  %v3602 = vpop.xlane.xlu0 %3601
  %v3603 = vsub.f32 %v3581, %v3596
  %v3604 = vsub.f32 %v3584, %v3598
  %v3605 = vsub.f32 %v3589, %v3600
  %v3606 = vsub.f32 %v3592, %v3602
  %v3607 = vmul.f32 %v3603, 1.442695
  %v3608 = vpow.pop %v3607
  %v3609 = vmul.f32 %v3604, 1.442695
  %v3610 = vpow.pop %v3609
  %v3611 = vmul.f32 %v3605, 1.442695
  %v3612 = vpow.pop %v3611
  %v3613 = vmul.f32 %v3606, 1.442695
  %v3614 = vpow.pop %v3613
  %3615 = vadd.xlane.f32.xlu0 %v3608
  %v3616 = vpop.xlane.xlu0 %3615
  %3617 = vadd.xlane.f32.xlu0 %v3610
  %v3618 = vpop.xlane.xlu0 %3617
  %3619 = vadd.xlane.f32.xlu0 %v3612
  %v3620 = vpop.xlane.xlu0 %3619
  %3621 = vadd.xlane.f32.xlu0 %v3614
  %v3622 = vpop.xlane.xlu0 %3621
  %v3623 = vlog2.pop %v3616
  %v3624 = vmul.f32 %v3623, 0.6931472
  %v3625 = vlog2.pop %v3618
  %v3626 = vmul.f32 %v3625, 0.6931472
  %v3627 = vlog2.pop %v3620
  %v3628 = vmul.f32 %v3627, 0.6931472
  %v3629 = vlog2.pop %v3622
  %v3630 = vmul.f32 %v3629, 0.6931472
  %v3631 = vadd.f32 %v3596, %v3624
  %v3632 = vadd.f32 %v3598, %v3626
  %v3633 = vadd.f32 %v3600, %v3628
  %v3634 = vadd.f32 %v3602, %v3630
  %v3635 = vsub.f32 %v3581, %v3631
  %v3636 = vsub.f32 %v3584, %v3632
  %v3637 = vsub.f32 %v3589, %v3633
  %v3638 = vsub.f32 %v3592, %v3634
  %v3639 = vpack.c.bf16 %v2933, %v2931
  %v3640 = vpack.c.bf16 %v2937, %v2935
  %s3641 = scalar_lea.vmem %s11, 96
  %v3642 = vld [vmem:[%s3641] sm:$0xf]
  %v3643 = vld [vmem:[%s3641 + $0x4] sm:$0xf]
  %v3644 = vld [vmem:[%s3641 + $0x8] sm:$0xf]
  %v3645 = vld [vmem:[%s3641 + $0xc] sm:$0xf]
  %v3646 = vld [vmem:[%s3641 + $0x10] sm:$0xf]
  %v3647 = vld [vmem:[%s3641 + $0x14] sm:$0xf]
  %v3648 = vld [vmem:[%s3641 + $0x18] sm:$0xf]
  %v3649 = vld [vmem:[%s3641 + $0x1c] sm:$0xf]
  %v3650 = vlaneseq
  %v3651 = vshrl.u32 %v3650, 7
  %v3652 = vsub.s32 7, %v3651
  %v3653 = vrot.slane %v2747, %v3652
  %v3662 = vunpack.c.l.b16 %v3642
  %v3663 = vunpack.c.l.b16 %v3643
  %v3664 = vunpack.c.l.b16 %v3644
  %v3665 = vunpack.c.l.b16 %v3645
  %v3666 = vunpack.c.l.b16 %v3646
  %v3667 = vunpack.c.l.b16 %v3647
  %v3668 = vunpack.c.l.b16 %v3648
  %v3669 = vunpack.c.l.b16 %v3649
  %v3670 = vpack.c.b16 %v3663, %v3662
  %v3671 = vpack.c.b16 %v3665, %v3664
  %v3672 = vpack.c.b16 %v3667, %v3666
  %v3673 = vpack.c.b16 %v3669, %v3668
  %v3679 = vsel %vm125, %v3639, 0
  %v3682 = vsel %vm125, %v3640, 0
  %3684 = vmatprep.subr.bf16.mxu0 0
  %3685 = vmatpush1.bf16.msra.mxu0 %v3670
  %3686 = vmatprep.subr.bf16.mxu0 0
  %3687 = vmatpush1.bf16.msra.mxu0 %v3671
  %3688 = vmatprep.subr.bf16.mxu0 0
  %3689 = vmatpush1.bf16.msra.mxu0 %v3672
  %3690 = vmatprep.subr.bf16.mxu0 0
  %3691 = vmatpush1.bf16.msra.mxu0 %v3673
  %3692 = vmatprep.subr.bf16.mxu0 0
  %3693 = vmatpush1.bf16.msra.mxu0 0
  %3694 = vmatprep.subr.bf16.mxu0 0
  %3695 = vmatpush1.bf16.msra.mxu0 0
  %3696 = vmatprep.subr.bf16.mxu0 0
  %3697 = vmatpush1.bf16.msra.mxu0 0
  %3698 = vmatprep.subr.bf16.mxu0 0
  %3699 = vmatpush1.bf16.msra.mxu0 0
  %3700 = vmatprep.subr.bf16.mxu0 0
  %3701 = vmatpush1.bf16.msra.mxu0 0
  %3702 = vmatprep.subr.bf16.mxu0 0
  %3703 = vmatpush1.bf16.msra.mxu0 0
  %3704 = vmatprep.subr.bf16.mxu0 0
  %3705 = vmatpush1.bf16.msra.mxu0 0
  %3706 = vmatprep.subr.bf16.mxu0 0
  %3707 = vmatpush1.bf16.msra.mxu0 0
  %3708 = vmatprep.subr.bf16.mxu0 0
  %3709 = vmatpush1.bf16.msra.mxu0 0
  %3710 = vmatprep.subr.bf16.mxu0 0
  %3711 = vmatpush1.bf16.msra.mxu0 0
  %3712 = vmatprep.subr.bf16.mxu0 0
  %3713 = vmatpush1.bf16.msra.mxu0 0
  %3714 = vmatprep.subr.bf16.mxu0 0
  %3715 = vmatpush1.bf16.msra.mxu0 0
  %3716 = vmatprep.mubr.bf16.mxu0 0
  %3717 = vmatmul.mubr.bf16.gmra.mrb[0].mxu0 %v3679
  %v3718 = vpop.f32.mrb[0].mxu0
  %v3719 = vadd.f32 %v3653, %v3718
  %v3720 = vpop.f32.mrb[0].mxu0
  %v3721 = vpop.f32.mrb[0].mxu0
  %v3722 = vadd.f32 %v3653, %v3721
  %v3723 = vpop.f32.mrb[0].mxu0
  %3724 = vmatprep.mubr.bf16.mxu0 0
  %3725 = vmatmul.mubr.bf16.gmra.mrb[0].mxu0 %v3682
  %v3726 = vpop.f32.mrb[0].mxu0
  %v3727 = vadd.f32 %v3653, %v3726
  %v3728 = vpop.f32.mrb[0].mxu0
  %v3729 = vpop.f32.mrb[0].mxu0
  %v3730 = vadd.f32 %v3653, %v3729
  %v3731 = vpop.f32.mrb[0].mxu0
  %3732 = vdwg.mxu0
  %3733 = vmax.xlane.f32.xlu0 %v3719
  %v3734 = vpop.xlane.xlu0 %3733
  %3735 = vmax.xlane.f32.xlu0 %v3722
  %v3736 = vpop.xlane.xlu0 %3735
  %3737 = vmax.xlane.f32.xlu0 %v3727
  %v3738 = vpop.xlane.xlu0 %3737
  %3739 = vmax.xlane.f32.xlu0 %v3730
  %v3740 = vpop.xlane.xlu0 %3739
  %v3741 = vsub.f32 %v3719, %v3734
  %v3742 = vsub.f32 %v3722, %v3736
  %v3743 = vsub.f32 %v3727, %v3738
  %v3744 = vsub.f32 %v3730, %v3740
  %v3745 = vmul.f32 %v3741, 1.442695
  %v3746 = vpow.pop %v3745
  %v3747 = vmul.f32 %v3742, 1.442695
  %v3748 = vpow.pop %v3747
  %v3749 = vmul.f32 %v3743, 1.442695
  %v3750 = vpow.pop %v3749
  %v3751 = vmul.f32 %v3744, 1.442695
  %v3752 = vpow.pop %v3751
  %3753 = vadd.xlane.f32.xlu0 %v3746
  %v3754 = vpop.xlane.xlu0 %3753
  %3755 = vadd.xlane.f32.xlu0 %v3748
  %v3756 = vpop.xlane.xlu0 %3755
  %3757 = vadd.xlane.f32.xlu0 %v3750
  %v3758 = vpop.xlane.xlu0 %3757
  %3759 = vadd.xlane.f32.xlu0 %v3752
  %v3760 = vpop.xlane.xlu0 %3759
  %v3761 = vlog2.pop %v3754
  %v3762 = vmul.f32 %v3761, 0.6931472
  %v3763 = vlog2.pop %v3756
  %v3764 = vmul.f32 %v3763, 0.6931472
  %v3765 = vlog2.pop %v3758
  %v3766 = vmul.f32 %v3765, 0.6931472
  %v3767 = vlog2.pop %v3760
  %v3768 = vmul.f32 %v3767, 0.6931472
  %v3769 = vadd.f32 %v3734, %v3762
  %v3770 = vadd.f32 %v3736, %v3764
  %v3771 = vadd.f32 %v3738, %v3766
  %v3772 = vadd.f32 %v3740, %v3768
  %v3773 = vsub.f32 %v3719, %v3769
  %v3774 = vsub.f32 %v3722, %v3770
  %v3775 = vsub.f32 %v3727, %v3771
  %v3776 = vsub.f32 %v3730, %v3772
  %v3777 = vld [vmem:[%s3] sm:$0xff]
  %v3778 = vld [vmem:[%s3 + $0x8] sm:$0xff]
  %v3779 = vld [vmem:[%s3 + $0x10] sm:$0xff]
  %v3780 = vld [vmem:[%s3 + $0x18] sm:$0xff]
  %v3781 = vlaneseq
  %v3782 = vand.u32 %v3781, 127
  %vm3783 = vcmp.ge.s32.totalorder %v3777, 0
  %vm3784 = vcmp.ge.s32.totalorder %v3778, 0
  %vm3785 = vcmp.ge.s32.totalorder %v3779, 0
  %vm3786 = vcmp.ge.s32.totalorder %v3780, 0
  %3787 = vset.pattern.permute.xlu0 0
  %3788 = vperm.xlu0 %3787, %v3777
  %v3789 = vpop.permute.xlu0 %3788
  %3790 = vset.pattern.permute.xlu0 0
  %3791 = vperm.xlu0 %3790, %v3778
  %v3792 = vpop.permute.xlu0 %3791
  %3793 = vset.pattern.permute.xlu0 0
  %3794 = vperm.xlu0 %3793, %v3779
  %v3795 = vpop.permute.xlu0 %3794
  %3796 = vset.pattern.permute.xlu0 0
  %3797 = vperm.xlu0 %3796, %v3780
  %v3798 = vpop.permute.xlu0 %3797
  %vm3799 = vcmp.eq.s32.totalorder %v3782, %v3789
  %vm3800 = vcmp.eq.s32.totalorder %v3782, %v3792
  %vm3801 = vcmp.eq.s32.totalorder %v3782, %v3795
  %vm3802 = vcmp.eq.s32.totalorder %v3782, %v3798
  %v3803 = vsel %vm3799, %v3139, 0.0
  %v3804 = vsel %vm3800, %v3140, 0.0
  %v3805 = vsel %vm3801, %v3141, 0.0
  %v3806 = vsel %vm3802, %v3142, 0.0
  %3807 = vadd.xlane.f32.xlu0 %v3803
  %v3808 = vpop.xlane.xlu0 %3807
  %3809 = vadd.xlane.f32.xlu0 %v3804
  %v3810 = vpop.xlane.xlu0 %3809
  %3811 = vadd.xlane.f32.xlu0 %v3805
  %v3812 = vpop.xlane.xlu0 %3811
  %3813 = vadd.xlane.f32.xlu0 %v3806
  %v3814 = vpop.xlane.xlu0 %3813
  %v3815 = vsub.f32 0.0, %v3808
  %v3816 = vsub.f32 0.0, %v3810
  %v3817 = vsub.f32 0.0, %v3812
  %v3818 = vsub.f32 0.0, %v3814
  %3819 = vmax.xlane.f32.xlu0 %v3139
  %v3820 = vpop.xlane.xlu0 %3819
  %3821 = vmax.xlane.f32.xlu0 %v3140
  %v3822 = vpop.xlane.xlu0 %3821
  %3823 = vmax.xlane.f32.xlu0 %v3141
  %v3824 = vpop.xlane.xlu0 %3823
  %3825 = vmax.xlane.f32.xlu0 %v3142
  %v3826 = vpop.xlane.xlu0 %3825
  %vm3827 = vcmp.ge.f32.partialorder %v3139, %v3820
  %vm3828 = vcmp.ge.f32.partialorder %v3140, %v3822
  %vm3829 = vcmp.ge.f32.partialorder %v3141, %v3824
  %vm3830 = vcmp.ge.f32.partialorder %v3142, %v3826
  %v3831 = vsel %vm3827, %v3782, 128
  %v3832 = vsel %vm3828, %v3782, 128
  %v3833 = vsel %vm3829, %v3782, 128
  %v3834 = vsel %vm3830, %v3782, 128
  %v3835 = vand.u32 %v3831, 65535
  %v3836 = vshra.s32 %v3831, 16
  %v3837 = vcvt.s32.f32 %v3835
  %v3838 = vcvt.s32.f32 %v3836
  %3839 = vmin.xlane.f32.xlu0 %v3838
  %v3840 = vpop.xlane.xlu0 %3839
  %vm3841 = vcmp.eq.f32.partialorder %v3838, %v3840
  %v3842 = vsel %vm3841, %v3837, inf
  %3843 = vmin.xlane.f32.xlu0 %v3842
  %v3844 = vpop.xlane.xlu0 %3843
  %v3845 = vcvt.f32.s32 %v3844
  %v3846 = vcvt.f32.s32 %v3840
  %v3847 = vshll.u32 %v3846, 16
  %v3848 = vadd.s32 %v3847, %v3845
  %v3849 = vand.u32 %v3832, 65535
  %v3850 = vshra.s32 %v3832, 16
  %v3851 = vcvt.s32.f32 %v3849
  %v3852 = vcvt.s32.f32 %v3850
  %3853 = vmin.xlane.f32.xlu0 %v3852
  %v3854 = vpop.xlane.xlu0 %3853
  %vm3855 = vcmp.eq.f32.partialorder %v3852, %v3854
  %v3856 = vsel %vm3855, %v3851, inf
  %3857 = vmin.xlane.f32.xlu0 %v3856
  %v3858 = vpop.xlane.xlu0 %3857
  %v3859 = vcvt.f32.s32 %v3858
  %v3860 = vcvt.f32.s32 %v3854
  %v3861 = vshll.u32 %v3860, 16
  %v3862 = vadd.s32 %v3861, %v3859
  %v3863 = vand.u32 %v3833, 65535
  %v3864 = vshra.s32 %v3833, 16
  %v3865 = vcvt.s32.f32 %v3863
  %v3866 = vcvt.s32.f32 %v3864
  %3867 = vmin.xlane.f32.xlu0 %v3866
  %v3868 = vpop.xlane.xlu0 %3867
  %vm3869 = vcmp.eq.f32.partialorder %v3866, %v3868
  %v3870 = vsel %vm3869, %v3865, inf
  %3871 = vmin.xlane.f32.xlu0 %v3870
  %v3872 = vpop.xlane.xlu0 %3871
  %v3873 = vcvt.f32.s32 %v3872
  %v3874 = vcvt.f32.s32 %v3868
  %v3875 = vshll.u32 %v3874, 16
  %v3876 = vadd.s32 %v3875, %v3873
  %v3877 = vand.u32 %v3834, 65535
  %v3878 = vshra.s32 %v3834, 16
  %v3879 = vcvt.s32.f32 %v3877
  %v3880 = vcvt.s32.f32 %v3878
  %3881 = vmin.xlane.f32.xlu0 %v3880
  %v3882 = vpop.xlane.xlu0 %3881
  %vm3883 = vcmp.eq.f32.partialorder %v3880, %v3882
  %v3884 = vsel %vm3883, %v3879, inf
  %3885 = vmin.xlane.f32.xlu0 %v3884
  %v3886 = vpop.xlane.xlu0 %3885
  %v3887 = vcvt.f32.s32 %v3886
  %v3888 = vcvt.f32.s32 %v3882
  %v3889 = vshll.u32 %v3888, 16
  %v3890 = vadd.s32 %v3889, %v3887
  %v3891 = vsel %vm3783, 1.0, 0.0
  %v3892 = vsel %vm3784, 1.0, 0.0
  %v3893 = vsel %vm3785, 1.0, 0.0
  %v3894 = vsel %vm3786, 1.0, 0.0
  %vm3895 = vcmask 7168
  %v3896 = vsel %vm3895, %v3891, 0.0
  %v3897 = vsel %vm3895, %v3892, 0.0
  %v3898 = vadd.f32 %v3896, %v3897
  %v3899 = vsel %vm3895, %v3893, 0.0
  %v3900 = vadd.f32 %v3898, %v3899
  %v3901 = vsel %vm3895, %v3894, 0.0
  %v3902 = vadd.f32 %v3900, %v3901
  %v3903 = vrot.slane %v3902, 4
  %v3904 = vadd.f32 %v3902, %v3903
  %v3905 = vrot.slane %v3904, 2
  %v3906 = vadd.f32 %v3904, %v3905
  %v3907 = vrot.slane %v3906, 1
  %v3908 = vadd.f32 %v3906, %v3907
  %vm3909 = vcmp.eq.s32.totalorder %v3848, %v3777
  %vm3910 = vcmp.eq.s32.totalorder %v3862, %v3778
  %vm3911 = vcmp.eq.s32.totalorder %v3876, %v3779
  %vm3912 = vcmp.eq.s32.totalorder %v3890, %v3780
  %vm3913 = vmand %vm3783, %vm3909
  %vm3914 = vmand %vm3784, %vm3910
  %vm3915 = vmand %vm3785, %vm3911
  %vm3916 = vmand %vm3786, %vm3912
  %v3917 = vsel %vm3913, 1.0, 0.0
  %v3918 = vsel %vm3914, 1.0, 0.0
  %v3919 = vsel %vm3915, 1.0, 0.0
  %v3920 = vsel %vm3916, 1.0, 0.0
  %v3921 = vsel %vm3895, %v3917, 0.0
  %v3922 = vsel %vm3895, %v3918, 0.0
  %v3923 = vadd.f32 %v3921, %v3922
  %v3924 = vsel %vm3895, %v3919, 0.0
  %v3925 = vadd.f32 %v3923, %v3924
  %v3926 = vsel %vm3895, %v3920, 0.0
  %v3927 = vadd.f32 %v3925, %v3926
  %v3928 = vrot.slane %v3927, 4
  %v3929 = vadd.f32 %v3927, %v3928
  %v3930 = vrot.slane %v3929, 2
  %v3931 = vadd.f32 %v3929, %v3930
  %v3932 = vrot.slane %v3931, 1
  %v3933 = vadd.f32 %v3931, %v3932
  %v3934 = vsel %vm3783, %v3815, 0.0
  %v3935 = vsel %vm3784, %v3816, 0.0
  %v3936 = vsel %vm3785, %v3817, 0.0
  %v3937 = vsel %vm3786, %v3818, 0.0
  %v3938 = vsel %vm3895, %v3934, 0.0
  %v3939 = vsel %vm3895, %v3935, 0.0
  %v3940 = vadd.f32 %v3938, %v3939
  %v3941 = vsel %vm3895, %v3936, 0.0
  %v3942 = vadd.f32 %v3940, %v3941
  %v3943 = vsel %vm3895, %v3937, 0.0
  %v3944 = vadd.f32 %v3942, %v3943
  %v3945 = vrot.slane %v3944, 4
  %v3946 = vadd.f32 %v3944, %v3945
  %v3947 = vrot.slane %v3946, 2
  %v3948 = vadd.f32 %v3946, %v3947
  %v3949 = vrot.slane %v3948, 1
  %v3950 = vadd.f32 %v3948, %v3949
  %v3951 = vmax.f32 %v3908, 1.0
  %v3952 = vrcp.pop %v3951
  %v3953 = vmul.f32 %v3950, %v3952
  %vm3954 = vcmp.eq.s32.totalorder %v3782, 0
  %3956 = vset.pattern.permute.xlu0 0
  %3957 = vperm.xlu0 %3956, %v3953
  %v3958 = vpop.permute.xlu0 %3957
  %v3960 = vsel %vm3954, %v3958, 0.0
  %vm3961 = vcmp.eq.s32.totalorder %v3782, 1
  %3963 = vset.pattern.permute.xlu0 0
  %3964 = vperm.xlu0 %3963, %v3933
  %v3965 = vpop.permute.xlu0 %3964
  %v3967 = vsel %vm3961, %v3965, 0.0
  %v3968 = vadd.f32 %v3960, %v3967
  %vm3969 = vcmp.eq.s32.totalorder %v3782, 2
  %3971 = vset.pattern.permute.xlu0 0
  %3972 = vperm.xlu0 %3971, %v3908
  %v3973 = vpop.permute.xlu0 %3972
  %v3975 = vsel %vm3969, %v3973, 0.0
  %v3976 = vadd.f32 %v3968, %v3975
  %3977 = vst [vmem:[%s13] sm:$0x1] %v3976
  %3978 = vset.pattern.permute.xlu0 1
  %3979 = vperm.xlu0 %3978, %v3777
  %v3980 = vpop.permute.xlu0 %3979
  %3981 = vset.pattern.permute.xlu0 1
  %3982 = vperm.xlu0 %3981, %v3778
  %v3983 = vpop.permute.xlu0 %3982
  %3984 = vset.pattern.permute.xlu0 1
  %3985 = vperm.xlu0 %3984, %v3779
  %v3986 = vpop.permute.xlu0 %3985
  %3987 = vset.pattern.permute.xlu0 1
  %3988 = vperm.xlu0 %3987, %v3780
  %v3989 = vpop.permute.xlu0 %3988
  %vm3990 = vcmp.eq.s32.totalorder %v3782, %v3980
  %vm3991 = vcmp.eq.s32.totalorder %v3782, %v3983
  %vm3992 = vcmp.eq.s32.totalorder %v3782, %v3986
  %vm3993 = vcmp.eq.s32.totalorder %v3782, %v3989
  %v3994 = vsel %vm3990, %v3283, 0.0
  %v3995 = vsel %vm3991, %v3284, 0.0
  %v3996 = vsel %vm3992, %v3285, 0.0
  %v3997 = vsel %vm3993, %v3286, 0.0
  %3998 = vadd.xlane.f32.xlu0 %v3994
  %v3999 = vpop.xlane.xlu0 %3998
  %4000 = vadd.xlane.f32.xlu0 %v3995
  %v4001 = vpop.xlane.xlu0 %4000
  %4002 = vadd.xlane.f32.xlu0 %v3996
  %v4003 = vpop.xlane.xlu0 %4002
  %4004 = vadd.xlane.f32.xlu0 %v3997
  %v4005 = vpop.xlane.xlu0 %4004
  %v4006 = vsub.f32 0.0, %v3999
  %v4007 = vsub.f32 0.0, %v4001
  %v4008 = vsub.f32 0.0, %v4003
  %v4009 = vsub.f32 0.0, %v4005
  %4010 = vmax.xlane.f32.xlu0 %v3283
  %v4011 = vpop.xlane.xlu0 %4010
  %4012 = vmax.xlane.f32.xlu0 %v3284
  %v4013 = vpop.xlane.xlu0 %4012
  %4014 = vmax.xlane.f32.xlu0 %v3285
  %v4015 = vpop.xlane.xlu0 %4014
  %4016 = vmax.xlane.f32.xlu0 %v3286
  %v4017 = vpop.xlane.xlu0 %4016
  %vm4018 = vcmp.ge.f32.partialorder %v3283, %v4011
  %vm4019 = vcmp.ge.f32.partialorder %v3284, %v4013
  %vm4020 = vcmp.ge.f32.partialorder %v3285, %v4015
  %vm4021 = vcmp.ge.f32.partialorder %v3286, %v4017
  %v4022 = vsel %vm4018, %v3782, 128
  %v4023 = vsel %vm4019, %v3782, 128
  %v4024 = vsel %vm4020, %v3782, 128
  %v4025 = vsel %vm4021, %v3782, 128
  %v4026 = vand.u32 %v4022, 65535
  %v4027 = vshra.s32 %v4022, 16
  %v4028 = vcvt.s32.f32 %v4026
  %v4029 = vcvt.s32.f32 %v4027
  %4030 = vmin.xlane.f32.xlu0 %v4029
  %v4031 = vpop.xlane.xlu0 %4030
  %vm4032 = vcmp.eq.f32.partialorder %v4029, %v4031
  %v4033 = vsel %vm4032, %v4028, inf
  %4034 = vmin.xlane.f32.xlu0 %v4033
  %v4035 = vpop.xlane.xlu0 %4034
  %v4036 = vcvt.f32.s32 %v4035
  %v4037 = vcvt.f32.s32 %v4031
  %v4038 = vshll.u32 %v4037, 16
  %v4039 = vadd.s32 %v4038, %v4036
  %v4040 = vand.u32 %v4023, 65535
  %v4041 = vshra.s32 %v4023, 16
  %v4042 = vcvt.s32.f32 %v4040
  %v4043 = vcvt.s32.f32 %v4041
  %4044 = vmin.xlane.f32.xlu0 %v4043
  %v4045 = vpop.xlane.xlu0 %4044
  %vm4046 = vcmp.eq.f32.partialorder %v4043, %v4045
  %v4047 = vsel %vm4046, %v4042, inf
  %4048 = vmin.xlane.f32.xlu0 %v4047
  %v4049 = vpop.xlane.xlu0 %4048
  %v4050 = vcvt.f32.s32 %v4049
  %v4051 = vcvt.f32.s32 %v4045
  %v4052 = vshll.u32 %v4051, 16
  %v4053 = vadd.s32 %v4052, %v4050
  %v4054 = vand.u32 %v4024, 65535
  %v4055 = vshra.s32 %v4024, 16
  %v4056 = vcvt.s32.f32 %v4054
  %v4057 = vcvt.s32.f32 %v4055
  %4058 = vmin.xlane.f32.xlu0 %v4057
  %v4059 = vpop.xlane.xlu0 %4058
  %vm4060 = vcmp.eq.f32.partialorder %v4057, %v4059
  %v4061 = vsel %vm4060, %v4056, inf
  %4062 = vmin.xlane.f32.xlu0 %v4061
  %v4063 = vpop.xlane.xlu0 %4062
  %v4064 = vcvt.f32.s32 %v4063
  %v4065 = vcvt.f32.s32 %v4059
  %v4066 = vshll.u32 %v4065, 16
  %v4067 = vadd.s32 %v4066, %v4064
  %v4068 = vand.u32 %v4025, 65535
  %v4069 = vshra.s32 %v4025, 16
  %v4070 = vcvt.s32.f32 %v4068
  %v4071 = vcvt.s32.f32 %v4069
  %4072 = vmin.xlane.f32.xlu0 %v4071
  %v4073 = vpop.xlane.xlu0 %4072
  %vm4074 = vcmp.eq.f32.partialorder %v4071, %v4073
  %v4075 = vsel %vm4074, %v4070, inf
  %4076 = vmin.xlane.f32.xlu0 %v4075
  %v4077 = vpop.xlane.xlu0 %4076
  %v4078 = vcvt.f32.s32 %v4077
  %v4079 = vcvt.f32.s32 %v4073
  %v4080 = vshll.u32 %v4079, 16
  %v4081 = vadd.s32 %v4080, %v4078
  %vm4082 = vcmask 15368
  %v4083 = vsel %vm4082, %v3891, 0.0
  %v4084 = vsel %vm4082, %v3892, 0.0
  %v4085 = vadd.f32 %v4083, %v4084
  %v4086 = vsel %vm4082, %v3893, 0.0
  %v4087 = vadd.f32 %v4085, %v4086
  %v4088 = vsel %vm4082, %v3894, 0.0
  %v4089 = vadd.f32 %v4087, %v4088
  %v4090 = vrot.slane %v4089, 4
  %v4091 = vadd.f32 %v4089, %v4090
  %v4092 = vrot.slane %v4091, 2
  %v4093 = vadd.f32 %v4091, %v4092
  %v4094 = vrot.slane %v4093, 1
  %v4095 = vadd.f32 %v4093, %v4094
  %vm4096 = vcmp.eq.s32.totalorder %v4039, %v3777
  %vm4097 = vcmp.eq.s32.totalorder %v4053, %v3778
  %vm4098 = vcmp.eq.s32.totalorder %v4067, %v3779
  %vm4099 = vcmp.eq.s32.totalorder %v4081, %v3780
  %vm4100 = vmand %vm3783, %vm4096
  %vm4101 = vmand %vm3784, %vm4097
  %vm4102 = vmand %vm3785, %vm4098
  %vm4103 = vmand %vm3786, %vm4099
  %v4104 = vsel %vm4100, 1.0, 0.0
  %v4105 = vsel %vm4101, 1.0, 0.0
  %v4106 = vsel %vm4102, 1.0, 0.0
  %v4107 = vsel %vm4103, 1.0, 0.0
  %v4108 = vsel %vm4082, %v4104, 0.0
  %v4109 = vsel %vm4082, %v4105, 0.0
  %v4110 = vadd.f32 %v4108, %v4109
  %v4111 = vsel %vm4082, %v4106, 0.0
  %v4112 = vadd.f32 %v4110, %v4111
  %v4113 = vsel %vm4082, %v4107, 0.0
  %v4114 = vadd.f32 %v4112, %v4113
  %v4115 = vrot.slane %v4114, 4
  %v4116 = vadd.f32 %v4114, %v4115
  %v4117 = vrot.slane %v4116, 2
  %v4118 = vadd.f32 %v4116, %v4117
  %v4119 = vrot.slane %v4118, 1
  %v4120 = vadd.f32 %v4118, %v4119
  %v4121 = vsel %vm3783, %v4006, 0.0
  %v4122 = vsel %vm3784, %v4007, 0.0
  %v4123 = vsel %vm3785, %v4008, 0.0
  %v4124 = vsel %vm3786, %v4009, 0.0
  %v4125 = vsel %vm4082, %v4121, 0.0
  %v4126 = vsel %vm4082, %v4122, 0.0
  %v4127 = vadd.f32 %v4125, %v4126
  %v4128 = vsel %vm4082, %v4123, 0.0
  %v4129 = vadd.f32 %v4127, %v4128
  %v4130 = vsel %vm4082, %v4124, 0.0
  %v4131 = vadd.f32 %v4129, %v4130
  %v4132 = vrot.slane %v4131, 4
  %v4133 = vadd.f32 %v4131, %v4132
  %v4134 = vrot.slane %v4133, 2
  %v4135 = vadd.f32 %v4133, %v4134
  %v4136 = vrot.slane %v4135, 1
  %v4137 = vadd.f32 %v4135, %v4136
  %v4138 = vmax.f32 %v4095, 1.0
  %v4139 = vrcp.pop %v4138
  %v4140 = vmul.f32 %v4137, %v4139
  %4142 = vset.pattern.permute.xlu0 1
  %4143 = vperm.xlu0 %4142, %v4140
  %v4144 = vpop.permute.xlu0 %4143
  %v4146 = vsel %vm3954, %v4144, 0.0
  %4148 = vset.pattern.permute.xlu0 1
  %4149 = vperm.xlu0 %4148, %v4120
  %v4150 = vpop.permute.xlu0 %4149
  %v4152 = vsel %vm3961, %v4150, 0.0
  %v4153 = vadd.f32 %v4146, %v4152
  %4155 = vset.pattern.permute.xlu0 1
  %4156 = vperm.xlu0 %4155, %v4095
  %v4157 = vpop.permute.xlu0 %4156
  %v4159 = vsel %vm3969, %v4157, 0.0
  %v4160 = vadd.f32 %v4153, %v4159
  %4161 = vst [vmem:[%s13 + $0x1] sm:$0x1] %v4160
  %v4162 = vsel %vm3990, %v3635, 0.0
  %v4163 = vsel %vm3991, %v3636, 0.0
  %v4164 = vsel %vm3992, %v3637, 0.0
  %v4165 = vsel %vm3993, %v3638, 0.0
  %4166 = vadd.xlane.f32.xlu0 %v4162
  %v4167 = vpop.xlane.xlu0 %4166
  %4168 = vadd.xlane.f32.xlu0 %v4163
  %v4169 = vpop.xlane.xlu0 %4168
  %4170 = vadd.xlane.f32.xlu0 %v4164
  %v4171 = vpop.xlane.xlu0 %4170
  %4172 = vadd.xlane.f32.xlu0 %v4165
  %v4173 = vpop.xlane.xlu0 %4172
  %v4174 = vsub.f32 0.0, %v4167
  %v4175 = vsub.f32 0.0, %v4169
  %v4176 = vsub.f32 0.0, %v4171
  %v4177 = vsub.f32 0.0, %v4173
  %4178 = vmax.xlane.f32.xlu0 %v3635
  %v4179 = vpop.xlane.xlu0 %4178
  %4180 = vmax.xlane.f32.xlu0 %v3636
  %v4181 = vpop.xlane.xlu0 %4180
  %4182 = vmax.xlane.f32.xlu0 %v3637
  %v4183 = vpop.xlane.xlu0 %4182
  %4184 = vmax.xlane.f32.xlu0 %v3638
  %v4185 = vpop.xlane.xlu0 %4184
  %vm4186 = vcmp.ge.f32.partialorder %v3635, %v4179
  %vm4187 = vcmp.ge.f32.partialorder %v3636, %v4181
  %vm4188 = vcmp.ge.f32.partialorder %v3637, %v4183
  %vm4189 = vcmp.ge.f32.partialorder %v3638, %v4185
  %v4190 = vsel %vm4186, %v3782, 128
  %v4191 = vsel %vm4187, %v3782, 128
  %v4192 = vsel %vm4188, %v3782, 128
  %v4193 = vsel %vm4189, %v3782, 128
  %v4194 = vand.u32 %v4190, 65535
  %v4195 = vshra.s32 %v4190, 16
  %v4196 = vcvt.s32.f32 %v4194
  %v4197 = vcvt.s32.f32 %v4195
  %4198 = vmin.xlane.f32.xlu0 %v4197
  %v4199 = vpop.xlane.xlu0 %4198
  %vm4200 = vcmp.eq.f32.partialorder %v4197, %v4199
  %v4201 = vsel %vm4200, %v4196, inf
  %4202 = vmin.xlane.f32.xlu0 %v4201
  %v4203 = vpop.xlane.xlu0 %4202
  %v4204 = vcvt.f32.s32 %v4203
  %v4205 = vcvt.f32.s32 %v4199
  %v4206 = vshll.u32 %v4205, 16
  %v4207 = vadd.s32 %v4206, %v4204
  %v4208 = vand.u32 %v4191, 65535
  %v4209 = vshra.s32 %v4191, 16
  %v4210 = vcvt.s32.f32 %v4208
  %v4211 = vcvt.s32.f32 %v4209
  %4212 = vmin.xlane.f32.xlu0 %v4211
  %v4213 = vpop.xlane.xlu0 %4212
  %vm4214 = vcmp.eq.f32.partialorder %v4211, %v4213
  %v4215 = vsel %vm4214, %v4210, inf
  %4216 = vmin.xlane.f32.xlu0 %v4215
  %v4217 = vpop.xlane.xlu0 %4216
  %v4218 = vcvt.f32.s32 %v4217
  %v4219 = vcvt.f32.s32 %v4213
  %v4220 = vshll.u32 %v4219, 16
  %v4221 = vadd.s32 %v4220, %v4218
  %v4222 = vand.u32 %v4192, 65535
  %v4223 = vshra.s32 %v4192, 16
  %v4224 = vcvt.s32.f32 %v4222
  %v4225 = vcvt.s32.f32 %v4223
  %4226 = vmin.xlane.f32.xlu0 %v4225
  %v4227 = vpop.xlane.xlu0 %4226
  %vm4228 = vcmp.eq.f32.partialorder %v4225, %v4227
  %v4229 = vsel %vm4228, %v4224, inf
  %4230 = vmin.xlane.f32.xlu0 %v4229
  %v4231 = vpop.xlane.xlu0 %4230
  %v4232 = vcvt.f32.s32 %v4231
  %v4233 = vcvt.f32.s32 %v4227
  %v4234 = vshll.u32 %v4233, 16
  %v4235 = vadd.s32 %v4234, %v4232
  %v4236 = vand.u32 %v4193, 65535
  %v4237 = vshra.s32 %v4193, 16
  %v4238 = vcvt.s32.f32 %v4236
  %v4239 = vcvt.s32.f32 %v4237
  %4240 = vmin.xlane.f32.xlu0 %v4239
  %v4241 = vpop.xlane.xlu0 %4240
  %vm4242 = vcmp.eq.f32.partialorder %v4239, %v4241
  %v4243 = vsel %vm4242, %v4238, inf
  %4244 = vmin.xlane.f32.xlu0 %v4243
  %v4245 = vpop.xlane.xlu0 %4244
  %v4246 = vcvt.f32.s32 %v4245
  %v4247 = vcvt.f32.s32 %v4241
  %v4248 = vshll.u32 %v4247, 16
  %v4249 = vadd.s32 %v4248, %v4246
  %vm4250 = vcmp.eq.s32.totalorder %v4207, %v3777
  %vm4251 = vcmp.eq.s32.totalorder %v4221, %v3778
  %vm4252 = vcmp.eq.s32.totalorder %v4235, %v3779
  %vm4253 = vcmp.eq.s32.totalorder %v4249, %v3780
  %vm4254 = vmand %vm3783, %vm4250
  %vm4255 = vmand %vm3784, %vm4251
  %vm4256 = vmand %vm3785, %vm4252
  %vm4257 = vmand %vm3786, %vm4253
  %v4258 = vsel %vm4254, 1.0, 0.0
  %v4259 = vsel %vm4255, 1.0, 0.0
  %v4260 = vsel %vm4256, 1.0, 0.0
  %v4261 = vsel %vm4257, 1.0, 0.0
  %v4262 = vsel %vm4082, %v4258, 0.0
  %v4263 = vsel %vm4082, %v4259, 0.0
  %v4264 = vadd.f32 %v4262, %v4263
  %v4265 = vsel %vm4082, %v4260, 0.0
  %v4266 = vadd.f32 %v4264, %v4265
  %v4267 = vsel %vm4082, %v4261, 0.0
  %v4268 = vadd.f32 %v4266, %v4267
  %v4269 = vrot.slane %v4268, 4
  %v4270 = vadd.f32 %v4268, %v4269
  %v4271 = vrot.slane %v4270, 2
  %v4272 = vadd.f32 %v4270, %v4271
  %v4273 = vrot.slane %v4272, 1
  %v4274 = vadd.f32 %v4272, %v4273
  %v4275 = vsel %vm3783, %v4174, 0.0
  %v4276 = vsel %vm3784, %v4175, 0.0
  %v4277 = vsel %vm3785, %v4176, 0.0
  %v4278 = vsel %vm3786, %v4177, 0.0
  %v4279 = vsel %vm4082, %v4275, 0.0
  %v4280 = vsel %vm4082, %v4276, 0.0
  %v4281 = vadd.f32 %v4279, %v4280
  %v4282 = vsel %vm4082, %v4277, 0.0
  %v4283 = vadd.f32 %v4281, %v4282
  %v4284 = vsel %vm4082, %v4278, 0.0
  %v4285 = vadd.f32 %v4283, %v4284
  %v4286 = vrot.slane %v4285, 4
  %v4287 = vadd.f32 %v4285, %v4286
  %v4288 = vrot.slane %v4287, 2
  %v4289 = vadd.f32 %v4287, %v4288
  %v4290 = vrot.slane %v4289, 1
  %v4291 = vadd.f32 %v4289, %v4290
  %v4292 = vmul.f32 %v4291, %v4139
  %4294 = vset.pattern.permute.xlu0 1
  %4295 = vperm.xlu0 %4294, %v4292
  %v4296 = vpop.permute.xlu0 %4295
  %v4298 = vsel %vm3954, %v4296, 0.0
  %4300 = vset.pattern.permute.xlu0 1
  %4301 = vperm.xlu0 %4300, %v4274
  %v4302 = vpop.permute.xlu0 %4301
  %v4304 = vsel %vm3961, %v4302, 0.0
  %v4305 = vadd.f32 %v4298, %v4304
  %v4306 = vadd.f32 %v4305, %v4159
  %4307 = vst [vmem:[%s13 + $0x2] sm:$0x1] %v4306
  %4308 = vset.pattern.permute.xlu0 2
  %4309 = vperm.xlu0 %4308, %v3777
  %v4310 = vpop.permute.xlu0 %4309
  %4311 = vset.pattern.permute.xlu0 2
  %4312 = vperm.xlu0 %4311, %v3778
  %v4313 = vpop.permute.xlu0 %4312
  %4314 = vset.pattern.permute.xlu0 2
  %4315 = vperm.xlu0 %4314, %v3779
  %v4316 = vpop.permute.xlu0 %4315
  %4317 = vset.pattern.permute.xlu0 2
  %4318 = vperm.xlu0 %4317, %v3780
  %v4319 = vpop.permute.xlu0 %4318
  %vm4320 = vcmp.eq.s32.totalorder %v3782, %v4310
  %vm4321 = vcmp.eq.s32.totalorder %v3782, %v4313
  %vm4322 = vcmp.eq.s32.totalorder %v3782, %v4316
  %vm4323 = vcmp.eq.s32.totalorder %v3782, %v4319
  %v4324 = vsel %vm4320, %v3773, 0.0
  %v4325 = vsel %vm4321, %v3774, 0.0
  %v4326 = vsel %vm4322, %v3775, 0.0
  %v4327 = vsel %vm4323, %v3776, 0.0
  %4328 = vadd.xlane.f32.xlu0 %v4324
  %v4329 = vpop.xlane.xlu0 %4328
  %4330 = vadd.xlane.f32.xlu0 %v4325
  %v4331 = vpop.xlane.xlu0 %4330
  %4332 = vadd.xlane.f32.xlu0 %v4326
  %v4333 = vpop.xlane.xlu0 %4332
  %4334 = vadd.xlane.f32.xlu0 %v4327
  %v4335 = vpop.xlane.xlu0 %4334
  %v4336 = vsub.f32 0.0, %v4329
  %v4337 = vsub.f32 0.0, %v4331
  %v4338 = vsub.f32 0.0, %v4333
  %v4339 = vsub.f32 0.0, %v4335
  %4340 = vmax.xlane.f32.xlu0 %v3773
  %v4341 = vpop.xlane.xlu0 %4340
  %4342 = vmax.xlane.f32.xlu0 %v3774
  %v4343 = vpop.xlane.xlu0 %4342
  %4344 = vmax.xlane.f32.xlu0 %v3775
  %v4345 = vpop.xlane.xlu0 %4344
  %4346 = vmax.xlane.f32.xlu0 %v3776
  %v4347 = vpop.xlane.xlu0 %4346
  %vm4348 = vcmp.ge.f32.partialorder %v3773, %v4341
  %vm4349 = vcmp.ge.f32.partialorder %v3774, %v4343
  %vm4350 = vcmp.ge.f32.partialorder %v3775, %v4345
  %vm4351 = vcmp.ge.f32.partialorder %v3776, %v4347
  %v4352 = vsel %vm4348, %v3782, 128
  %v4353 = vsel %vm4349, %v3782, 128
  %v4354 = vsel %vm4350, %v3782, 128
  %v4355 = vsel %vm4351, %v3782, 128
  %v4356 = vand.u32 %v4352, 65535
  %v4357 = vshra.s32 %v4352, 16
  %v4358 = vcvt.s32.f32 %v4356
  %v4359 = vcvt.s32.f32 %v4357
  %4360 = vmin.xlane.f32.xlu0 %v4359
  %v4361 = vpop.xlane.xlu0 %4360
  %vm4362 = vcmp.eq.f32.partialorder %v4359, %v4361
  %v4363 = vsel %vm4362, %v4358, inf
  %4364 = vmin.xlane.f32.xlu0 %v4363
  %v4365 = vpop.xlane.xlu0 %4364
  %v4366 = vcvt.f32.s32 %v4365
  %v4367 = vcvt.f32.s32 %v4361
  %v4368 = vshll.u32 %v4367, 16
  %v4369 = vadd.s32 %v4368, %v4366
  %v4370 = vand.u32 %v4353, 65535
  %v4371 = vshra.s32 %v4353, 16
  %v4372 = vcvt.s32.f32 %v4370
  %v4373 = vcvt.s32.f32 %v4371
  %4374 = vmin.xlane.f32.xlu0 %v4373
  %v4375 = vpop.xlane.xlu0 %4374
  %vm4376 = vcmp.eq.f32.partialorder %v4373, %v4375
  %v4377 = vsel %vm4376, %v4372, inf
  %4378 = vmin.xlane.f32.xlu0 %v4377
  %v4379 = vpop.xlane.xlu0 %4378
  %v4380 = vcvt.f32.s32 %v4379
  %v4381 = vcvt.f32.s32 %v4375
  %v4382 = vshll.u32 %v4381, 16
  %v4383 = vadd.s32 %v4382, %v4380
  %v4384 = vand.u32 %v4354, 65535
  %v4385 = vshra.s32 %v4354, 16
  %v4386 = vcvt.s32.f32 %v4384
  %v4387 = vcvt.s32.f32 %v4385
  %4388 = vmin.xlane.f32.xlu0 %v4387
  %v4389 = vpop.xlane.xlu0 %4388
  %vm4390 = vcmp.eq.f32.partialorder %v4387, %v4389
  %v4391 = vsel %vm4390, %v4386, inf
  %4392 = vmin.xlane.f32.xlu0 %v4391
  %v4393 = vpop.xlane.xlu0 %4392
  %v4394 = vcvt.f32.s32 %v4393
  %v4395 = vcvt.f32.s32 %v4389
  %v4396 = vshll.u32 %v4395, 16
  %v4397 = vadd.s32 %v4396, %v4394
  %v4398 = vand.u32 %v4355, 65535
  %v4399 = vshra.s32 %v4355, 16
  %v4400 = vcvt.s32.f32 %v4398
  %v4401 = vcvt.s32.f32 %v4399
  %4402 = vmin.xlane.f32.xlu0 %v4401
  %v4403 = vpop.xlane.xlu0 %4402
  %vm4404 = vcmp.eq.f32.partialorder %v4401, %v4403
  %v4405 = vsel %vm4404, %v4400, inf
  %4406 = vmin.xlane.f32.xlu0 %v4405
  %v4407 = vpop.xlane.xlu0 %4406
  %v4408 = vcvt.f32.s32 %v4407
  %v4409 = vcvt.f32.s32 %v4403
  %v4410 = vshll.u32 %v4409, 16
  %v4411 = vadd.s32 %v4410, %v4408
  %vm4412 = vcmask 23568
  %v4413 = vsel %vm4412, %v3891, 0.0
  %v4414 = vsel %vm4412, %v3892, 0.0
  %v4415 = vadd.f32 %v4413, %v4414
  %v4416 = vsel %vm4412, %v3893, 0.0
  %v4417 = vadd.f32 %v4415, %v4416
  %v4418 = vsel %vm4412, %v3894, 0.0
  %v4419 = vadd.f32 %v4417, %v4418
  %v4420 = vrot.slane %v4419, 4
  %v4421 = vadd.f32 %v4419, %v4420
  %v4422 = vrot.slane %v4421, 2
  %v4423 = vadd.f32 %v4421, %v4422
  %v4424 = vrot.slane %v4423, 1
  %v4425 = vadd.f32 %v4423, %v4424
  %vm4426 = vcmp.eq.s32.totalorder %v4369, %v3777
  %vm4427 = vcmp.eq.s32.totalorder %v4383, %v3778
  %vm4428 = vcmp.eq.s32.totalorder %v4397, %v3779
  %vm4429 = vcmp.eq.s32.totalorder %v4411, %v3780
  %vm4430 = vmand %vm3783, %vm4426
  %vm4431 = vmand %vm3784, %vm4427
  %vm4432 = vmand %vm3785, %vm4428
  %vm4433 = vmand %vm3786, %vm4429
  %v4434 = vsel %vm4430, 1.0, 0.0
  %v4435 = vsel %vm4431, 1.0, 0.0
  %v4436 = vsel %vm4432, 1.0, 0.0
  %v4437 = vsel %vm4433, 1.0, 0.0
  %v4438 = vsel %vm4412, %v4434, 0.0
  %v4439 = vsel %vm4412, %v4435, 0.0
  %v4440 = vadd.f32 %v4438, %v4439
  %v4441 = vsel %vm4412, %v4436, 0.0
  %v4442 = vadd.f32 %v4440, %v4441
  %v4443 = vsel %vm4412, %v4437, 0.0
  %v4444 = vadd.f32 %v4442, %v4443
  %v4445 = vrot.slane %v4444, 4
  %v4446 = vadd.f32 %v4444, %v4445
  %v4447 = vrot.slane %v4446, 2
  %v4448 = vadd.f32 %v4446, %v4447
  %v4449 = vrot.slane %v4448, 1
  %v4450 = vadd.f32 %v4448, %v4449
  %v4451 = vsel %vm3783, %v4336, 0.0
  %v4452 = vsel %vm3784, %v4337, 0.0
  %v4453 = vsel %vm3785, %v4338, 0.0
  %v4454 = vsel %vm3786, %v4339, 0.0
  %v4455 = vsel %vm4412, %v4451, 0.0
  %v4456 = vsel %vm4412, %v4452, 0.0
  %v4457 = vadd.f32 %v4455, %v4456
  %v4458 = vsel %vm4412, %v4453, 0.0
  %v4459 = vadd.f32 %v4457, %v4458
  %v4460 = vsel %vm4412, %v4454, 0.0
  %v4461 = vadd.f32 %v4459, %v4460
  %v4462 = vrot.slane %v4461, 4
  %v4463 = vadd.f32 %v4461, %v4462
  %v4464 = vrot.slane %v4463, 2
  %v4465 = vadd.f32 %v4463, %v4464
  %v4466 = vrot.slane %v4465, 1
  %v4467 = vadd.f32 %v4465, %v4466
  %v4468 = vmax.f32 %v4425, 1.0
  %v4469 = vrcp.pop %v4468
  %v4470 = vmul.f32 %v4467, %v4469
  %4472 = vset.pattern.permute.xlu0 2
  %4473 = vperm.xlu0 %4472, %v4470
  %v4474 = vpop.permute.xlu0 %4473
  %v4476 = vsel %vm3954, %v4474, 0.0
  %4478 = vset.pattern.permute.xlu0 2
  %4479 = vperm.xlu0 %4478, %v4450
  %v4480 = vpop.permute.xlu0 %4479
  %v4482 = vsel %vm3961, %v4480, 0.0
  %v4483 = vadd.f32 %v4476, %v4482
  %4485 = vset.pattern.permute.xlu0 2
  %4486 = vperm.xlu0 %4485, %v4425
  %v4487 = vpop.permute.xlu0 %4486
  %v4489 = vsel %vm3969, %v4487, 0.0
  %v4490 = vadd.f32 %v4483, %v4489
  %4491 = vst [vmem:[%s13 + $0x3] sm:$0x1] %v4490
  // Predicated region
  $region54: #{tuta_forward.1} parent=0 // pred_check
    _
  $region55: #{tuta_forward.1} parent=0 // pred_check_branch
    %4493 = sbr.rel (0) target = $region57
  $region56: #{tuta_forward.1} parent=0 // pred_region
    _
  $region57: #{tuta_forward.1} parent=0 // pred_fallthru
    _
  // Predicated region
  $region58: #{tuta_forward.1} parent=0 // pred_check
    _
  $region59: #{tuta_forward.1} parent=0 // pred_check_branch
    %4495 = sbr.rel (0) target = $region61
  $region60: #{tuta_forward.1} parent=0 // pred_region
    _
  $region61: #{tuta_forward.1} parent=0 // pred_fallthru
    _

</llo_original>
